<compile_context>
chip_gen: v7x
topology: tpu7x:2x2x1
jax: 0.10.0
libtpu: 0.0.40
codegen_flags: <defaults>
</compile_context>

<pallas_src>
import functools

import jax
import jax.numpy as jnp
from jax import lax
from jax.experimental import pallas as pl
from jax.experimental.pallas import tpu as pltpu

EMB = 32          # d_model
NHEAD = 4         # attention heads
FFN = 64          # feed-forward width
NUM_LAYERS = 2
GUIDED_SIGMA = 0.3


# ----------------------------- in-kernel helpers -----------------------------

def _ln(x, g, b, eps=1e-5):
    """LayerNorm over last dim.  x: (N, E) f32, g/b: (1, E)."""
    mu = jnp.mean(x, axis=-1, keepdims=True)
    var = jnp.mean((x - mu) ** 2, axis=-1, keepdims=True)
    return (x - mu) * lax.rsqrt(var + eps) * g + b


def _attend(q, k, v, bias, wo, bo, nhead):
    """Multi-head attention on a single batch element.

    q: (Sq, E), k/v: (Sk, E), bias: (1, Sk) additive key-padding bias,
    wo: (E, E), bo: (1, E).  Returns (out (Sq, E), head-averaged attn (Sq, Sk)).
    Per-head contexts are lane-concatenated and projected with ONE matmul.
    """
    sq, e = q.shape
    sk = k.shape[0]
    dh = e // nhead
    scale = 1.0 / (float(dh) ** 0.5)
    dn = (((1,), (1,)), ((), ()))          # (Sq,Dh) x (Sk,Dh) -> (Sq,Sk)

    attn_sum = jnp.zeros((sq, sk), jnp.float32)
    ctxs = []
    for h in range(nhead):
        lo, hi = h * dh, (h + 1) * dh
        s = lax.dot_general(q[:, lo:hi], k[:, lo:hi], dn,
                            preferred_element_type=jnp.float32) * scale + bias
        s = s - jnp.max(s, axis=-1, keepdims=True)
        p = jnp.exp(s)
        p = p / jnp.sum(p, axis=-1, keepdims=True)       # exact softmax (parity)
        attn_sum = attn_sum + p
        ctxs.append(jnp.dot(p, v[:, lo:hi], preferred_element_type=jnp.float32))
    ctx = jnp.concatenate(ctxs, axis=-1)                  # (Sq, E), lane-contiguous
    out = jnp.dot(ctx, wo, preferred_element_type=jnp.float32) + bo
    return out, attn_sum * (1.0 / nhead)


# ----------------------------- fused whole-encoder kernel -----------------------------

def _encoder_kernel(src_ref, lemo_ref, gemo_ref, sbias_ref, ebias_ref,
                    wslab_ref, vslab_ref,
                    out_ref, attn_ref, aemo_ref, x_ref,
                    *, nhead, num_layers, apply_final_ln):
    l = pl.program_id(1)                                  # layer index (inner grid axis)

    @pl.when(l == 0)
    def _():
        x_ref[...] = src_ref[0].astype(jnp.float32)       # activation carry init

    x = x_ref[...]                                        # (S, E) resident in VMEM
    emo = lemo_ref[0].astype(jnp.float32)                 # (T, E)
    e = x.shape[-1]

    W = wslab_ref[0]                                      # (E, 8E + 2F) weight slab
    V = vslab_ref[0]                                      # (16, 128) vector slab
    f = (W.shape[-1] - 8 * e) // 2

    # static lane slices of the packed weight slab
    wqkv = W[:, 0:3 * e]
    wo = W[:, 3 * e:4 * e]
    ewq = W[:, 4 * e:5 * e]
    ewkv = W[:, 5 * e:7 * e]
    ewo = W[:, 7 * e:8 * e]
    w1 = W[:, 8 * e:8 * e + f]
    w2t = W[:, 8 * e + f:8 * e + 2 * f]                   # w2 stored transposed (E, F)

    # one bias / LN vector per sublane row
    bqkv = V[0:1, 0:3 * e]
    bo = V[1:2, 0:e]
    ebq = V[2:3, 0:e]
    ebkv = V[3:4, 0:2 * e]
    ebo = V[4:5, 0:e]
    b1 = V[5:6, 0:f]
    b2 = V[6:7, 0:e]
    ln1g, ln1b = V[7:8, 0:e], V[8:9, 0:e]
    ln2g, ln2b = V[9:10, 0:e], V[10:11, 0:e]
    ln3g, ln3b = V[11:12, 0:e], V[12:13, 0:e]
    fng, fnb = V[13:14, 0:e], V[14:15, 0:e]               # final-norm params

    # ---- self-attention (fused QKV projection) ----
    qkv = jnp.dot(x, wqkv, preferred_element_type=jnp.float32) + bqkv
    sa_out, attn_avg = _attend(qkv[:, 0:e], qkv[:, e:2 * e], qkv[:, 2 * e:3 * e],
                               sbias_ref[0], wo, bo, nhead)
    x1 = _ln(x + sa_out, ln1g, ln1b)

    # ---- paired emotion cross-attention (fused KV projection, + global emotion) ----
    q = jnp.dot(x1, ewq, preferred_element_type=jnp.float32) + ebq
    kv = jnp.dot(emo, ewkv, preferred_element_type=jnp.float32) + ebkv
    ca_out, aemo_avg = _attend(q, kv[:, 0:e], kv[:, e:2 * e], ebias_ref[0],
                               ewo, ebo, nhead)
    x2 = _ln(x1 + ca_out + gemo_ref[0], ln2g, ln2b)

    # ---- feed-forward ----
    h = jnp.maximum(jnp.dot(x2, w1, preferred_element_type=jnp.float32) + b1, 0.0)
    y = lax.dot_general(h, w2t, (((1,), (1,)), ((), ())),
                        preferred_element_type=jnp.float32) + b2
    x3 = _ln(x2 + y, ln3g, ln3b)

    # ---- carry + outputs ----
    x_ref[...] = x3
    out_ref[0] = x3.astype(out_ref.dtype)
    attn_ref[0, 0] = attn_avg.astype(attn_ref.dtype)
    aemo_ref[0, 0] = aemo_avg.astype(aemo_ref.dtype)

    if apply_final_ln:
        @pl.when(l == num_layers - 1)
        def _():
            out_ref[0] = _ln(x3, fng, fnb).astype(out_ref.dtype)


def paired_encoder_fused(src, global_emotion, local_emotion, w_slab, v_slab,
                         src_bias, emo_bias, apply_final_ln):
    """One pallas_call for the whole encoder.  grid = (batch, layer)."""
    B, S, E = src.shape
    T = local_emotion.shape[1]
    L, _, CW = w_slab.shape
    ge = global_emotion.reshape(B, 1, E)

    def bmap(b, l):          # per-batch inputs: same block across the layer axis
        return (b, 0, 0)

    def lmap(b, l):          # per-layer weight slabs
        return (l, 0, 0)

    in_specs = [
        pl.BlockSpec((1, S, E), bmap),                    # src
        pl.BlockSpec((1, T, E), bmap),                    # local emotion
        pl.BlockSpec((1, 1, E), bmap),                    # global emotion
        pl.BlockSpec((1, 1, S), bmap),                    # src key-padding bias
        pl.BlockSpec((1, 1, T), bmap),                    # emotion key-padding bias
        pl.BlockSpec((1, E, CW), lmap),                   # packed weight slab
        pl.BlockSpec((1, 16, 128), lmap),                 # packed bias/LN slab
    ]
    out_specs = (
        pl.BlockSpec((1, S, E), bmap),                    # final output (revisited over l)
        pl.BlockSpec((1, 1, S, S), lambda b, l: (b, l, 0, 0)),   # per-layer self attn
        pl.BlockSpec((1, 1, S, T), lambda b, l: (b, l, 0, 0)),   # per-layer emo attn
    )
    out_shape = (
        jax.ShapeDtypeStruct((B, S, E), jnp.float32),
        jax.ShapeDtypeStruct((B, L, S, S), jnp.float32),
        jax.ShapeDtypeStruct((B, L, S, T), jnp.float32),
    )
    return pl.pallas_call(
        functools.partial(_encoder_kernel, nhead=NHEAD, num_layers=L,
                          apply_final_ln=apply_final_ln),
        grid=(B, L),
        out_shape=out_shape,
        in_specs=in_specs,
        out_specs=out_specs,
        scratch_shapes=[pltpu.VMEM((S, E), jnp.float32)],          # activation carry
        compiler_params=pltpu.CompilerParams(
            dimension_semantics=("parallel", "arbitrary")),
    )(src, local_emotion, ge, src_bias, emo_bias, w_slab, v_slab)


# ----------------------------- parameter packing -----------------------------

def pack_params(layer_params, norm_params, e, f):
    """Pack per-layer params into lane-dense slabs: (L,E,8E+2F) weights, (L,16,128) vectors."""
    fg = norm_params['g'] if norm_params is not None else jnp.ones((1, e), jnp.float32)
    fb = norm_params['b'] if norm_params is not None else jnp.zeros((1, e), jnp.float32)

    def row(v):
        v = v.reshape(1, -1)
        return jnp.pad(v, ((0, 0), (0, 128 - v.shape[-1])))

    w_rows, v_rows = [], []
    for p in layer_params:
        w_rows.append(jnp.concatenate(
            [p['wqkv'], p['wo'], p['ewq'], p['ewkv'], p['ewo'], p['w1'], p['w2'].T],
            axis=-1))                                             # (E, 8E+2F)
        v_rows.append(jnp.concatenate(
            [row(p['bqkv']), row(p['bo']), row(p['ebq']), row(p['ebkv']), row(p['ebo']),
             row(p['b1']), row(p['b2']),
             row(p['ln1_g']), row(p['ln1_b']), row(p['ln2_g']), row(p['ln2_b']),
             row(p['ln3_g']), row(p['ln3_b']), row(fg), row(fb),
             jnp.zeros((1, 128), jnp.float32)],
            axis=0))                                              # (16, 128)
    return jnp.stack(w_rows, axis=0), jnp.stack(v_rows, axis=0)


# ----------------------------- model glue -----------------------------

def _paired_transformer_encoder(src, global_emotion, local_emotion, w_slab, v_slab,
                                src_key_padding_mask, emotion_key_padding_mask,
                                apply_final_ln=True, guided_sigma=GUIDED_SIGMA,
                                guided_layers=None):
    L = w_slab.shape[0]
    if guided_layers is None:
        guided_layers = L
    B, S, E = src.shape
    T = local_emotion.shape[1]

    src_valid = jnp.logical_not(src_key_padding_mask).astype(jnp.float32)       # (B, S)
    emo_valid = jnp.logical_not(emotion_key_padding_mask).astype(jnp.float32)   # (B, T)
    inv_s = 1.0 / jnp.sum(src_valid, axis=-1)                                   # 1 / s_length
    inv_e = 1.0 / jnp.sum(emo_valid, axis=-1)                                   # 1 / emo_length

    src_bias = jnp.where(src_key_padding_mask, -1e9, 0.0).astype(jnp.float32).reshape(B, 1, S)
    emo_bias = jnp.where(emotion_key_padding_mask, -1e9, 0.0).astype(jnp.float32).reshape(B, 1, T)

    output, attn_all, attn_emo_all = paired_encoder_fused(
        src, global_emotion, local_emotion, w_slab, v_slab, src_bias, emo_bias,
        apply_final_ln)

    # ---- guided attention loss (layer-invariant weights, computed once outside the kernel) ----
    gx = jnp.arange(S, dtype=jnp.float32)                 # query index (torch grid_x)

    def guided_w(gy, ril_inv, rol_inv):                   # (B, S, len(gy))
        d = (gy[None, None, :] * rol_inv[:, None, None]
             - gx[None, :, None] * ril_inv[:, None, None])
        return 1.0 - jnp.exp(-(d ** 2) / (2.0 * guided_sigma ** 2))

    m_self = src_valid[:, :, None] * src_valid[:, None, :]                      # (B, S, S)
    m_emo = src_valid[:, :, None] * emo_valid[:, None, :]                       # (B, S, T)
    gm_self = guided_w(jnp.arange(S, dtype=jnp.float32), inv_s, inv_s) * m_self
    gm_emo = guided_w(jnp.arange(T, dtype=jnp.float32), inv_s, inv_e) * m_emo
    cnt_self = jnp.sum(m_self)
    cnt_emo = jnp.sum(m_emo)

    guided_loss = (jnp.sum(attn_all[:, :guided_layers] * gm_self[:, None]) / cnt_self
                   + jnp.sum(attn_emo_all[:, :guided_layers] * gm_emo[:, None]) / cnt_emo)

    self_attns = [lax.stop_gradient(attn_all[:, i]) for i in range(L)]           # attn.detach()
    return output, guided_loss, self_attns


paired_transformer_encoder = jax.jit(
    _paired_transformer_encoder,
    static_argnames=("apply_final_ln", "guided_layers"))


# ----------------------------- deterministic params -----------------------------

def _init_layer(key, e, f):
    ks = jax.random.split(key, 7)
    sc = 1.0 / (e ** 0.5)
    return {
        # self-attention: fused QKV weight
        'wqkv': jax.random.normal(ks[0], (e, 3 * e), jnp.float32) * sc,
        'bqkv': jnp.zeros((1, 3 * e), jnp.float32),
        'wo': jax.random.normal(ks[1], (e, e), jnp.float32) * sc,
        'bo': jnp.zeros((1, e), jnp.float32),
        # emotion cross-attention: separate Q, fused KV
        'ewq': jax.random.normal(ks[2], (e, e), jnp.float32) * sc,
        'ebq': jnp.zeros((1, e), jnp.float32),
        'ewkv': jax.random.normal(ks[3], (e, 2 * e), jnp.float32) * sc,
        'ebkv': jnp.zeros((1, 2 * e), jnp.float32),
        'ewo': jax.random.normal(ks[4], (e, e), jnp.float32) * sc,
        'ebo': jnp.zeros((1, e), jnp.float32),
        # feed-forward
        'w1': jax.random.normal(ks[5], (e, f), jnp.float32) * sc,
        'b1': jnp.zeros((1, f), jnp.float32),
        'w2': jax.random.normal(ks[6], (f, e), jnp.float32) * (1.0 / f ** 0.5),
        'b2': jnp.zeros((1, e), jnp.float32),
        # layer norms
        'ln1_g': jnp.ones((1, e), jnp.float32), 'ln1_b': jnp.zeros((1, e), jnp.float32),
        'ln2_g': jnp.ones((1, e), jnp.float32), 'ln2_b': jnp.zeros((1, e), jnp.float32),
        'ln3_g': jnp.ones((1, e), jnp.float32), 'ln3_b': jnp.zeros((1, e), jnp.float32),
    }


# ----------------------------- main -----------------------------

if __name__ == "__main__":
    B, S, T, E = 2, 8, 8, EMB

    root = jax.random.PRNGKey(0)
    k_in, k_ge, k_le, k_par = jax.random.split(root, 4)

    src = jax.random.normal(k_in, (B, S, E), jnp.float32)
    global_emotion = jax.random.normal(k_ge, (B, E), jnp.float32)
    local_emotion = jax.random.normal(k_le, (B, T, E), jnp.float32)

    # True = padding (PyTorch key_padding_mask convention)
    src_key_padding_mask = jnp.array(
        [[False] * 8,
         [False] * 6 + [True] * 2], dtype=bool)
    emotion_key_padding_mask = jnp.array(
        [[False] * 8,
         [False] * 5 + [True] * 3], dtype=bool)

    layer_keys = jax.random.split(k_par, NUM_LAYERS)
    layer_params = [_init_layer(layer_keys[i], E, FFN) for i in range(NUM_LAYERS)]
    norm_params = {'g': jnp.ones((1, E), jnp.float32), 'b': jnp.zeros((1, E), jnp.float32)}

    w_slab, v_slab = pack_params(layer_params, norm_params, E, FFN)

    output, guided_loss, self_attns = paired_transformer_encoder(
        src, global_emotion, local_emotion, w_slab, v_slab,
        src_key_padding_mask, emotion_key_padding_mask,
        apply_final_ln=True, guided_sigma=GUIDED_SIGMA, guided_layers=NUM_LAYERS)

    jax.block_until_ready((output, guided_loss, self_attns))

    assert output.shape == (B, S, E)
    assert guided_loss.shape == ()
    assert len(self_attns) == NUM_LAYERS and self_attns[0].shape == (B, S, S)
    print("KERNEL_OK")
</pallas_src>

<mosaic_0001>
module attributes {stable_mosaic.version = 11 : i64} {
  func.func @_encoder_kernel(%arg0: i32, %arg1: i32, %arg2: memref<1x8x32xf32, #tpu.memory_space<vmem>>, %arg3: memref<1x8x32xf32, #tpu.memory_space<vmem>>, %arg4: memref<1x1x32xf32, #tpu.memory_space<vmem>>, %arg5: memref<1x1x8xf32, #tpu.memory_space<vmem>>, %arg6: memref<1x1x8xf32, #tpu.memory_space<vmem>>, %arg7: memref<1x32x384xf32, #tpu.memory_space<vmem>>, %arg8: memref<1x16x128xf32, #tpu.memory_space<vmem>>, %arg9: memref<1x8x32xf32, #tpu.memory_space<vmem>>, %arg10: memref<1x1x8x8xf32, #tpu.memory_space<vmem>>, %arg11: memref<1x1x8x8xf32, #tpu.memory_space<vmem>>, %arg12: memref<8x32xf32, #tpu.memory_space<vmem>>) attributes {dimension_semantics = [#tpu.dimension_semantics<parallel>, #tpu.dimension_semantics<arbitrary>], iteration_bounds = array<i64: 2, 2>, scalar_prefetch = 0 : i64, scratch_operands = 1 : i64, tpu.core_type = #tpu.core_type<tc>, window_params = [{transform_indices = @transform_0, window_bounds = array<i64: 1, 8, 32>}, {transform_indices = @transform_1, window_bounds = array<i64: 1, 8, 32>}, {transform_indices = @transform_2, window_bounds = array<i64: 1, 1, 32>}, {transform_indices = @transform_3, window_bounds = array<i64: 1, 1, 8>}, {transform_indices = @transform_4, window_bounds = array<i64: 1, 1, 8>}, {transform_indices = @transform_5, window_bounds = array<i64: 1, 32, 384>}, {transform_indices = @transform_6, window_bounds = array<i64: 1, 16, 128>}, {transform_indices = @transform_7, window_bounds = array<i64: 1, 8, 32>}, {transform_indices = @transform_8, window_bounds = array<i64: 1, 1, 8, 8>}, {transform_indices = @transform_9, window_bounds = array<i64: 1, 1, 8, 8>}]} {
    %c0_i32 = arith.constant 0 : i32
    %0 = arith.cmpi eq, %arg1, %c0_i32 : i32
    %1 = arith.extui %0 : i1 to i32
    %c0_i32_0 = arith.constant 0 : i32
    %2 = arith.cmpi ne, %1, %c0_i32_0 : i32
    scf.if %2 {
      %c0_100 = arith.constant 0 : index
      %c0_101 = arith.constant 0 : index
      %c0_102 = arith.constant 0 : index
      %310 = vector.load %arg2[%c0_100, %c0_101, %c0_102] : memref<1x8x32xf32, #tpu.memory_space<vmem>>, vector<1x8x32xf32>
      %311 = vector.shape_cast %310 : vector<1x8x32xf32> to vector<8x32xf32>
      %c0_103 = arith.constant 0 : index
      %c0_104 = arith.constant 0 : index
      %312 = vector.load %arg12[%c0_103, %c0_104] : memref<8x32xf32, #tpu.memory_space<vmem>>, vector<8x32xf32>
      tpu.vector_store %arg12[%c0_103, %c0_104], %311 {strides = array<i32>} : memref<8x32xf32, #tpu.memory_space<vmem>>, vector<8x32xf32>,
    } else {
    }
    %c0 = arith.constant 0 : index
    %c0_1 = arith.constant 0 : index
    %3 = vector.load %arg12[%c0, %c0_1] : memref<8x32xf32, #tpu.memory_space<vmem>>, vector<8x32xf32>
    %c0_2 = arith.constant 0 : index
    %c0_3 = arith.constant 0 : index
    %c0_4 = arith.constant 0 : index
    %4 = vector.load %arg3[%c0_2, %c0_3, %c0_4] : memref<1x8x32xf32, #tpu.memory_space<vmem>>, vector<1x8x32xf32>
    %5 = vector.shape_cast %4 : vector<1x8x32xf32> to vector<8x32xf32>
    %c0_5 = arith.constant 0 : index
    %c0_6 = arith.constant 0 : index
    %c0_7 = arith.constant 0 : index
    %6 = vector.load %arg7[%c0_5, %c0_6, %c0_7] : memref<1x32x384xf32, #tpu.memory_space<vmem>>, vector<1x32x384xf32>
    %7 = vector.shape_cast %6 : vector<1x32x384xf32> to vector<32x384xf32>
    %c0_8 = arith.constant 0 : index
    %c0_9 = arith.constant 0 : index
    %c0_10 = arith.constant 0 : index
    %8 = vector.load %arg8[%c0_8, %c0_9, %c0_10] : memref<1x16x128xf32, #tpu.memory_space<vmem>>, vector<1x16x128xf32>
    %9 = vector.shape_cast %8 : vector<1x16x128xf32> to vector<16x128xf32>
    %10 = vector.extract_strided_slice %7 {offsets = [0, 0], sizes = [32, 96], strides = [1, 1]} : vector<32x384xf32> to vector<32x96xf32>
    %11 = vector.extract_strided_slice %7 {offsets = [0, 96], sizes = [32, 32], strides = [1, 1]} : vector<32x384xf32> to vector<32x32xf32>
    %12 = vector.extract_strided_slice %7 {offsets = [0, 128], sizes = [32, 32], strides = [1, 1]} : vector<32x384xf32> to vector<32x32xf32>
    %13 = vector.extract_strided_slice %7 {offsets = [0, 160], sizes = [32, 64], strides = [1, 1]} : vector<32x384xf32> to vector<32x64xf32>
    %14 = vector.extract_strided_slice %7 {offsets = [0, 224], sizes = [32, 32], strides = [1, 1]} : vector<32x384xf32> to vector<32x32xf32>
    %15 = vector.extract_strided_slice %7 {offsets = [0, 256], sizes = [32, 64], strides = [1, 1]} : vector<32x384xf32> to vector<32x64xf32>
    %16 = vector.extract_strided_slice %7 {offsets = [0, 320], sizes = [32, 64], strides = [1, 1]} : vector<32x384xf32> to vector<32x64xf32>
    %17 = vector.extract_strided_slice %9 {offsets = [0, 0], sizes = [1, 96], strides = [1, 1]} : vector<16x128xf32> to vector<1x96xf32>
    %18 = vector.extract_strided_slice %9 {offsets = [1, 0], sizes = [1, 32], strides = [1, 1]} : vector<16x128xf32> to vector<1x32xf32>
    %19 = vector.extract_strided_slice %9 {offsets = [2, 0], sizes = [1, 32], strides = [1, 1]} : vector<16x128xf32> to vector<1x32xf32>
    %20 = vector.extract_strided_slice %9 {offsets = [3, 0], sizes = [1, 64], strides = [1, 1]} : vector<16x128xf32> to vector<1x64xf32>
    %21 = vector.extract_strided_slice %9 {offsets = [4, 0], sizes = [1, 32], strides = [1, 1]} : vector<16x128xf32> to vector<1x32xf32>
    %22 = vector.extract_strided_slice %9 {offsets = [5, 0], sizes = [1, 64], strides = [1, 1]} : vector<16x128xf32> to vector<1x64xf32>
    %23 = vector.extract_strided_slice %9 {offsets = [6, 0], sizes = [1, 32], strides = [1, 1]} : vector<16x128xf32> to vector<1x32xf32>
    %24 = vector.extract_strided_slice %9 {offsets = [7, 0], sizes = [1, 32], strides = [1, 1]} : vector<16x128xf32> to vector<1x32xf32>
    %25 = vector.extract_strided_slice %9 {offsets = [8, 0], sizes = [1, 32], strides = [1, 1]} : vector<16x128xf32> to vector<1x32xf32>
    %26 = vector.extract_strided_slice %9 {offsets = [9, 0], sizes = [1, 32], strides = [1, 1]} : vector<16x128xf32> to vector<1x32xf32>
    %27 = vector.extract_strided_slice %9 {offsets = [10, 0], sizes = [1, 32], strides = [1, 1]} : vector<16x128xf32> to vector<1x32xf32>
    %28 = vector.extract_strided_slice %9 {offsets = [11, 0], sizes = [1, 32], strides = [1, 1]} : vector<16x128xf32> to vector<1x32xf32>
    %29 = vector.extract_strided_slice %9 {offsets = [12, 0], sizes = [1, 32], strides = [1, 1]} : vector<16x128xf32> to vector<1x32xf32>
    %30 = vector.extract_strided_slice %9 {offsets = [13, 0], sizes = [1, 32], strides = [1, 1]} : vector<16x128xf32> to vector<1x32xf32>
    %31 = vector.extract_strided_slice %9 {offsets = [14, 0], sizes = [1, 32], strides = [1, 1]} : vector<16x128xf32> to vector<1x32xf32>
    %cst = arith.constant dense<0.000000e+00> : vector<8x96xf32>
    %32 = tpu.matmul %3, %10, %cst {dimension_numbers = #tpu.dot_dimension_numbers<[1], [0], [0], [1], [0, 0, 1, 1], [], []>} : vector<8x32xf32>, vector<32x96xf32>, vector<8x96xf32> -> vector<8x96xf32>
    %33 = vector.broadcast %17 : vector<1x96xf32> to vector<8x96xf32>
    %34 = arith.addf %32, %33 : vector<8x96xf32>
    %35 = vector.extract_strided_slice %34 {offsets = [0, 0], sizes = [8, 32], strides = [1, 1]} : vector<8x96xf32> to vector<8x32xf32>
    %36 = vector.extract_strided_slice %34 {offsets = [0, 32], sizes = [8, 32], strides = [1, 1]} : vector<8x96xf32> to vector<8x32xf32>
    %37 = vector.extract_strided_slice %34 {offsets = [0, 64], sizes = [8, 32], strides = [1, 1]} : vector<8x96xf32> to vector<8x32xf32>
    %c0_11 = arith.constant 0 : index
    %c0_12 = arith.constant 0 : index
    %c0_13 = arith.constant 0 : index
    %38 = vector.load %arg5[%c0_11, %c0_12, %c0_13] : memref<1x1x8xf32, #tpu.memory_space<vmem>>, vector<1x1x8xf32>
    %39 = vector.shape_cast %38 : vector<1x1x8xf32> to vector<1x8xf32>
    %cst_14 = arith.constant 0.000000e+00 : f32
    %40 = vector.broadcast %cst_14 : f32 to vector<8x8xf32>
    %41 = vector.extract_strided_slice %35 {offsets = [0, 0], sizes = [8, 8], strides = [1, 1]} : vector<8x32xf32> to vector<8x8xf32>
    %42 = vector.extract_strided_slice %36 {offsets = [0, 0], sizes = [8, 8], strides = [1, 1]} : vector<8x32xf32> to vector<8x8xf32>
    %cst_15 = arith.constant dense<0.000000e+00> : vector<8x8xf32>
    %43 = tpu.matmul %41, %42, %cst_15 {dimension_numbers = #tpu.dot_dimension_numbers<[1], [1], [0], [0], [0, 0, 1, 0], [], []>} : vector<8x8xf32>, vector<8x8xf32>, vector<8x8xf32> -> vector<8x8xf32>
    %cst_16 = arith.constant 0.353553385 : f32
    %44 = vector.broadcast %cst_16 : f32 to vector<8x8xf32>
    %45 = arith.mulf %43, %44 : vector<8x8xf32>
    %46 = vector.broadcast %39 : vector<1x8xf32> to vector<8x8xf32>
    %47 = arith.addf %45, %46 : vector<8x8xf32>
    %cst_17 = arith.constant dense<0xFF800000> : vector<8xf32>
    %48 = vector.multi_reduction <maximumf>, %47, %cst_17 [1] : vector<8x8xf32> to vector<8xf32>
    %49 = vector.shape_cast %48 : vector<8xf32> to vector<8x1xf32>
    %50 = vector.broadcast %49 : vector<8x1xf32> to vector<8x8xf32>
    %51 = arith.subf %47, %50 : vector<8x8xf32>
    %52 = math.exp %51 : vector<8x8xf32>
    %cst_18 = arith.constant dense<0.000000e+00> : vector<8xf32>
    %53 = vector.multi_reduction <add>, %52, %cst_18 [1] : vector<8x8xf32> to vector<8xf32>
    %54 = vector.shape_cast %53 : vector<8xf32> to vector<8x1xf32>
    %55 = vector.broadcast %54 : vector<8x1xf32> to vector<8x8xf32>
    %56 = arith.divf %52, %55 : vector<8x8xf32>
    %57 = arith.addf %40, %56 : vector<8x8xf32>
    %58 = vector.extract_strided_slice %37 {offsets = [0, 0], sizes = [8, 8], strides = [1, 1]} : vector<8x32xf32> to vector<8x8xf32>
    %cst_19 = arith.constant dense<0.000000e+00> : vector<8x8xf32>
    %59 = tpu.matmul %56, %58, %cst_19 {dimension_numbers = #tpu.dot_dimension_numbers<[1], [0], [0], [1], [0, 0, 1, 1], [], []>} : vector<8x8xf32>, vector<8x8xf32>, vector<8x8xf32> -> vector<8x8xf32>
    %60 = vector.extract_strided_slice %35 {offsets = [0, 8], sizes = [8, 8], strides = [1, 1]} : vector<8x32xf32> to vector<8x8xf32>
    %61 = vector.extract_strided_slice %36 {offsets = [0, 8], sizes = [8, 8], strides = [1, 1]} : vector<8x32xf32> to vector<8x8xf32>
    %cst_20 = arith.constant dense<0.000000e+00> : vector<8x8xf32>
    %62 = tpu.matmul %60, %61, %cst_20 {dimension_numbers = #tpu.dot_dimension_numbers<[1], [1], [0], [0], [0, 0, 1, 0], [], []>} : vector<8x8xf32>, vector<8x8xf32>, vector<8x8xf32> -> vector<8x8xf32>
    %cst_21 = arith.constant 0.353553385 : f32
    %63 = vector.broadcast %cst_21 : f32 to vector<8x8xf32>
    %64 = arith.mulf %62, %63 : vector<8x8xf32>
    %65 = vector.broadcast %39 : vector<1x8xf32> to vector<8x8xf32>
    %66 = arith.addf %64, %65 : vector<8x8xf32>
    %cst_22 = arith.constant dense<0xFF800000> : vector<8xf32>
    %67 = vector.multi_reduction <maximumf>, %66, %cst_22 [1] : vector<8x8xf32> to vector<8xf32>
    %68 = vector.shape_cast %67 : vector<8xf32> to vector<8x1xf32>
    %69 = vector.broadcast %68 : vector<8x1xf32> to vector<8x8xf32>
    %70 = arith.subf %66, %69 : vector<8x8xf32>
    %71 = math.exp %70 : vector<8x8xf32>
    %cst_23 = arith.constant dense<0.000000e+00> : vector<8xf32>
    %72 = vector.multi_reduction <add>, %71, %cst_23 [1] : vector<8x8xf32> to vector<8xf32>
    %73 = vector.shape_cast %72 : vector<8xf32> to vector<8x1xf32>
    %74 = vector.broadcast %73 : vector<8x1xf32> to vector<8x8xf32>
    %75 = arith.divf %71, %74 : vector<8x8xf32>
    %76 = arith.addf %57, %75 : vector<8x8xf32>
    %77 = vector.extract_strided_slice %37 {offsets = [0, 8], sizes = [8, 8], strides = [1, 1]} : vector<8x32xf32> to vector<8x8xf32>
    %cst_24 = arith.constant dense<0.000000e+00> : vector<8x8xf32>
    %78 = tpu.matmul %75, %77, %cst_24 {dimension_numbers = #tpu.dot_dimension_numbers<[1], [0], [0], [1], [0, 0, 1, 1], [], []>} : vector<8x8xf32>, vector<8x8xf32>, vector<8x8xf32> -> vector<8x8xf32>
    %79 = vector.extract_strided_slice %35 {offsets = [0, 16], sizes = [8, 8], strides = [1, 1]} : vector<8x32xf32> to vector<8x8xf32>
    %80 = vector.extract_strided_slice %36 {offsets = [0, 16], sizes = [8, 8], strides = [1, 1]} : vector<8x32xf32> to vector<8x8xf32>
    %cst_25 = arith.constant dense<0.000000e+00> : vector<8x8xf32>
    %81 = tpu.matmul %79, %80, %cst_25 {dimension_numbers = #tpu.dot_dimension_numbers<[1], [1], [0], [0], [0, 0, 1, 0], [], []>} : vector<8x8xf32>, vector<8x8xf32>, vector<8x8xf32> -> vector<8x8xf32>
    %cst_26 = arith.constant 0.353553385 : f32
    %82 = vector.broadcast %cst_26 : f32 to vector<8x8xf32>
    %83 = arith.mulf %81, %82 : vector<8x8xf32>
    %84 = vector.broadcast %39 : vector<1x8xf32> to vector<8x8xf32>
    %85 = arith.addf %83, %84 : vector<8x8xf32>
    %cst_27 = arith.constant dense<0xFF800000> : vector<8xf32>
    %86 = vector.multi_reduction <maximumf>, %85, %cst_27 [1] : vector<8x8xf32> to vector<8xf32>
    %87 = vector.shape_cast %86 : vector<8xf32> to vector<8x1xf32>
    %88 = vector.broadcast %87 : vector<8x1xf32> to vector<8x8xf32>
    %89 = arith.subf %85, %88 : vector<8x8xf32>
    %90 = math.exp %89 : vector<8x8xf32>
    %cst_28 = arith.constant dense<0.000000e+00> : vector<8xf32>
    %91 = vector.multi_reduction <add>, %90, %cst_28 [1] : vector<8x8xf32> to vector<8xf32>
    %92 = vector.shape_cast %91 : vector<8xf32> to vector<8x1xf32>
    %93 = vector.broadcast %92 : vector<8x1xf32> to vector<8x8xf32>
    %94 = arith.divf %90, %93 : vector<8x8xf32>
    %95 = arith.addf %76, %94 : vector<8x8xf32>
    %96 = vector.extract_strided_slice %37 {offsets = [0, 16], sizes = [8, 8], strides = [1, 1]} : vector<8x32xf32> to vector<8x8xf32>
    %cst_29 = arith.constant dense<0.000000e+00> : vector<8x8xf32>
    %97 = tpu.matmul %94, %96, %cst_29 {dimension_numbers = #tpu.dot_dimension_numbers<[1], [0], [0], [1], [0, 0, 1, 1], [], []>} : vector<8x8xf32>, vector<8x8xf32>, vector<8x8xf32> -> vector<8x8xf32>
    %98 = vector.extract_strided_slice %35 {offsets = [0, 24], sizes = [8, 8], strides = [1, 1]} : vector<8x32xf32> to vector<8x8xf32>
    %99 = vector.extract_strided_slice %36 {offsets = [0, 24], sizes = [8, 8], strides = [1, 1]} : vector<8x32xf32> to vector<8x8xf32>
    %cst_30 = arith.constant dense<0.000000e+00> : vector<8x8xf32>
    %100 = tpu.matmul %98, %99, %cst_30 {dimension_numbers = #tpu.dot_dimension_numbers<[1], [1], [0], [0], [0, 0, 1, 0], [], []>} : vector<8x8xf32>, vector<8x8xf32>, vector<8x8xf32> -> vector<8x8xf32>
    %cst_31 = arith.constant 0.353553385 : f32
    %101 = vector.broadcast %cst_31 : f32 to vector<8x8xf32>
    %102 = arith.mulf %100, %101 : vector<8x8xf32>
    %103 = vector.broadcast %39 : vector<1x8xf32> to vector<8x8xf32>
    %104 = arith.addf %102, %103 : vector<8x8xf32>
    %cst_32 = arith.constant dense<0xFF800000> : vector<8xf32>
    %105 = vector.multi_reduction <maximumf>, %104, %cst_32 [1] : vector<8x8xf32> to vector<8xf32>
    %106 = vector.shape_cast %105 : vector<8xf32> to vector<8x1xf32>
    %107 = vector.broadcast %106 : vector<8x1xf32> to vector<8x8xf32>
    %108 = arith.subf %104, %107 : vector<8x8xf32>
    %109 = math.exp %108 : vector<8x8xf32>
    %cst_33 = arith.constant dense<0.000000e+00> : vector<8xf32>
    %110 = vector.multi_reduction <add>, %109, %cst_33 [1] : vector<8x8xf32> to vector<8xf32>
    %111 = vector.shape_cast %110 : vector<8xf32> to vector<8x1xf32>
    %112 = vector.broadcast %111 : vector<8x1xf32> to vector<8x8xf32>
    %113 = arith.divf %109, %112 : vector<8x8xf32>
    %114 = arith.addf %95, %113 : vector<8x8xf32>
    %115 = vector.extract_strided_slice %37 {offsets = [0, 24], sizes = [8, 8], strides = [1, 1]} : vector<8x32xf32> to vector<8x8xf32>
    %cst_34 = arith.constant dense<0.000000e+00> : vector<8x8xf32>
    %116 = tpu.matmul %113, %115, %cst_34 {dimension_numbers = #tpu.dot_dimension_numbers<[1], [0], [0], [1], [0, 0, 1, 1], [], []>} : vector<8x8xf32>, vector<8x8xf32>, vector<8x8xf32> -> vector<8x8xf32>
    %117 = tpu.concatenate %59, %78, %97, %116 in 1 : vector<8x8xf32>, vector<8x8xf32>, vector<8x8xf32>, vector<8x8xf32> -> vector<8x32xf32>
    %cst_35 = arith.constant dense<0.000000e+00> : vector<8x32xf32>
    %118 = tpu.matmul %117, %11, %cst_35 {dimension_numbers = #tpu.dot_dimension_numbers<[1], [0], [0], [1], [0, 0, 1, 1], [], []>} : vector<8x32xf32>, vector<32x32xf32>, vector<8x32xf32> -> vector<8x32xf32>
    %119 = vector.broadcast %18 : vector<1x32xf32> to vector<8x32xf32>
    %120 = arith.addf %118, %119 : vector<8x32xf32>
    %cst_36 = arith.constant 2.500000e-01 : f32
    %121 = vector.broadcast %cst_36 : f32 to vector<8x8xf32>
    %122 = arith.mulf %114, %121 : vector<8x8xf32>
    %123 = arith.addf %3, %120 : vector<8x32xf32>
    %cst_37 = arith.constant dense<0.000000e+00> : vector<8xf32>
    %124 = vector.multi_reduction <add>, %123, %cst_37 [1] : vector<8x32xf32> to vector<8xf32>
    %125 = vector.shape_cast %124 : vector<8xf32> to vector<8x1xf32>
    %cst_38 = arith.constant 3.200000e+01 : f32
    %126 = vector.broadcast %cst_38 : f32 to vector<8x1xf32>
    %127 = arith.divf %125, %126 : vector<8x1xf32>
    %128 = vector.broadcast %127 : vector<8x1xf32> to vector<8x32xf32>
    %129 = arith.subf %123, %128 : vector<8x32xf32>
    %130 = arith.mulf %129, %129 : vector<8x32xf32>
    %cst_39 = arith.constant dense<0.000000e+00> : vector<8xf32>
    %131 = vector.multi_reduction <add>, %130, %cst_39 [1] : vector<8x32xf32> to vector<8xf32>
    %132 = vector.shape_cast %131 : vector<8xf32> to vector<8x1xf32>
    %cst_40 = arith.constant 3.200000e+01 : f32
    %133 = vector.broadcast %cst_40 : f32 to vector<8x1xf32>
    %134 = arith.divf %132, %133 : vector<8x1xf32>
    %135 = vector.broadcast %127 : vector<8x1xf32> to vector<8x32xf32>
    %136 = arith.subf %123, %135 : vector<8x32xf32>
    %cst_41 = arith.constant 9.99999974E-6 : f32
    %137 = vector.broadcast %cst_41 : f32 to vector<8x1xf32>
    %138 = arith.addf %134, %137 : vector<8x1xf32>
    %139 = math.rsqrt %138 : vector<8x1xf32>
    %140 = vector.broadcast %139 : vector<8x1xf32> to vector<8x32xf32>
    %141 = arith.mulf %136, %140 : vector<8x32xf32>
    %142 = vector.broadcast %24 : vector<1x32xf32> to vector<8x32xf32>
    %143 = arith.mulf %141, %142 : vector<8x32xf32>
    %144 = vector.broadcast %25 : vector<1x32xf32> to vector<8x32xf32>
    %145 = arith.addf %143, %144 : vector<8x32xf32>
    %cst_42 = arith.constant dense<0.000000e+00> : vector<8x32xf32>
    %146 = tpu.matmul %145, %12, %cst_42 {dimension_numbers = #tpu.dot_dimension_numbers<[1], [0], [0], [1], [0, 0, 1, 1], [], []>} : vector<8x32xf32>, vector<32x32xf32>, vector<8x32xf32> -> vector<8x32xf32>
    %147 = vector.broadcast %19 : vector<1x32xf32> to vector<8x32xf32>
    %148 = arith.addf %146, %147 : vector<8x32xf32>
    %cst_43 = arith.constant dense<0.000000e+00> : vector<8x64xf32>
    %149 = tpu.matmul %5, %13, %cst_43 {dimension_numbers = #tpu.dot_dimension_numbers<[1], [0], [0], [1], [0, 0, 1, 1], [], []>} : vector<8x32xf32>, vector<32x64xf32>, vector<8x64xf32> -> vector<8x64xf32>
    %150 = vector.broadcast %20 : vector<1x64xf32> to vector<8x64xf32>
    %151 = arith.addf %149, %150 : vector<8x64xf32>
    %152 = vector.extract_strided_slice %151 {offsets = [0, 0], sizes = [8, 32], strides = [1, 1]} : vector<8x64xf32> to vector<8x32xf32>
    %153 = vector.extract_strided_slice %151 {offsets = [0, 32], sizes = [8, 32], strides = [1, 1]} : vector<8x64xf32> to vector<8x32xf32>
    %c0_44 = arith.constant 0 : index
    %c0_45 = arith.constant 0 : index
    %c0_46 = arith.constant 0 : index
    %154 = vector.load %arg6[%c0_44, %c0_45, %c0_46] : memref<1x1x8xf32, #tpu.memory_space<vmem>>, vector<1x1x8xf32>
    %155 = vector.shape_cast %154 : vector<1x1x8xf32> to vector<1x8xf32>
    %cst_47 = arith.constant 0.000000e+00 : f32
    %156 = vector.broadcast %cst_47 : f32 to vector<8x8xf32>
    %157 = vector.extract_strided_slice %148 {offsets = [0, 0], sizes = [8, 8], strides = [1, 1]} : vector<8x32xf32> to vector<8x8xf32>
    %158 = vector.extract_strided_slice %152 {offsets = [0, 0], sizes = [8, 8], strides = [1, 1]} : vector<8x32xf32> to vector<8x8xf32>
    %cst_48 = arith.constant dense<0.000000e+00> : vector<8x8xf32>
    %159 = tpu.matmul %157, %158, %cst_48 {dimension_numbers = #tpu.dot_dimension_numbers<[1], [1], [0], [0], [0, 0, 1, 0], [], []>} : vector<8x8xf32>, vector<8x8xf32>, vector<8x8xf32> -> vector<8x8xf32>
    %cst_49 = arith.constant 0.353553385 : f32
    %160 = vector.broadcast %cst_49 : f32 to vector<8x8xf32>
    %161 = arith.mulf %159, %160 : vector<8x8xf32>
    %162 = vector.broadcast %155 : vector<1x8xf32> to vector<8x8xf32>
    %163 = arith.addf %161, %162 : vector<8x8xf32>
    %cst_50 = arith.constant dense<0xFF800000> : vector<8xf32>
    %164 = vector.multi_reduction <maximumf>, %163, %cst_50 [1] : vector<8x8xf32> to vector<8xf32>
    %165 = vector.shape_cast %164 : vector<8xf32> to vector<8x1xf32>
    %166 = vector.broadcast %165 : vector<8x1xf32> to vector<8x8xf32>
    %167 = arith.subf %163, %166 : vector<8x8xf32>
    %168 = math.exp %167 : vector<8x8xf32>
    %cst_51 = arith.constant dense<0.000000e+00> : vector<8xf32>
    %169 = vector.multi_reduction <add>, %168, %cst_51 [1] : vector<8x8xf32> to vector<8xf32>
    %170 = vector.shape_cast %169 : vector<8xf32> to vector<8x1xf32>
    %171 = vector.broadcast %170 : vector<8x1xf32> to vector<8x8xf32>
    %172 = arith.divf %168, %171 : vector<8x8xf32>
    %173 = arith.addf %156, %172 : vector<8x8xf32>
    %174 = vector.extract_strided_slice %153 {offsets = [0, 0], sizes = [8, 8], strides = [1, 1]} : vector<8x32xf32> to vector<8x8xf32>
    %cst_52 = arith.constant dense<0.000000e+00> : vector<8x8xf32>
    %175 = tpu.matmul %172, %174, %cst_52 {dimension_numbers = #tpu.dot_dimension_numbers<[1], [0], [0], [1], [0, 0, 1, 1], [], []>} : vector<8x8xf32>, vector<8x8xf32>, vector<8x8xf32> -> vector<8x8xf32>
    %176 = vector.extract_strided_slice %148 {offsets = [0, 8], sizes = [8, 8], strides = [1, 1]} : vector<8x32xf32> to vector<8x8xf32>
    %177 = vector.extract_strided_slice %152 {offsets = [0, 8], sizes = [8, 8], strides = [1, 1]} : vector<8x32xf32> to vector<8x8xf32>
    %cst_53 = arith.constant dense<0.000000e+00> : vector<8x8xf32>
    %178 = tpu.matmul %176, %177, %cst_53 {dimension_numbers = #tpu.dot_dimension_numbers<[1], [1], [0], [0], [0, 0, 1, 0], [], []>} : vector<8x8xf32>, vector<8x8xf32>, vector<8x8xf32> -> vector<8x8xf32>
    %cst_54 = arith.constant 0.353553385 : f32
    %179 = vector.broadcast %cst_54 : f32 to vector<8x8xf32>
    %180 = arith.mulf %178, %179 : vector<8x8xf32>
    %181 = vector.broadcast %155 : vector<1x8xf32> to vector<8x8xf32>
    %182 = arith.addf %180, %181 : vector<8x8xf32>
    %cst_55 = arith.constant dense<0xFF800000> : vector<8xf32>
    %183 = vector.multi_reduction <maximumf>, %182, %cst_55 [1] : vector<8x8xf32> to vector<8xf32>
    %184 = vector.shape_cast %183 : vector<8xf32> to vector<8x1xf32>
    %185 = vector.broadcast %184 : vector<8x1xf32> to vector<8x8xf32>
    %186 = arith.subf %182, %185 : vector<8x8xf32>
    %187 = math.exp %186 : vector<8x8xf32>
    %cst_56 = arith.constant dense<0.000000e+00> : vector<8xf32>
    %188 = vector.multi_reduction <add>, %187, %cst_56 [1] : vector<8x8xf32> to vector<8xf32>
    %189 = vector.shape_cast %188 : vector<8xf32> to vector<8x1xf32>
    %190 = vector.broadcast %189 : vector<8x1xf32> to vector<8x8xf32>
    %191 = arith.divf %187, %190 : vector<8x8xf32>
    %192 = arith.addf %173, %191 : vector<8x8xf32>
    %193 = vector.extract_strided_slice %153 {offsets = [0, 8], sizes = [8, 8], strides = [1, 1]} : vector<8x32xf32> to vector<8x8xf32>
    %cst_57 = arith.constant dense<0.000000e+00> : vector<8x8xf32>
    %194 = tpu.matmul %191, %193, %cst_57 {dimension_numbers = #tpu.dot_dimension_numbers<[1], [0], [0], [1], [0, 0, 1, 1], [], []>} : vector<8x8xf32>, vector<8x8xf32>, vector<8x8xf32> -> vector<8x8xf32>
    %195 = vector.extract_strided_slice %148 {offsets = [0, 16], sizes = [8, 8], strides = [1, 1]} : vector<8x32xf32> to vector<8x8xf32>
    %196 = vector.extract_strided_slice %152 {offsets = [0, 16], sizes = [8, 8], strides = [1, 1]} : vector<8x32xf32> to vector<8x8xf32>
    %cst_58 = arith.constant dense<0.000000e+00> : vector<8x8xf32>
    %197 = tpu.matmul %195, %196, %cst_58 {dimension_numbers = #tpu.dot_dimension_numbers<[1], [1], [0], [0], [0, 0, 1, 0], [], []>} : vector<8x8xf32>, vector<8x8xf32>, vector<8x8xf32> -> vector<8x8xf32>
    %cst_59 = arith.constant 0.353553385 : f32
    %198 = vector.broadcast %cst_59 : f32 to vector<8x8xf32>
    %199 = arith.mulf %197, %198 : vector<8x8xf32>
    %200 = vector.broadcast %155 : vector<1x8xf32> to vector<8x8xf32>
    %201 = arith.addf %199, %200 : vector<8x8xf32>
    %cst_60 = arith.constant dense<0xFF800000> : vector<8xf32>
    %202 = vector.multi_reduction <maximumf>, %201, %cst_60 [1] : vector<8x8xf32> to vector<8xf32>
    %203 = vector.shape_cast %202 : vector<8xf32> to vector<8x1xf32>
    %204 = vector.broadcast %203 : vector<8x1xf32> to vector<8x8xf32>
    %205 = arith.subf %201, %204 : vector<8x8xf32>
    %206 = math.exp %205 : vector<8x8xf32>
    %cst_61 = arith.constant dense<0.000000e+00> : vector<8xf32>
    %207 = vector.multi_reduction <add>, %206, %cst_61 [1] : vector<8x8xf32> to vector<8xf32>
    %208 = vector.shape_cast %207 : vector<8xf32> to vector<8x1xf32>
    %209 = vector.broadcast %208 : vector<8x1xf32> to vector<8x8xf32>
    %210 = arith.divf %206, %209 : vector<8x8xf32>
    %211 = arith.addf %192, %210 : vector<8x8xf32>
    %212 = vector.extract_strided_slice %153 {offsets = [0, 16], sizes = [8, 8], strides = [1, 1]} : vector<8x32xf32> to vector<8x8xf32>
    %cst_62 = arith.constant dense<0.000000e+00> : vector<8x8xf32>
    %213 = tpu.matmul %210, %212, %cst_62 {dimension_numbers = #tpu.dot_dimension_numbers<[1], [0], [0], [1], [0, 0, 1, 1], [], []>} : vector<8x8xf32>, vector<8x8xf32>, vector<8x8xf32> -> vector<8x8xf32>
    %214 = vector.extract_strided_slice %148 {offsets = [0, 24], sizes = [8, 8], strides = [1, 1]} : vector<8x32xf32> to vector<8x8xf32>
    %215 = vector.extract_strided_slice %152 {offsets = [0, 24], sizes = [8, 8], strides = [1, 1]} : vector<8x32xf32> to vector<8x8xf32>
    %cst_63 = arith.constant dense<0.000000e+00> : vector<8x8xf32>
    %216 = tpu.matmul %214, %215, %cst_63 {dimension_numbers = #tpu.dot_dimension_numbers<[1], [1], [0], [0], [0, 0, 1, 0], [], []>} : vector<8x8xf32>, vector<8x8xf32>, vector<8x8xf32> -> vector<8x8xf32>
    %cst_64 = arith.constant 0.353553385 : f32
    %217 = vector.broadcast %cst_64 : f32 to vector<8x8xf32>
    %218 = arith.mulf %216, %217 : vector<8x8xf32>
    %219 = vector.broadcast %155 : vector<1x8xf32> to vector<8x8xf32>
    %220 = arith.addf %218, %219 : vector<8x8xf32>
    %cst_65 = arith.constant dense<0xFF800000> : vector<8xf32>
    %221 = vector.multi_reduction <maximumf>, %220, %cst_65 [1] : vector<8x8xf32> to vector<8xf32>
    %222 = vector.shape_cast %221 : vector<8xf32> to vector<8x1xf32>
    %223 = vector.broadcast %222 : vector<8x1xf32> to vector<8x8xf32>
    %224 = arith.subf %220, %223 : vector<8x8xf32>
    %225 = math.exp %224 : vector<8x8xf32>
    %cst_66 = arith.constant dense<0.000000e+00> : vector<8xf32>
    %226 = vector.multi_reduction <add>, %225, %cst_66 [1] : vector<8x8xf32> to vector<8xf32>
    %227 = vector.shape_cast %226 : vector<8xf32> to vector<8x1xf32>
    %228 = vector.broadcast %227 : vector<8x1xf32> to vector<8x8xf32>
    %229 = arith.divf %225, %228 : vector<8x8xf32>
    %230 = arith.addf %211, %229 : vector<8x8xf32>
    %231 = vector.extract_strided_slice %153 {offsets = [0, 24], sizes = [8, 8], strides = [1, 1]} : vector<8x32xf32> to vector<8x8xf32>
    %cst_67 = arith.constant dense<0.000000e+00> : vector<8x8xf32>
    %232 = tpu.matmul %229, %231, %cst_67 {dimension_numbers = #tpu.dot_dimension_numbers<[1], [0], [0], [1], [0, 0, 1, 1], [], []>} : vector<8x8xf32>, vector<8x8xf32>, vector<8x8xf32> -> vector<8x8xf32>
    %233 = tpu.concatenate %175, %194, %213, %232 in 1 : vector<8x8xf32>, vector<8x8xf32>, vector<8x8xf32>, vector<8x8xf32> -> vector<8x32xf32>
    %cst_68 = arith.constant dense<0.000000e+00> : vector<8x32xf32>
    %234 = tpu.matmul %233, %14, %cst_68 {dimension_numbers = #tpu.dot_dimension_numbers<[1], [0], [0], [1], [0, 0, 1, 1], [], []>} : vector<8x32xf32>, vector<32x32xf32>, vector<8x32xf32> -> vector<8x32xf32>
    %235 = vector.broadcast %21 : vector<1x32xf32> to vector<8x32xf32>
    %236 = arith.addf %234, %235 : vector<8x32xf32>
    %cst_69 = arith.constant 2.500000e-01 : f32
    %237 = vector.broadcast %cst_69 : f32 to vector<8x8xf32>
    %238 = arith.mulf %230, %237 : vector<8x8xf32>
    %239 = arith.addf %145, %236 : vector<8x32xf32>
    %c0_70 = arith.constant 0 : index
    %c0_71 = arith.constant 0 : index
    %c0_72 = arith.constant 0 : index
    %240 = vector.load %arg4[%c0_70, %c0_71, %c0_72] : memref<1x1x32xf32, #tpu.memory_space<vmem>>, vector<1x1x32xf32>
    %241 = vector.shape_cast %240 : vector<1x1x32xf32> to vector<1x32xf32>
    %242 = vector.broadcast %241 : vector<1x32xf32> to vector<8x32xf32>
    %243 = arith.addf %239, %242 : vector<8x32xf32>
    %cst_73 = arith.constant dense<0.000000e+00> : vector<8xf32>
    %244 = vector.multi_reduction <add>, %243, %cst_73 [1] : vector<8x32xf32> to vector<8xf32>
    %245 = vector.shape_cast %244 : vector<8xf32> to vector<8x1xf32>
    %cst_74 = arith.constant 3.200000e+01 : f32
    %246 = vector.broadcast %cst_74 : f32 to vector<8x1xf32>
    %247 = arith.divf %245, %246 : vector<8x1xf32>
    %248 = vector.broadcast %247 : vector<8x1xf32> to vector<8x32xf32>
    %249 = arith.subf %243, %248 : vector<8x32xf32>
    %250 = arith.mulf %249, %249 : vector<8x32xf32>
    %cst_75 = arith.constant dense<0.000000e+00> : vector<8xf32>
    %251 = vector.multi_reduction <add>, %250, %cst_75 [1] : vector<8x32xf32> to vector<8xf32>
    %252 = vector.shape_cast %251 : vector<8xf32> to vector<8x1xf32>
    %cst_76 = arith.constant 3.200000e+01 : f32
    %253 = vector.broadcast %cst_76 : f32 to vector<8x1xf32>
    %254 = arith.divf %252, %253 : vector<8x1xf32>
    %255 = vector.broadcast %247 : vector<8x1xf32> to vector<8x32xf32>
    %256 = arith.subf %243, %255 : vector<8x32xf32>
    %cst_77 = arith.constant 9.99999974E-6 : f32
    %257 = vector.broadcast %cst_77 : f32 to vector<8x1xf32>
    %258 = arith.addf %254, %257 : vector<8x1xf32>
    %259 = math.rsqrt %258 : vector<8x1xf32>
    %260 = vector.broadcast %259 : vector<8x1xf32> to vector<8x32xf32>
    %261 = arith.mulf %256, %260 : vector<8x32xf32>
    %262 = vector.broadcast %26 : vector<1x32xf32> to vector<8x32xf32>
    %263 = arith.mulf %261, %262 : vector<8x32xf32>
    %264 = vector.broadcast %27 : vector<1x32xf32> to vector<8x32xf32>
    %265 = arith.addf %263, %264 : vector<8x32xf32>
    %cst_78 = arith.constant dense<0.000000e+00> : vector<8x64xf32>
    %266 = tpu.matmul %265, %15, %cst_78 {dimension_numbers = #tpu.dot_dimension_numbers<[1], [0], [0], [1], [0, 0, 1, 1], [], []>} : vector<8x32xf32>, vector<32x64xf32>, vector<8x64xf32> -> vector<8x64xf32>
    %267 = vector.broadcast %22 : vector<1x64xf32> to vector<8x64xf32>
    %268 = arith.addf %266, %267 : vector<8x64xf32>
    %cst_79 = arith.constant 0.000000e+00 : f32
    %269 = vector.broadcast %cst_79 : f32 to vector<8x64xf32>
    %270 = arith.maximumf %268, %269 : vector<8x64xf32>
    %cst_80 = arith.constant dense<0.000000e+00> : vector<8x32xf32>
    %271 = tpu.matmul %270, %16, %cst_80 {dimension_numbers = #tpu.dot_dimension_numbers<[1], [1], [0], [0], [0, 0, 1, 0], [], []>} : vector<8x64xf32>, vector<32x64xf32>, vector<8x32xf32> -> vector<8x32xf32>
    %272 = vector.broadcast %23 : vector<1x32xf32> to vector<8x32xf32>
    %273 = arith.addf %271, %272 : vector<8x32xf32>
    %274 = arith.addf %265, %273 : vector<8x32xf32>
    %cst_81 = arith.constant dense<0.000000e+00> : vector<8xf32>
    %275 = vector.multi_reduction <add>, %274, %cst_81 [1] : vector<8x32xf32> to vector<8xf32>
    %276 = vector.shape_cast %275 : vector<8xf32> to vector<8x1xf32>
    %cst_82 = arith.constant 3.200000e+01 : f32
    %277 = vector.broadcast %cst_82 : f32 to vector<8x1xf32>
    %278 = arith.divf %276, %277 : vector<8x1xf32>
    %279 = vector.broadcast %278 : vector<8x1xf32> to vector<8x32xf32>
    %280 = arith.subf %274, %279 : vector<8x32xf32>
    %281 = arith.mulf %280, %280 : vector<8x32xf32>
    %cst_83 = arith.constant dense<0.000000e+00> : vector<8xf32>
    %282 = vector.multi_reduction <add>, %281, %cst_83 [1] : vector<8x32xf32> to vector<8xf32>
    %283 = vector.shape_cast %282 : vector<8xf32> to vector<8x1xf32>
    %cst_84 = arith.constant 3.200000e+01 : f32
    %284 = vector.broadcast %cst_84 : f32 to vector<8x1xf32>
    %285 = arith.divf %283, %284 : vector<8x1xf32>
    %286 = vector.broadcast %278 : vector<8x1xf32> to vector<8x32xf32>
    %287 = arith.subf %274, %286 : vector<8x32xf32>
    %cst_85 = arith.constant 9.99999974E-6 : f32
    %288 = vector.broadcast %cst_85 : f32 to vector<8x1xf32>
    %289 = arith.addf %285, %288 : vector<8x1xf32>
    %290 = math.rsqrt %289 : vector<8x1xf32>
    %291 = vector.broadcast %290 : vector<8x1xf32> to vector<8x32xf32>
    %292 = arith.mulf %287, %291 : vector<8x32xf32>
    %293 = vector.broadcast %28 : vector<1x32xf32> to vector<8x32xf32>
    %294 = arith.mulf %292, %293 : vector<8x32xf32>
    %295 = vector.broadcast %29 : vector<1x32xf32> to vector<8x32xf32>
    %296 = arith.addf %294, %295 : vector<8x32xf32>
    %c0_86 = arith.constant 0 : index
    %c0_87 = arith.constant 0 : index
    %297 = vector.load %arg12[%c0_86, %c0_87] : memref<8x32xf32, #tpu.memory_space<vmem>>, vector<8x32xf32>
    tpu.vector_store %arg12[%c0_86, %c0_87], %296 {strides = array<i32>} : memref<8x32xf32, #tpu.memory_space<vmem>>, vector<8x32xf32>,
    %c0_88 = arith.constant 0 : index
    %c0_89 = arith.constant 0 : index
    %c0_90 = arith.constant 0 : index
    %298 = vector.load %arg9[%c0_88, %c0_89, %c0_90] : memref<1x8x32xf32, #tpu.memory_space<vmem>>, vector<1x8x32xf32>
    %299 = vector.shape_cast %298 : vector<1x8x32xf32> to vector<8x32xf32>
    %300 = vector.shape_cast %296 : vector<8x32xf32> to vector<1x8x32xf32>
    tpu.vector_store %arg9[%c0_88, %c0_89, %c0_90], %300 {strides = array<i32>} : memref<1x8x32xf32, #tpu.memory_space<vmem>>, vector<1x8x32xf32>,
    %c0_91 = arith.constant 0 : index
    %c0_92 = arith.constant 0 : index
    %c0_93 = arith.constant 0 : index
    %c0_94 = arith.constant 0 : index
    %301 = vector.load %arg10[%c0_91, %c0_92, %c0_93, %c0_94] : memref<1x1x8x8xf32, #tpu.memory_space<vmem>>, vector<1x1x8x8xf32>
    %302 = vector.shape_cast %301 : vector<1x1x8x8xf32> to vector<8x8xf32>
    %303 = vector.shape_cast %122 : vector<8x8xf32> to vector<1x1x8x8xf32>
    tpu.vector_store %arg10[%c0_91, %c0_92, %c0_93, %c0_94], %303 {strides = array<i32>} : memref<1x1x8x8xf32, #tpu.memory_space<vmem>>, vector<1x1x8x8xf32>,
    %c0_95 = arith.constant 0 : index
    %c0_96 = arith.constant 0 : index
    %c0_97 = arith.constant 0 : index
    %c0_98 = arith.constant 0 : index
    %304 = vector.load %arg11[%c0_95, %c0_96, %c0_97, %c0_98] : memref<1x1x8x8xf32, #tpu.memory_space<vmem>>, vector<1x1x8x8xf32>
    %305 = vector.shape_cast %304 : vector<1x1x8x8xf32> to vector<8x8xf32>
    %306 = vector.shape_cast %238 : vector<8x8xf32> to vector<1x1x8x8xf32>
    tpu.vector_store %arg11[%c0_95, %c0_96, %c0_97, %c0_98], %306 {strides = array<i32>} : memref<1x1x8x8xf32, #tpu.memory_space<vmem>>, vector<1x1x8x8xf32>,
    %c1_i32 = arith.constant 1 : i32
    %307 = arith.cmpi eq, %arg1, %c1_i32 : i32
    %308 = arith.extui %307 : i1 to i32
    %c0_i32_99 = arith.constant 0 : i32
    %309 = arith.cmpi ne, %308, %c0_i32_99 : i32
    scf.if %309 {
      %cst_100 = arith.constant dense<0.000000e+00> : vector<8xf32>
      %310 = vector.multi_reduction <add>, %296, %cst_100 [1] : vector<8x32xf32> to vector<8xf32>
      %311 = vector.shape_cast %310 : vector<8xf32> to vector<8x1xf32>
      %cst_101 = arith.constant 3.200000e+01 : f32
      %312 = vector.broadcast %cst_101 : f32 to vector<8x1xf32>
      %313 = arith.divf %311, %312 : vector<8x1xf32>
      %314 = vector.broadcast %313 : vector<8x1xf32> to vector<8x32xf32>
      %315 = arith.subf %296, %314 : vector<8x32xf32>
      %316 = arith.mulf %315, %315 : vector<8x32xf32>
      %cst_102 = arith.constant dense<0.000000e+00> : vector<8xf32>
      %317 = vector.multi_reduction <add>, %316, %cst_102 [1] : vector<8x32xf32> to vector<8xf32>
      %318 = vector.shape_cast %317 : vector<8xf32> to vector<8x1xf32>
      %cst_103 = arith.constant 3.200000e+01 : f32
      %319 = vector.broadcast %cst_103 : f32 to vector<8x1xf32>
      %320 = arith.divf %318, %319 : vector<8x1xf32>
      %321 = vector.broadcast %313 : vector<8x1xf32> to vector<8x32xf32>
      %322 = arith.subf %296, %321 : vector<8x32xf32>
      %cst_104 = arith.constant 9.99999974E-6 : f32
      %323 = vector.broadcast %cst_104 : f32 to vector<8x1xf32>
      %324 = arith.addf %320, %323 : vector<8x1xf32>
      %325 = math.rsqrt %324 : vector<8x1xf32>
      %326 = vector.broadcast %325 : vector<8x1xf32> to vector<8x32xf32>
      %327 = arith.mulf %322, %326 : vector<8x32xf32>
      %328 = vector.broadcast %30 : vector<1x32xf32> to vector<8x32xf32>
      %329 = arith.mulf %327, %328 : vector<8x32xf32>
      %330 = vector.broadcast %31 : vector<1x32xf32> to vector<8x32xf32>
      %331 = arith.addf %329, %330 : vector<8x32xf32>
      %c0_105 = arith.constant 0 : index
      %c0_106 = arith.constant 0 : index
      %c0_107 = arith.constant 0 : index
      %332 = vector.load %arg9[%c0_105, %c0_106, %c0_107] : memref<1x8x32xf32, #tpu.memory_space<vmem>>, vector<1x8x32xf32>
      %333 = vector.shape_cast %332 : vector<1x8x32xf32> to vector<8x32xf32>
      %334 = vector.shape_cast %331 : vector<8x32xf32> to vector<1x8x32xf32>
      tpu.vector_store %arg9[%c0_105, %c0_106, %c0_107], %334 {strides = array<i32>} : memref<1x8x32xf32, #tpu.memory_space<vmem>>, vector<1x8x32xf32>,
    } else {
    }
    return
  }
  func.func @transform_0(%arg0: i32, %arg1: i32) -> (i32, i32, i32) {
    %c0_i32 = arith.constant 0 : i32
    %c0_i32_0 = arith.constant 0 : i32
    %c0_i32_1 = arith.constant 0 : i32
    return %arg0, %c0_i32, %c0_i32_0 : i32, i32, i32
  }
  func.func @transform_1(%arg0: i32, %arg1: i32) -> (i32, i32, i32) {
    %c0_i32 = arith.constant 0 : i32
    %c0_i32_0 = arith.constant 0 : i32
    %c0_i32_1 = arith.constant 0 : i32
    return %arg0, %c0_i32, %c0_i32_0 : i32, i32, i32
  }
  func.func @transform_2(%arg0: i32, %arg1: i32) -> (i32, i32, i32) {
    %c0_i32 = arith.constant 0 : i32
    %c0_i32_0 = arith.constant 0 : i32
    %c0_i32_1 = arith.constant 0 : i32
    return %arg0, %c0_i32, %c0_i32_0 : i32, i32, i32
  }
  func.func @transform_3(%arg0: i32, %arg1: i32) -> (i32, i32, i32) {
    %c0_i32 = arith.constant 0 : i32
    %c0_i32_0 = arith.constant 0 : i32
    %c0_i32_1 = arith.constant 0 : i32
    return %arg0, %c0_i32, %c0_i32_0 : i32, i32, i32
  }
  func.func @transform_4(%arg0: i32, %arg1: i32) -> (i32, i32, i32) {
    %c0_i32 = arith.constant 0 : i32
    %c0_i32_0 = arith.constant 0 : i32
    %c0_i32_1 = arith.constant 0 : i32
    return %arg0, %c0_i32, %c0_i32_0 : i32, i32, i32
  }
  func.func @transform_5(%arg0: i32, %arg1: i32) -> (i32, i32, i32) {
    %c0_i32 = arith.constant 0 : i32
    %c0_i32_0 = arith.constant 0 : i32
    %c0_i32_1 = arith.constant 0 : i32
    return %arg1, %c0_i32, %c0_i32_0 : i32, i32, i32
  }
  func.func @transform_6(%arg0: i32, %arg1: i32) -> (i32, i32, i32) {
    %c0_i32 = arith.constant 0 : i32
    %c0_i32_0 = arith.constant 0 : i32
    %c0_i32_1 = arith.constant 0 : i32
    return %arg1, %c0_i32, %c0_i32_0 : i32, i32, i32
  }
  func.func @transform_7(%arg0: i32, %arg1: i32) -> (i32, i32, i32) {
    %c0_i32 = arith.constant 0 : i32
    %c0_i32_0 = arith.constant 0 : i32
    %c0_i32_1 = arith.constant 0 : i32
    return %arg0, %c0_i32, %c0_i32_0 : i32, i32, i32
  }
  func.func @transform_8(%arg0: i32, %arg1: i32) -> (i32, i32, i32, i32) {
    %c0_i32 = arith.constant 0 : i32
    %c0_i32_0 = arith.constant 0 : i32
    %c0_i32_1 = arith.constant 0 : i32
    return %arg0, %arg1, %c0_i32, %c0_i32_0 : i32, i32, i32, i32
  }
  func.func @transform_9(%arg0: i32, %arg1: i32) -> (i32, i32, i32, i32) {
    %c0_i32 = arith.constant 0 : i32
    %c0_i32_0 = arith.constant 0 : i32
    %c0_i32_1 = arith.constant 0 : i32
    return %arg0, %arg1, %c0_i32, %c0_i32_0 : i32, i32, i32, i32
  }
}

</mosaic_0001>

<llo_original>
// kernel: _paired_transformer_encoder.1
$region0: #{_paired_transformer_encoder.1}
  #allocation0 [shape = 'u32[]', space=smem, size = 0x4, offset = 0x4, fixed_abs, tag = 'smem constant byte address 0x4 - core index']
  #allocation1 [shape = 'u32[144,128]{1,0:T(1,128)}', space=vmem, size = 0x12000, scoped, tag = 'internal scratch']
  #allocation2 [shape = 'f32[8,32]{1,0:T(8,128)}', space=vmem, size = 0x1000, scoped, tag = 'scratch operand']
  %s0 = inlined_call_operand.vmem [shape: f32[2,8,32], index: 0, kind: input, shape index: {}]
  %s1 = inlined_call_operand.vmem [shape: f32[2,8,32], index: 1, kind: input, shape index: {}]
  %s2 = inlined_call_operand.vmem [shape: f32[2,1,32], index: 2, kind: input, shape index: {}]
  %s3 = inlined_call_operand.vmem [shape: f32[2,1,8], index: 3, kind: input, shape index: {}]
  %s4 = inlined_call_operand.vmem [shape: f32[2,1,8], index: 4, kind: input, shape index: {}]
  %s5 = inlined_call_operand.hbm [shape: f32[2,32,384], index: 5, kind: input, shape index: {}]
  %s6 = inlined_call_operand.vmem [shape: f32[2,16,128], index: 6, kind: input, shape index: {}]
  %s7 = inlined_call_operand.hbm [shape: f32[2,8,32], index: 7, kind: output, shape index: {0}]
  %s8 = inlined_call_operand.vmem [shape: f32[2,2,8,8], index: 8, kind: output, shape index: {1}]
  %s9 = inlined_call_operand.vmem [shape: f32[2,2,8,8], index: 9, kind: output, shape index: {2}]
  %10 = xla_tuple %s7, %s8, %s9
  %s11 = sld [smem:[#allocation0]]
  $region89: #{_paired_transformer_encoder.1} parent=0
    _
  %s13 = ssub.s32 1, %s11
  %s14 = scalar_select 0, %s13, %s11
  $region1: #{_paired_transformer_encoder.1} parent=0
    #allocation3 [shape = 'u8[98304]{0}', space=vmem, size = 0x18000, scoped, tag = 'input window, operand 5']
    #allocation4 [shape = 's32[2]{0}', space=sflag, size = 0x8, scoped, tag = 'scoped memory for _paired_transformer_encoder.1']
    #allocation5 [shape = 's32[2]{0}', space=sflag, size = 0x8, scoped, tag = 'scoped memory for _paired_transformer_encoder.1']
    #allocation6 [shape = 'u8[8192]{0}', space=vmem, size = 0x2000, scoped, tag = 'output window, operand 0']
    %15 = vsyncpa [#allocation4], 0
    %s16 = scalar_lea.sflag [#allocation4], 1
    %17 = vsyncpa %s16, 0
    %18 = vsyncpa [#allocation5], 0
    %s19 = scalar_lea.sflag [#allocation5], 1
    %20 = vsyncpa %s19, 0
    loop: start=0, step=1, limit=6
    $region2: #{_paired_transformer_encoder.1} parent=1 // loop_pre_header
      _
    $region3: #{_paired_transformer_encoder.1} parent=1 // loop_header
      %s22 = sphi 0, %s26
      %p23 = scmp.ge.s32.totalorder %s22, 6
      %s29 = sphi 0, %s41
      %s30 = sphi 0, %s37
      %s31 = sphi 0, %s29
      %s32 = sphi 0, %s30
      %s33 = sphi 0, %s31
      %s34 = sphi 0, %s32
      %s44 = sphi 0, %s46
      %s47 = sphi 0, %s44
      %s48 = sphi 0, %s47
      %s64 = sphi 0, %s48
      %s70 = sphi 0, %s72
      %s73 = sphi 0, %s70
      %s74 = sphi 0, %s73
      %s90 = sphi 0, %s74
      %s96 = sphi 0, %s98
      %s99 = sphi 0, %s96
      %s100 = sphi 0, %s99
      %s116 = sphi 0, %s100
      %s122 = sphi 0, %s124
      %s125 = sphi 0, %s122
      %s126 = sphi 0, %s125
      %s142 = sphi 0, %s126
      %s148 = sphi 0, %s150
      %s151 = sphi 0, %s148
      %s152 = sphi 0, %s151
      %s168 = sphi 0, %s152
      %s174 = sphi 0, %s176
      %s177 = sphi 0, %s174
      %s178 = sphi 0, %s177
      %s194 = sphi 0, %s178
      %s200 = sphi 0, %s202
      %s203 = sphi 0, %s200
      %s204 = sphi 0, %s203
      %s220 = sphi 0, %s204
      %s226 = sphi 0, %s228
      %s229 = sphi 0, %s226
      %s230 = sphi 0, %s229
      %s246 = sphi 0, %s230
      %s254 = sphi 0, %s256
      %s257 = sphi 0, %s254
      %s258 = sphi 0, %s257
      %s274 = sphi 0, %s258
      %s282 = sphi 0, %s284
      %s285 = sphi 0, %s282
      %s286 = sphi 0, %s285
      %s302 = sphi 0, %s286
    $region4: #{_paired_transformer_encoder.1} parent=1 // loop_header_branch
      %25 = sbr.rel (%p23) target = $region8
    $region5: #{_paired_transformer_encoder.1} parent=1 // loop_body
      %s27 = ssub.s32 %s22, 1
      %s28 = ssub.s32 %s22, 2
      %s35 = sadd.s32 1, %s30
      %p36 = scmp.ge.s32.totalorder %s35, 2
      %s37 = scalar_select %p36, 0, %s35
      %s38 = sadd.s32 1, %s29
      %s39 = scalar_select %p36, %s38, %s29
      %p40 = scmp.ge.s32.totalorder %s39, 2
      %s41 = scalar_select %p40, 0, %s39
      %s42 = ssub.s32 %s29, %s41
      %p43 = scmp.eq.s32.totalorder %s42, 0
      %s45 = sadd.s32 %s44, 1
      %s46 = scalar_select %p43, %s44, %s45
      %p49 = pneg %p43
      %p50 = scmp.eq.s32.totalorder %s22, 3
      %p51 = por %p49, %p50
      %p52 = scmp.ne.s32.totalorder %s44, %s47
      %p53 = scmp.eq.s32.totalorder %s22, 0
      %p54 = por %p52, %p53
      %p55 = scmp.ne.s32.totalorder %s44, %s47
      %p56 = scmp.eq.s32.totalorder %s27, 3
      %p57 = por %p55, %p56
      %p58 = scmp.ne.s32.totalorder %s47, %s48
      %p59 = scmp.eq.s32.totalorder %s27, 0
      %p60 = por %p58, %p59
      %p61 = scmp.ne.s32.totalorder %s47, %s48
      %p62 = scmp.eq.s32.totalorder %s28, 3
      %p63 = por %p61, %p62
      %p65 = scmp.ne.s32.totalorder %s48, %s64
      %p66 = scmp.eq.s32.totalorder %s28, 0
      %p67 = por %p65, %p66
      %s68 = ssub.s32 %s29, %s41
      %p69 = scmp.eq.s32.totalorder %s68, 0
      %s71 = sadd.s32 %s70, 1
      %s72 = scalar_select %p69, %s70, %s71
      %p75 = pneg %p69
      %p76 = scmp.eq.s32.totalorder %s22, 3
      %p77 = por %p75, %p76
      %p78 = scmp.ne.s32.totalorder %s70, %s73
      %p79 = scmp.eq.s32.totalorder %s22, 0
      %p80 = por %p78, %p79
      %p81 = scmp.ne.s32.totalorder %s70, %s73
      %p82 = scmp.eq.s32.totalorder %s27, 3
      %p83 = por %p81, %p82
      %p84 = scmp.ne.s32.totalorder %s73, %s74
      %p85 = scmp.eq.s32.totalorder %s27, 0
      %p86 = por %p84, %p85
      %p87 = scmp.ne.s32.totalorder %s73, %s74
      %p88 = scmp.eq.s32.totalorder %s28, 3
      %p89 = por %p87, %p88
      %p91 = scmp.ne.s32.totalorder %s74, %s90
      %p92 = scmp.eq.s32.totalorder %s28, 0
      %p93 = por %p91, %p92
      %s94 = ssub.s32 %s29, %s41
      %p95 = scmp.eq.s32.totalorder %s94, 0
      %s97 = sadd.s32 %s96, 1
      %s98 = scalar_select %p95, %s96, %s97
      %p101 = pneg %p95
      %p102 = scmp.eq.s32.totalorder %s22, 3
      %p103 = por %p101, %p102
      %p104 = scmp.ne.s32.totalorder %s96, %s99
      %p105 = scmp.eq.s32.totalorder %s22, 0
      %p106 = por %p104, %p105
      %p107 = scmp.ne.s32.totalorder %s96, %s99
      %p108 = scmp.eq.s32.totalorder %s27, 3
      %p109 = por %p107, %p108
      %p110 = scmp.ne.s32.totalorder %s99, %s100
      %p111 = scmp.eq.s32.totalorder %s27, 0
      %p112 = por %p110, %p111
      %p113 = scmp.ne.s32.totalorder %s99, %s100
      %p114 = scmp.eq.s32.totalorder %s28, 3
      %p115 = por %p113, %p114
      %p117 = scmp.ne.s32.totalorder %s100, %s116
      %p118 = scmp.eq.s32.totalorder %s28, 0
      %p119 = por %p117, %p118
      %s120 = ssub.s32 %s29, %s41
      %p121 = scmp.eq.s32.totalorder %s120, 0
      %s123 = sadd.s32 %s122, 1
      %s124 = scalar_select %p121, %s122, %s123
      %p127 = pneg %p121
      %p128 = scmp.eq.s32.totalorder %s22, 3
      %p129 = por %p127, %p128
      %p130 = scmp.ne.s32.totalorder %s122, %s125
      %p131 = scmp.eq.s32.totalorder %s22, 0
      %p132 = por %p130, %p131
      %p133 = scmp.ne.s32.totalorder %s122, %s125
      %p134 = scmp.eq.s32.totalorder %s27, 3
      %p135 = por %p133, %p134
      %p136 = scmp.ne.s32.totalorder %s125, %s126
      %p137 = scmp.eq.s32.totalorder %s27, 0
      %p138 = por %p136, %p137
      %p139 = scmp.ne.s32.totalorder %s125, %s126
      %p140 = scmp.eq.s32.totalorder %s28, 3
      %p141 = por %p139, %p140
      %p143 = scmp.ne.s32.totalorder %s126, %s142
      %p144 = scmp.eq.s32.totalorder %s28, 0
      %p145 = por %p143, %p144
      %s146 = ssub.s32 %s29, %s41
      %p147 = scmp.eq.s32.totalorder %s146, 0
      %s149 = sadd.s32 %s148, 1
      %s150 = scalar_select %p147, %s148, %s149
      %p153 = pneg %p147
      %p154 = scmp.eq.s32.totalorder %s22, 3
      %p155 = por %p153, %p154
      %p156 = scmp.ne.s32.totalorder %s148, %s151
      %p157 = scmp.eq.s32.totalorder %s22, 0
      %p158 = por %p156, %p157
      %p159 = scmp.ne.s32.totalorder %s148, %s151
      %p160 = scmp.eq.s32.totalorder %s27, 3
      %p161 = por %p159, %p160
      %p162 = scmp.ne.s32.totalorder %s151, %s152
      %p163 = scmp.eq.s32.totalorder %s27, 0
      %p164 = por %p162, %p163
      %p165 = scmp.ne.s32.totalorder %s151, %s152
      %p166 = scmp.eq.s32.totalorder %s28, 3
      %p167 = por %p165, %p166
      %p169 = scmp.ne.s32.totalorder %s152, %s168
      %p170 = scmp.eq.s32.totalorder %s28, 0
      %p171 = por %p169, %p170
      %s172 = ssub.s32 %s30, %s37
      %p173 = scmp.eq.s32.totalorder %s172, 0
      %s175 = sadd.s32 %s174, 1
      %s176 = scalar_select %p173, %s174, %s175
      %p179 = pneg %p173
      %p180 = scmp.eq.s32.totalorder %s22, 3
      %p181 = por %p179, %p180
      %p182 = scmp.ne.s32.totalorder %s174, %s177
      %p183 = scmp.eq.s32.totalorder %s22, 0
      %p184 = por %p182, %p183
      %p185 = scmp.ne.s32.totalorder %s174, %s177
      %p186 = scmp.eq.s32.totalorder %s27, 3
      %p187 = por %p185, %p186
      %p188 = scmp.ne.s32.totalorder %s177, %s178
      %p189 = scmp.eq.s32.totalorder %s27, 0
      %p190 = por %p188, %p189
      %p191 = scmp.ne.s32.totalorder %s177, %s178
      %p192 = scmp.eq.s32.totalorder %s28, 3
      %p193 = por %p191, %p192
      %p195 = scmp.ne.s32.totalorder %s178, %s194
      %p196 = scmp.eq.s32.totalorder %s28, 0
      %p197 = por %p195, %p196
      %s198 = ssub.s32 %s30, %s37
      %p199 = scmp.eq.s32.totalorder %s198, 0
      %s201 = sadd.s32 %s200, 1
      %s202 = scalar_select %p199, %s200, %s201
      %p205 = pneg %p199
      %p206 = scmp.eq.s32.totalorder %s22, 3
      %p207 = por %p205, %p206
      %p208 = scmp.ne.s32.totalorder %s200, %s203
      %p209 = scmp.eq.s32.totalorder %s22, 0
      %p210 = por %p208, %p209
      %p211 = scmp.ne.s32.totalorder %s200, %s203
      %p212 = scmp.eq.s32.totalorder %s27, 3
      %p213 = por %p211, %p212
      %p214 = scmp.ne.s32.totalorder %s203, %s204
      %p215 = scmp.eq.s32.totalorder %s27, 0
      %p216 = por %p214, %p215
      %p217 = scmp.ne.s32.totalorder %s203, %s204
      %p218 = scmp.eq.s32.totalorder %s28, 3
      %p219 = por %p217, %p218
      %p221 = scmp.ne.s32.totalorder %s204, %s220
      %p222 = scmp.eq.s32.totalorder %s28, 0
      %p223 = por %p221, %p222
      %s224 = ssub.s32 %s29, %s41
      %p225 = scmp.eq.s32.totalorder %s224, 0
      %s227 = sadd.s32 %s226, 1
      %s228 = scalar_select %p225, %s226, %s227
      %p231 = pneg %p225
      %p232 = scmp.eq.s32.totalorder %s22, 3
      %p233 = por %p231, %p232
      %p234 = scmp.ne.s32.totalorder %s226, %s229
      %p235 = scmp.eq.s32.totalorder %s22, 0
      %p236 = por %p234, %p235
      %p237 = scmp.ne.s32.totalorder %s226, %s229
      %p238 = scmp.eq.s32.totalorder %s27, 3
      %p239 = por %p237, %p238
      %p240 = scmp.ne.s32.totalorder %s229, %s230
      %p241 = scmp.eq.s32.totalorder %s27, 0
      %p242 = por %p240, %p241
      %p243 = scmp.ne.s32.totalorder %s229, %s230
      %p244 = scmp.eq.s32.totalorder %s28, 3
      %p245 = por %p243, %p244
      %p247 = scmp.ne.s32.totalorder %s230, %s246
      %p248 = scmp.eq.s32.totalorder %s28, 0
      %p249 = por %p247, %p248
      %s250 = ssub.s32 %s29, %s41
      %s251 = ssub.s32 %s30, %s37
      %s252 = sor.u32 %s250, %s251
      %p253 = scmp.eq.s32.totalorder %s252, 0
      %s255 = sadd.s32 %s254, 1
      %s256 = scalar_select %p253, %s254, %s255
      %p259 = pneg %p253
      %p260 = scmp.eq.s32.totalorder %s22, 3
      %p261 = por %p259, %p260
      %p262 = scmp.ne.s32.totalorder %s254, %s257
      %p263 = scmp.eq.s32.totalorder %s22, 0
      %p264 = por %p262, %p263
      %p265 = scmp.ne.s32.totalorder %s254, %s257
      %p266 = scmp.eq.s32.totalorder %s27, 3
      %p267 = por %p265, %p266
      %p268 = scmp.ne.s32.totalorder %s257, %s258
      %p269 = scmp.eq.s32.totalorder %s27, 0
      %p270 = por %p268, %p269
      %p271 = scmp.ne.s32.totalorder %s257, %s258
      %p272 = scmp.eq.s32.totalorder %s28, 3
      %p273 = por %p271, %p272
      %p275 = scmp.ne.s32.totalorder %s258, %s274
      %p276 = scmp.eq.s32.totalorder %s28, 0
      %p277 = por %p275, %p276
      %s278 = ssub.s32 %s29, %s41
      %s279 = ssub.s32 %s30, %s37
      %s280 = sor.u32 %s278, %s279
      %p281 = scmp.eq.s32.totalorder %s280, 0
      %s283 = sadd.s32 %s282, 1
      %s284 = scalar_select %p281, %s282, %s283
      %p287 = pneg %p281
      %p288 = scmp.eq.s32.totalorder %s22, 3
      %p289 = por %p287, %p288
      %p290 = scmp.ne.s32.totalorder %s282, %s285
      %p291 = scmp.eq.s32.totalorder %s22, 0
      %p292 = por %p290, %p291
      %p293 = scmp.ne.s32.totalorder %s282, %s285
      %p294 = scmp.eq.s32.totalorder %s27, 3
      %p295 = por %p293, %p294
      %p296 = scmp.ne.s32.totalorder %s285, %s286
      %p297 = scmp.eq.s32.totalorder %s27, 0
      %p298 = por %p296, %p297
      %p299 = scmp.ne.s32.totalorder %s285, %s286
      %p300 = scmp.eq.s32.totalorder %s28, 3
      %p301 = por %p299, %p300
      %p303 = scmp.ne.s32.totalorder %s286, %s302
      %p304 = scmp.eq.s32.totalorder %s28, 0
      %p305 = por %p303, %p304
      %p306 = scmp.le.s32.totalorder 1, %s22
      %p307 = scmp.lt.s32.totalorder %s22, 5
      %p308 = pnand %p306, %p307
      %p309 = pneg %p308
      // Predicated region
      $region9: #{_paired_transformer_encoder.1} parent=5 // pred_check
        _
      $region10: #{_paired_transformer_encoder.1} parent=5 // pred_check_branch
        %311 = sbr.rel (%p308) target = $region12
      $region11: #{_paired_transformer_encoder.1} parent=5 // pred_region
        %s312 = ssub.s32 %s22, 1
      $region12: #{_paired_transformer_encoder.1} parent=5 // pred_fallthru
        _
      %p313 = scmp.lt.s32.totalorder %s22, 4
      // Predicated region
      $region13: #{_paired_transformer_encoder.1} parent=5 // pred_check
        %p314 = pneg %p313
      $region14: #{_paired_transformer_encoder.1} parent=5 // pred_check_branch
        %316 = sbr.rel (%p314) target = $region16
      $region15: #{_paired_transformer_encoder.1} parent=5 // pred_region
        // Predicated region
        $region17: #{_paired_transformer_encoder.1} parent=15 // pred_check
          %p317 = pneg %p54
        $region18: #{_paired_transformer_encoder.1} parent=15 // pred_check_branch
          %319 = sbr.rel (%p317) target = $region20
        $region19: #{_paired_transformer_encoder.1} parent=15 // pred_region
          %p320 = scmp.lt.s32.totalorder %s29, 1
          %s321 = scalar_select %p320, %s29, 1
          %s322 = smul.addr %s321, 8
          %s323 = scalar_lea.vmem %s0, %s322
        $region20: #{_paired_transformer_encoder.1} parent=15 // pred_fallthru
          _
        // Predicated region
        $region21: #{_paired_transformer_encoder.1} parent=15 // pred_check
          %p324 = pneg %p80
        $region22: #{_paired_transformer_encoder.1} parent=15 // pred_check_branch
          %326 = sbr.rel (%p324) target = $region24
        $region23: #{_paired_transformer_encoder.1} parent=15 // pred_region
          %p327 = scmp.lt.s32.totalorder %s29, 1
          %s328 = scalar_select %p327, %s29, 1
          %s329 = smul.addr %s328, 8
          %s330 = scalar_lea.vmem %s1, %s329
        $region24: #{_paired_transformer_encoder.1} parent=15 // pred_fallthru
          _
        // Predicated region
        $region25: #{_paired_transformer_encoder.1} parent=15 // pred_check
          %p331 = pneg %p106
        $region26: #{_paired_transformer_encoder.1} parent=15 // pred_check_branch
          %333 = sbr.rel (%p331) target = $region28
        $region27: #{_paired_transformer_encoder.1} parent=15 // pred_region
          %p334 = scmp.lt.s32.totalorder %s29, 1
          %s335 = scalar_select %p334, %s29, 1
          %s336 = scalar_lea.vmem %s2, %s335
        $region28: #{_paired_transformer_encoder.1} parent=15 // pred_fallthru
          _
        // Predicated region
        $region29: #{_paired_transformer_encoder.1} parent=15 // pred_check
          %p337 = pneg %p132
        $region30: #{_paired_transformer_encoder.1} parent=15 // pred_check_branch
          %339 = sbr.rel (%p337) target = $region32
        $region31: #{_paired_transformer_encoder.1} parent=15 // pred_region
          %p340 = scmp.lt.s32.totalorder %s29, 1
          %s341 = scalar_select %p340, %s29, 1
          %s342 = scalar_lea.vmem %s3, %s341
        $region32: #{_paired_transformer_encoder.1} parent=15 // pred_fallthru
          _
        // Predicated region
        $region33: #{_paired_transformer_encoder.1} parent=15 // pred_check
          %p343 = pneg %p158
        $region34: #{_paired_transformer_encoder.1} parent=15 // pred_check_branch
          %345 = sbr.rel (%p343) target = $region36
        $region35: #{_paired_transformer_encoder.1} parent=15 // pred_region
          %p346 = scmp.lt.s32.totalorder %s29, 1
          %s347 = scalar_select %p346, %s29, 1
          %s348 = scalar_lea.vmem %s4, %s347
        $region36: #{_paired_transformer_encoder.1} parent=15 // pred_fallthru
          _
        // Predicated region
        $region37: #{_paired_transformer_encoder.1} parent=15 // pred_check
          %p349 = pneg %p184
        $region38: #{_paired_transformer_encoder.1} parent=15 // pred_check_branch
          %351 = sbr.rel (%p349) target = $region40
        $region39: #{_paired_transformer_encoder.1} parent=15 // pred_region
          %s352 = sand.u32 %s174, 1
          %s353 = scalar_lea.sflag [#allocation4], %s352
          %s354 = sand.u32 %s174, 1
          %s355 = smul.addr %s354, 96
          %s356 = scalar_lea.vmem [#allocation3], %s355
          %s358 = ssub.s32 1536, 1536
          %359 = vsyncadd %s353, %s358
          %s360 = smul.addr %s30, 12
          %s361 = smul.addr %s360, 128
          %s362 = scalar_lea.hbm %s5, %s361
          %s363 = sshll.u32 %s356, 4
          %s364 = int_to_ptr.vmem [resolvable:$true] %s363
          %369 = dma.hbm_to_vmem [thread:$0]  %s362, 1536, %s364, %s353, 384, 384, 24
        $region40: #{_paired_transformer_encoder.1} parent=15 // pred_fallthru
          _
        // Predicated region
        $region41: #{_paired_transformer_encoder.1} parent=15 // pred_check
          %p370 = pneg %p210
        $region42: #{_paired_transformer_encoder.1} parent=15 // pred_check_branch
          %372 = sbr.rel (%p370) target = $region44
        $region43: #{_paired_transformer_encoder.1} parent=15 // pred_region
          %p373 = scmp.lt.s32.totalorder %s30, 1
          %s374 = scalar_select %p373, %s30, 1
          %s375 = smul.addr %s374, 2
          %s376 = smul.addr %s375, 8
          %s377 = scalar_lea.vmem %s6, %s376
        $region44: #{_paired_transformer_encoder.1} parent=15 // pred_fallthru
          _
      $region16: #{_paired_transformer_encoder.1} parent=5 // pred_fallthru
        _
      %p378 = scmp.le.s32.totalorder 1, %s22
      %p379 = scmp.lt.s32.totalorder %s22, 5
      %p380 = pnand %p378, %p379
      %p381 = pneg %p380
      // Predicated region
      $region45: #{_paired_transformer_encoder.1} parent=5 // pred_check
        _
      $region46: #{_paired_transformer_encoder.1} parent=5 // pred_check_branch
        %383 = sbr.rel (%p380) target = $region48
      $region47: #{_paired_transformer_encoder.1} parent=5 // pred_region
        %s384 = ssub.s32 %s22, 1
        %s385 = sand.u32 %s177, 1
        %s386 = scalar_lea.sflag [#allocation4], %s385
        %s387 = sand.u32 %s177, 1
        %s388 = smul.addr %s387, 96
        %s389 = scalar_lea.vmem [#allocation3], %s388
        // Predicated region
        $region49: #{_paired_transformer_encoder.1} parent=47 // pred_check
          %p390 = pneg %p190
        $region50: #{_paired_transformer_encoder.1} parent=47 // pred_check_branch
          %392 = sbr.rel (%p390) target = $region52
        $region51: #{_paired_transformer_encoder.1} parent=47 // pred_region
          %393 = dma.done %s386, 1536
        $region52: #{_paired_transformer_encoder.1} parent=47 // pred_fallthru
          _
        %p394 = scmp.lt.s32.totalorder %s31, 1
        %s395 = scalar_select %p394, %s31, 1
        %s396 = smul.addr %s395, 8
        %s397 = scalar_lea.vmem %s0, %s396
        %p398 = pneg %p60
        %p399 = pneg %p57
        %p400 = scmp.lt.s32.totalorder %s31, 1
        %s401 = scalar_select %p400, %s31, 1
        %s402 = smul.addr %s401, 8
        %s403 = scalar_lea.vmem %s1, %s402
        %p404 = pneg %p86
        %p405 = pneg %p83
        %p406 = scmp.lt.s32.totalorder %s31, 1
        %s407 = scalar_select %p406, %s31, 1
        %s408 = scalar_lea.vmem %s2, %s407
        %p409 = pneg %p112
        %p410 = pneg %p109
        %p411 = scmp.lt.s32.totalorder %s31, 1
        %s412 = scalar_select %p411, %s31, 1
        %s413 = scalar_lea.vmem %s3, %s412
        %p414 = pneg %p138
        %p415 = pneg %p135
        %p416 = scmp.lt.s32.totalorder %s31, 1
        %s417 = scalar_select %p416, %s31, 1
        %s418 = scalar_lea.vmem %s4, %s417
        %p419 = pneg %p164
        %p420 = pneg %p161
        %s421 = sand.u32 %s177, 1
        %s422 = scalar_lea.sflag [#allocation4], %s421
        %s423 = sand.u32 %s177, 1
        %s424 = smul.addr %s423, 96
        %s425 = scalar_lea.vmem [#allocation3], %s424
        %p426 = pneg %p190
        %p427 = pneg %p187
        %p428 = scmp.lt.s32.totalorder %s32, 1
        %s429 = scalar_select %p428, %s32, 1
        %s430 = smul.addr %s429, 2
        %s431 = smul.addr %s430, 8
        %s432 = scalar_lea.vmem %s6, %s431
        %p433 = pneg %p216
        %p434 = pneg %p213
        %p435 = pneg %p242
        %p436 = pneg %p239
        %s437 = sand.u32 %s229, 1
        %s438 = scalar_lea.sflag [#allocation5], %s437
        %s439 = sand.u32 %s229, 1
        %s440 = smul.addr %s439, 8
        %s441 = scalar_lea.vmem [#allocation6], %s440
        %p442 = pneg %p270
        %p443 = pneg %p267
        %p444 = scmp.lt.s32.totalorder %s31, 1
        %s445 = scalar_select %p444, %s31, 1
        %p446 = scmp.lt.s32.totalorder %s32, 1
        %s447 = scalar_select %p446, %s32, 1
        %s448 = smul.addr %s445, 2
        %s449 = sadd.s32 %s447, %s448
        %s450 = smul.addr %s449, 8
        %s451 = scalar_lea.vmem %s8, %s450
        %p452 = pneg %p298
        %p453 = pneg %p295
        %p454 = scmp.lt.s32.totalorder %s31, 1
        %s455 = scalar_select %p454, %s31, 1
        %p456 = scmp.lt.s32.totalorder %s32, 1
        %s457 = scalar_select %p456, %s32, 1
        %s458 = smul.addr %s455, 2
        %s459 = sadd.s32 %s457, %s458
        %s460 = smul.addr %s459, 8
        %s461 = scalar_lea.vmem %s9, %s460
        %p462 = scmp.lt.s32.totalorder %s31, 1
        %s463 = scalar_select %p462, %s31, 1
        %s464 = smul.addr %s463, 8
        %s465 = scalar_lea.vmem %s0, %s464
        %p466 = scmp.lt.s32.totalorder %s31, 1
        %s467 = scalar_select %p466, %s31, 1
        %s468 = smul.addr %s467, 8
        %s469 = scalar_lea.vmem %s1, %s468
        %p470 = scmp.lt.s32.totalorder %s31, 1
        %s471 = scalar_select %p470, %s31, 1
        %s472 = scalar_lea.vmem %s2, %s471
        %p473 = scmp.lt.s32.totalorder %s31, 1
        %s474 = scalar_select %p473, %s31, 1
        %s475 = scalar_lea.vmem %s3, %s474
        %p476 = scmp.lt.s32.totalorder %s31, 1
        %s477 = scalar_select %p476, %s31, 1
        %s478 = scalar_lea.vmem %s4, %s477
        %p479 = scmp.lt.s32.totalorder %s32, 1
        %s480 = scalar_select %p479, %s32, 1
        %s481 = smul.addr %s480, 2
        %s482 = smul.addr %s481, 8
        %s483 = scalar_lea.vmem %s6, %s482
        %p484 = scmp.lt.s32.totalorder %s31, 1
        %s485 = scalar_select %p484, %s31, 1
        %p486 = scmp.lt.s32.totalorder %s32, 1
        %s487 = scalar_select %p486, %s32, 1
        %s488 = smul.addr %s485, 2
        %s489 = sadd.s32 %s487, %s488
        %s490 = smul.addr %s489, 8
        %s491 = scalar_lea.vmem %s8, %s490
        %p492 = scmp.lt.s32.totalorder %s31, 1
        %s493 = scalar_select %p492, %s31, 1
        %p494 = scmp.lt.s32.totalorder %s32, 1
        %s495 = scalar_select %p494, %s32, 1
        %s496 = smul.addr %s493, 2
        %s497 = sadd.s32 %s495, %s496
        %s498 = smul.addr %s497, 8
        %s499 = scalar_lea.vmem %s9, %s498
        %p500 = scmp.eq.s32.totalorder %s32, 0
        // Predicated region
        $region53: #{_paired_transformer_encoder.1} parent=47 // pred_check
          %p501 = pneg %p500
        $region54: #{_paired_transformer_encoder.1} parent=47 // pred_check_branch
          %503 = sbr.rel (%p501) target = $region56
        $region55: #{_paired_transformer_encoder.1} parent=47 // pred_region
          %v504 = vld [vmem:[%s465] sm:$0xff]
          %vm505 = vcmask 261120
          %506 = vst.msk [vmem:[#allocation2] sm:$0xff] %vm505, %v504
        $region56: #{_paired_transformer_encoder.1} parent=47 // pred_fallthru
          _
        %v507 = vld [vmem:[#allocation2] sm:$0xff]
        %v508 = vld [vmem:[%s469] sm:$0xff]
        %v509 = vld [vmem:[%s389] sm:$0xff]
        %v510 = vld [vmem:[%s389 + $0x8] sm:$0xff]
        %v511 = vld [vmem:[%s389 + $0x10] sm:$0xff]
        %v512 = vld [vmem:[%s389 + $0x18] sm:$0xff]
        %v513 = vld [vmem:[%s389 + $0x20] sm:$0xff]
        %v514 = vld [vmem:[%s389 + $0x28] sm:$0xff]
        %v515 = vld [vmem:[%s389 + $0x30] sm:$0xff]
        %v516 = vld [vmem:[%s389 + $0x38] sm:$0xff]
        %v517 = vld [vmem:[%s389 + $0x40] sm:$0xff]
        %v518 = vld [vmem:[%s389 + $0x48] sm:$0xff]
        %v519 = vld [vmem:[%s389 + $0x50] sm:$0xff]
        %v520 = vld [vmem:[%s389 + $0x58] sm:$0xff]
        %v521 = vld [vmem:[%s483] sm:$0xff]
        %v522 = vld [vmem:[%s483 + $0x8] sm:$0xff]
        %v523 = vlaneseq
        %v524 = vshrl.u32 %v523, 7
        %v525 = vsub.s32 0, %v524
        %v526 = vrot.slane %v521, %v525
        %vm527 = vcmask 261120
        %v529 = vsel %vm527, %v507, 0
        %531 = vmatprep.subr.mxu0 0.0
        %532 = vmatpush1.msra.mxu0 %v509
        %533 = vmatprep.subr.mxu0 0.0
        %534 = vmatpush1.msra.mxu0 %v512
        %535 = vmatprep.subr.mxu0 0.0
        %536 = vmatpush1.msra.mxu0 %v515
        %537 = vmatprep.subr.mxu0 0.0
        %538 = vmatpush1.msra.mxu0 %v518
        %539 = vmatprep.subr.mxu0 0.0
        %540 = vmatpush1.msra.mxu0 0.0
        %541 = vmatprep.subr.mxu0 0.0
        %542 = vmatpush1.msra.mxu0 0.0
        %543 = vmatprep.subr.mxu0 0.0
        %544 = vmatpush1.msra.mxu0 0.0
        %545 = vmatprep.subr.mxu0 0.0
        %546 = vmatpush1.msra.mxu0 0.0
        %547 = vmatprep.subr.mxu0 0.0
        %548 = vmatpush1.msra.mxu0 0.0
        %549 = vmatprep.subr.mxu0 0.0
        %550 = vmatpush1.msra.mxu0 0.0
        %551 = vmatprep.subr.mxu0 0.0
        %552 = vmatpush1.msra.mxu0 0.0
        %553 = vmatprep.subr.mxu0 0.0
        %554 = vmatpush1.msra.mxu0 0.0
        %555 = vmatprep.subr.mxu0 0.0
        %556 = vmatpush1.msra.mxu0 0.0
        %557 = vmatprep.subr.mxu0 0.0
        %558 = vmatpush1.msra.mxu0 0.0
        %559 = vmatprep.subr.mxu0 0.0
        %560 = vmatpush1.msra.mxu0 0.0
        %561 = vmatprep.subr.mxu0 0.0
        %562 = vmatpush1.msra.mxu0 0.0
        %563 = vmatprep.subr.mxu0 0.0
        %564 = vmatpush1.msra.mxu0 0.0
        %565 = vmatprep.subr.mxu0 0.0
        %566 = vmatpush1.msra.mxu0 0.0
        %567 = vmatprep.subr.mxu0 0.0
        %568 = vmatpush1.msra.mxu0 0.0
        %569 = vmatprep.subr.mxu0 0.0
        %570 = vmatpush1.msra.mxu0 0.0
        %571 = vmatprep.subr.mxu0 0.0
        %572 = vmatpush1.msra.mxu0 0.0
        %573 = vmatprep.subr.mxu0 0.0
        %574 = vmatpush1.msra.mxu0 0.0
        %575 = vmatprep.subr.mxu0 0.0
        %576 = vmatpush1.msra.mxu0 0.0
        %577 = vmatprep.subr.mxu0 0.0
        %578 = vmatpush1.msra.mxu0 0.0
        %579 = vmatprep.subr.mxu0 0.0
        %580 = vmatpush1.msra.mxu0 0.0
        %581 = vmatprep.subr.mxu0 0.0
        %582 = vmatpush1.msra.mxu0 0.0
        %583 = vmatprep.subr.mxu0 0.0
        %584 = vmatpush1.msra.mxu0 0.0
        %585 = vmatprep.subr.mxu0 0.0
        %586 = vmatpush1.msra.mxu0 0.0
        %587 = vmatprep.subr.mxu0 0.0
        %588 = vmatpush1.msra.mxu0 0.0
        %589 = vmatprep.subr.mxu0 0.0
        %590 = vmatpush1.msra.mxu0 0.0
        %591 = vmatprep.subr.mxu0 0.0
        %592 = vmatpush1.msra.mxu0 0.0
        %593 = vmatprep.subr.mxu0 0.0
        %594 = vmatpush1.msra.mxu0 0.0
        %595 = vmatprep.mubr.f32.mxu0 0.0
        %596 = vmatmul.mubr.f32.gmra.mrb[0].mxu0 %v529
        %v597 = vpop.f32.mrb[0].mxu0
        %v598 = vadd.f32 %v526, %v597
        %v599 = vpop.f32.mrb[0].mxu0
        %600 = vdwg.mxu0
        %v601 = vld [vmem:[%s475] sm:$0x1]
        %603 = vrot.lane.b32.xlu0 %v598, 96
        %v604 = vpop.permute.xlu0 %603
        %vm605 = vcmask 64512
        %v606 = vsel %vm605, %v598, 0
        %v608 = vsel %vm605, %v604, 0
        %610 = vmatprep.subr.mxu0 0.0
        %611 = vmatpush1.xpose.msra.mxu0 %v608
        %612 = vmatprep.subr.mxu0 0.0
        %613 = vmatpush1.xpose.msra.mxu0 0.0
        %614 = vmatprep.subr.mxu0 0.0
        %615 = vmatpush1.xpose.msra.mxu0 0.0
        %616 = vmatprep.subr.mxu0 0.0
        %617 = vmatpush1.xpose.msra.mxu0 0.0
        %618 = vmatprep.subr.mxu0 0.0
        %619 = vmatpush1.xpose.msra.mxu0 0.0
        %620 = vmatprep.subr.mxu0 0.0
        %621 = vmatpush1.xpose.msra.mxu0 0.0
        %622 = vmatprep.subr.mxu0 0.0
        %623 = vmatpush1.xpose.msra.mxu0 0.0
        %624 = vmatprep.subr.mxu0 0.0
        %625 = vmatpush1.xpose.msra.mxu0 0.0
        %626 = vmatprep.subr.mxu0 0.0
        %627 = vmatpush1.xpose.msra.mxu0 0.0
        %628 = vmatprep.subr.mxu0 0.0
        %629 = vmatpush1.xpose.msra.mxu0 0.0
        %630 = vmatprep.subr.mxu0 0.0
        %631 = vmatpush1.xpose.msra.mxu0 0.0
        %632 = vmatprep.subr.mxu0 0.0
        %633 = vmatpush1.xpose.msra.mxu0 0.0
        %634 = vmatprep.subr.mxu0 0.0
        %635 = vmatpush1.xpose.msra.mxu0 0.0
        %636 = vmatprep.subr.mxu0 0.0
        %637 = vmatpush1.xpose.msra.mxu0 0.0
        %638 = vmatprep.subr.mxu0 0.0
        %639 = vmatpush1.xpose.msra.mxu0 0.0
        %640 = vmatprep.subr.mxu0 0.0
        %641 = vmatpush1.xpose.msra.mxu0 0.0
        %642 = vmatprep.subr.mxu0 0.0
        %643 = vmatpush1.xpose.msra.mxu0 0.0
        %644 = vmatprep.subr.mxu0 0.0
        %645 = vmatpush1.xpose.msra.mxu0 0.0
        %646 = vmatprep.subr.mxu0 0.0
        %647 = vmatpush1.xpose.msra.mxu0 0.0
        %648 = vmatprep.subr.mxu0 0.0
        %649 = vmatpush1.xpose.msra.mxu0 0.0
        %650 = vmatprep.subr.mxu0 0.0
        %651 = vmatpush1.xpose.msra.mxu0 0.0
        %652 = vmatprep.subr.mxu0 0.0
        %653 = vmatpush1.xpose.msra.mxu0 0.0
        %654 = vmatprep.subr.mxu0 0.0
        %655 = vmatpush1.xpose.msra.mxu0 0.0
        %656 = vmatprep.subr.mxu0 0.0
        %657 = vmatpush1.xpose.msra.mxu0 0.0
        %658 = vmatprep.subr.mxu0 0.0
        %659 = vmatpush1.xpose.msra.mxu0 0.0
        %660 = vmatprep.subr.mxu0 0.0
        %661 = vmatpush1.xpose.msra.mxu0 0.0
        %662 = vmatprep.subr.mxu0 0.0
        %663 = vmatpush1.xpose.msra.mxu0 0.0
        %664 = vmatprep.subr.mxu0 0.0
        %665 = vmatpush1.xpose.msra.mxu0 0.0
        %666 = vmatprep.subr.mxu0 0.0
        %667 = vmatpush1.xpose.msra.mxu0 0.0
        %668 = vmatprep.subr.mxu0 0.0
        %669 = vmatpush1.xpose.msra.mxu0 0.0
        %670 = vmatprep.subr.mxu0 0.0
        %671 = vmatpush1.xpose.msra.mxu0 0.0
        %672 = vmatprep.subr.mxu0 0.0
        %673 = vmatpush1.xpose.msra.mxu0 0.0
        %674 = vmatprep.mubr.f32.mxu0 0.0
        %675 = vmatmul.mubr.f32.gmra.mrb[0].mxu0 %v606
        %v676 = vpop.f32.mrb[0].mxu0
        %v677 = vadd.f32 0.0, %v676
        %v678 = vpop.f32.mrb[0].mxu0
        %679 = vdwg.mxu0
        %v680 = vmul.f32 %v677, 0.35355338
        %v682 = vlaneseq
        %v683 = vshrl.u32 %v682, 7
        %v684 = vsub.s32 0, %v683
        %v685 = vrot.slane %v601, %v684
        %v687 = vadd.f32 %v680, %v685
        %v688 = vsel %vm605, %v687, -inf
        %689 = vmax.xlane.f32.xlu0 %v688
        %v690 = vpop.xlane.xlu0 %689
        %v691 = vsub.f32 %v687, %v690
        %v692 = vmul.f32 %v691, 1.442695
        %v693 = vpow.pop %v692
        %v694 = vsel %vm605, %v693, 0.0
        %695 = vadd.xlane.f32.xlu0 %v694
        %v696 = vpop.xlane.xlu0 %695
        %v697 = vrcp.pop %v696
        %v698 = vmul.f32 %v693, %v697
        %v699 = vadd.f32 %v698, 0.0
        %700 = vrot.lane.b32.xlu0 %v598, 64
        %v701 = vpop.permute.xlu0 %700
        %v704 = vsel %vm605, %v698, 0
        %706 = vmatprep.subr.mxu0 0.0
        %707 = vmatpush1.msra.mxu0 %v701
        %708 = vmatprep.subr.mxu0 0.0
        %709 = vmatpush1.msra.mxu0 0.0
        %710 = vmatprep.subr.mxu0 0.0
        %711 = vmatpush1.msra.mxu0 0.0
        %712 = vmatprep.subr.mxu0 0.0
        %713 = vmatpush1.msra.mxu0 0.0
        %714 = vmatprep.subr.mxu0 0.0
        %715 = vmatpush1.msra.mxu0 0.0
        %716 = vmatprep.subr.mxu0 0.0
        %717 = vmatpush1.msra.mxu0 0.0
        %718 = vmatprep.subr.mxu0 0.0
        %719 = vmatpush1.msra.mxu0 0.0
        %720 = vmatprep.subr.mxu0 0.0
        %721 = vmatpush1.msra.mxu0 0.0
        %722 = vmatprep.subr.mxu0 0.0
        %723 = vmatpush1.msra.mxu0 0.0
        %724 = vmatprep.subr.mxu0 0.0
        %725 = vmatpush1.msra.mxu0 0.0
        %726 = vmatprep.subr.mxu0 0.0
        %727 = vmatpush1.msra.mxu0 0.0
        %728 = vmatprep.subr.mxu0 0.0
        %729 = vmatpush1.msra.mxu0 0.0
        %730 = vmatprep.subr.mxu0 0.0
        %731 = vmatpush1.msra.mxu0 0.0
        %732 = vmatprep.subr.mxu0 0.0
        %733 = vmatpush1.msra.mxu0 0.0
        %734 = vmatprep.subr.mxu0 0.0
        %735 = vmatpush1.msra.mxu0 0.0
        %736 = vmatprep.subr.mxu0 0.0
        %737 = vmatpush1.msra.mxu0 0.0
        %738 = vmatprep.subr.mxu0 0.0
        %739 = vmatpush1.msra.mxu0 0.0
        %740 = vmatprep.subr.mxu0 0.0
        %741 = vmatpush1.msra.mxu0 0.0
        %742 = vmatprep.subr.mxu0 0.0
        %743 = vmatpush1.msra.mxu0 0.0
        %744 = vmatprep.subr.mxu0 0.0
        %745 = vmatpush1.msra.mxu0 0.0
        %746 = vmatprep.subr.mxu0 0.0
        %747 = vmatpush1.msra.mxu0 0.0
        %748 = vmatprep.subr.mxu0 0.0
        %749 = vmatpush1.msra.mxu0 0.0
        %750 = vmatprep.subr.mxu0 0.0
        %751 = vmatpush1.msra.mxu0 0.0
        %752 = vmatprep.subr.mxu0 0.0
        %753 = vmatpush1.msra.mxu0 0.0
        %754 = vmatprep.subr.mxu0 0.0
        %755 = vmatpush1.msra.mxu0 0.0
        %756 = vmatprep.subr.mxu0 0.0
        %757 = vmatpush1.msra.mxu0 0.0
        %758 = vmatprep.subr.mxu0 0.0
        %759 = vmatpush1.msra.mxu0 0.0
        %760 = vmatprep.subr.mxu0 0.0
        %761 = vmatpush1.msra.mxu0 0.0
        %762 = vmatprep.subr.mxu0 0.0
        %763 = vmatpush1.msra.mxu0 0.0
        %764 = vmatprep.subr.mxu0 0.0
        %765 = vmatpush1.msra.mxu0 0.0
        %766 = vmatprep.subr.mxu0 0.0
        %767 = vmatpush1.msra.mxu0 0.0
        %768 = vmatprep.subr.mxu0 0.0
        %769 = vmatpush1.msra.mxu0 0.0
        %770 = vmatprep.mubr.f32.mxu0 0.0
        %771 = vmatmul.mubr.f32.gmra.mrb[0].mxu0 %v704
        %v772 = vpop.f32.mrb[0].mxu0
        %v773 = vadd.f32 0.0, %v772
        %v774 = vpop.f32.mrb[0].mxu0
        %775 = vdwg.mxu0
        %776 = vrot.lane.b32.xlu0 %v598, 120
        %v777 = vpop.permute.xlu0 %776
        %778 = vrot.lane.b32.xlu0 %v598, 88
        %v779 = vpop.permute.xlu0 %778
        %v780 = vsel %vm605, %v777, 0
        %v782 = vsel %vm605, %v779, 0
        %784 = vmatprep.subr.mxu0 0.0
        %785 = vmatpush1.xpose.msra.mxu0 %v782
        %786 = vmatprep.subr.mxu0 0.0
        %787 = vmatpush1.xpose.msra.mxu0 0.0
        %788 = vmatprep.subr.mxu0 0.0
        %789 = vmatpush1.xpose.msra.mxu0 0.0
        %790 = vmatprep.subr.mxu0 0.0
        %791 = vmatpush1.xpose.msra.mxu0 0.0
        %792 = vmatprep.subr.mxu0 0.0
        %793 = vmatpush1.xpose.msra.mxu0 0.0
        %794 = vmatprep.subr.mxu0 0.0
        %795 = vmatpush1.xpose.msra.mxu0 0.0
        %796 = vmatprep.subr.mxu0 0.0
        %797 = vmatpush1.xpose.msra.mxu0 0.0
        %798 = vmatprep.subr.mxu0 0.0
        %799 = vmatpush1.xpose.msra.mxu0 0.0
        %800 = vmatprep.subr.mxu0 0.0
        %801 = vmatpush1.xpose.msra.mxu0 0.0
        %802 = vmatprep.subr.mxu0 0.0
        %803 = vmatpush1.xpose.msra.mxu0 0.0
        %804 = vmatprep.subr.mxu0 0.0
        %805 = vmatpush1.xpose.msra.mxu0 0.0
        %806 = vmatprep.subr.mxu0 0.0
        %807 = vmatpush1.xpose.msra.mxu0 0.0
        %808 = vmatprep.subr.mxu0 0.0
        %809 = vmatpush1.xpose.msra.mxu0 0.0
        %810 = vmatprep.subr.mxu0 0.0
        %811 = vmatpush1.xpose.msra.mxu0 0.0
        %812 = vmatprep.subr.mxu0 0.0
        %813 = vmatpush1.xpose.msra.mxu0 0.0
        %814 = vmatprep.subr.mxu0 0.0
        %815 = vmatpush1.xpose.msra.mxu0 0.0
        %816 = vmatprep.subr.mxu0 0.0
        %817 = vmatpush1.xpose.msra.mxu0 0.0
        %818 = vmatprep.subr.mxu0 0.0
        %819 = vmatpush1.xpose.msra.mxu0 0.0
        %820 = vmatprep.subr.mxu0 0.0
        %821 = vmatpush1.xpose.msra.mxu0 0.0
        %822 = vmatprep.subr.mxu0 0.0
        %823 = vmatpush1.xpose.msra.mxu0 0.0
        %824 = vmatprep.subr.mxu0 0.0
        %825 = vmatpush1.xpose.msra.mxu0 0.0
        %826 = vmatprep.subr.mxu0 0.0
        %827 = vmatpush1.xpose.msra.mxu0 0.0
        %828 = vmatprep.subr.mxu0 0.0
        %829 = vmatpush1.xpose.msra.mxu0 0.0
        %830 = vmatprep.subr.mxu0 0.0
        %831 = vmatpush1.xpose.msra.mxu0 0.0
        %832 = vmatprep.subr.mxu0 0.0
        %833 = vmatpush1.xpose.msra.mxu0 0.0
        %834 = vmatprep.subr.mxu0 0.0
        %835 = vmatpush1.xpose.msra.mxu0 0.0
        %836 = vmatprep.subr.mxu0 0.0
        %837 = vmatpush1.xpose.msra.mxu0 0.0
        %838 = vmatprep.subr.mxu0 0.0
        %839 = vmatpush1.xpose.msra.mxu0 0.0
        %840 = vmatprep.subr.mxu0 0.0
        %841 = vmatpush1.xpose.msra.mxu0 0.0
        %842 = vmatprep.subr.mxu0 0.0
        %843 = vmatpush1.xpose.msra.mxu0 0.0
        %844 = vmatprep.subr.mxu0 0.0
        %845 = vmatpush1.xpose.msra.mxu0 0.0
        %846 = vmatprep.subr.mxu0 0.0
        %847 = vmatpush1.xpose.msra.mxu0 0.0
        %848 = vmatprep.mubr.f32.mxu0 0.0
        %849 = vmatmul.mubr.f32.gmra.mrb[0].mxu0 %v780
        %v850 = vpop.f32.mrb[0].mxu0
        %v851 = vadd.f32 0.0, %v850
        %v852 = vpop.f32.mrb[0].mxu0
        %853 = vdwg.mxu0
        %v854 = vmul.f32 %v851, 0.35355338
        %v855 = vadd.f32 %v854, %v685
        %v856 = vsel %vm605, %v855, -inf
        %857 = vmax.xlane.f32.xlu0 %v856
        %v858 = vpop.xlane.xlu0 %857
        %v859 = vsub.f32 %v855, %v858
        %v860 = vmul.f32 %v859, 1.442695
        %v861 = vpow.pop %v860
        %v862 = vsel %vm605, %v861, 0.0
        %863 = vadd.xlane.f32.xlu0 %v862
        %v864 = vpop.xlane.xlu0 %863
        %v865 = vrcp.pop %v864
        %v866 = vmul.f32 %v861, %v865
        %v867 = vadd.f32 %v699, %v866
        %868 = vrot.lane.b32.xlu0 %v598, 56
        %v869 = vpop.permute.xlu0 %868
        %v872 = vsel %vm605, %v866, 0
        %874 = vmatprep.subr.mxu0 0.0
        %875 = vmatpush1.msra.mxu0 %v869
        %876 = vmatprep.subr.mxu0 0.0
        %877 = vmatpush1.msra.mxu0 0.0
        %878 = vmatprep.subr.mxu0 0.0
        %879 = vmatpush1.msra.mxu0 0.0
        %880 = vmatprep.subr.mxu0 0.0
        %881 = vmatpush1.msra.mxu0 0.0
        %882 = vmatprep.subr.mxu0 0.0
        %883 = vmatpush1.msra.mxu0 0.0
        %884 = vmatprep.subr.mxu0 0.0
        %885 = vmatpush1.msra.mxu0 0.0
        %886 = vmatprep.subr.mxu0 0.0
        %887 = vmatpush1.msra.mxu0 0.0
        %888 = vmatprep.subr.mxu0 0.0
        %889 = vmatpush1.msra.mxu0 0.0
        %890 = vmatprep.subr.mxu0 0.0
        %891 = vmatpush1.msra.mxu0 0.0
        %892 = vmatprep.subr.mxu0 0.0
        %893 = vmatpush1.msra.mxu0 0.0
        %894 = vmatprep.subr.mxu0 0.0
        %895 = vmatpush1.msra.mxu0 0.0
        %896 = vmatprep.subr.mxu0 0.0
        %897 = vmatpush1.msra.mxu0 0.0
        %898 = vmatprep.subr.mxu0 0.0
        %899 = vmatpush1.msra.mxu0 0.0
        %900 = vmatprep.subr.mxu0 0.0
        %901 = vmatpush1.msra.mxu0 0.0
        %902 = vmatprep.subr.mxu0 0.0
        %903 = vmatpush1.msra.mxu0 0.0
        %904 = vmatprep.subr.mxu0 0.0
        %905 = vmatpush1.msra.mxu0 0.0
        %906 = vmatprep.subr.mxu0 0.0
        %907 = vmatpush1.msra.mxu0 0.0
        %908 = vmatprep.subr.mxu0 0.0
        %909 = vmatpush1.msra.mxu0 0.0
        %910 = vmatprep.subr.mxu0 0.0
        %911 = vmatpush1.msra.mxu0 0.0
        %912 = vmatprep.subr.mxu0 0.0
        %913 = vmatpush1.msra.mxu0 0.0
        %914 = vmatprep.subr.mxu0 0.0
        %915 = vmatpush1.msra.mxu0 0.0
        %916 = vmatprep.subr.mxu0 0.0
        %917 = vmatpush1.msra.mxu0 0.0
        %918 = vmatprep.subr.mxu0 0.0
        %919 = vmatpush1.msra.mxu0 0.0
        %920 = vmatprep.subr.mxu0 0.0
        %921 = vmatpush1.msra.mxu0 0.0
        %922 = vmatprep.subr.mxu0 0.0
        %923 = vmatpush1.msra.mxu0 0.0
        %924 = vmatprep.subr.mxu0 0.0
        %925 = vmatpush1.msra.mxu0 0.0
        %926 = vmatprep.subr.mxu0 0.0
        %927 = vmatpush1.msra.mxu0 0.0
        %928 = vmatprep.subr.mxu0 0.0
        %929 = vmatpush1.msra.mxu0 0.0
        %930 = vmatprep.subr.mxu0 0.0
        %931 = vmatpush1.msra.mxu0 0.0
        %932 = vmatprep.subr.mxu0 0.0
        %933 = vmatpush1.msra.mxu0 0.0
        %934 = vmatprep.subr.mxu0 0.0
        %935 = vmatpush1.msra.mxu0 0.0
        %936 = vmatprep.subr.mxu0 0.0
        %937 = vmatpush1.msra.mxu0 0.0
        %938 = vmatprep.mubr.f32.mxu0 0.0
        %939 = vmatmul.mubr.f32.gmra.mrb[0].mxu0 %v872
        %v940 = vpop.f32.mrb[0].mxu0
        %v941 = vadd.f32 0.0, %v940
        %v942 = vpop.f32.mrb[0].mxu0
        %943 = vdwg.mxu0
        %944 = vrot.lane.b32.xlu0 %v598, 112
        %v945 = vpop.permute.xlu0 %944
        %946 = vrot.lane.b32.xlu0 %v598, 80
        %v947 = vpop.permute.xlu0 %946
        %v948 = vsel %vm605, %v945, 0
        %v950 = vsel %vm605, %v947, 0
        %952 = vmatprep.subr.mxu0 0.0
        %953 = vmatpush1.xpose.msra.mxu0 %v950
        %954 = vmatprep.subr.mxu0 0.0
        %955 = vmatpush1.xpose.msra.mxu0 0.0
        %956 = vmatprep.subr.mxu0 0.0
        %957 = vmatpush1.xpose.msra.mxu0 0.0
        %958 = vmatprep.subr.mxu0 0.0
        %959 = vmatpush1.xpose.msra.mxu0 0.0
        %960 = vmatprep.subr.mxu0 0.0
        %961 = vmatpush1.xpose.msra.mxu0 0.0
        %962 = vmatprep.subr.mxu0 0.0
        %963 = vmatpush1.xpose.msra.mxu0 0.0
        %964 = vmatprep.subr.mxu0 0.0
        %965 = vmatpush1.xpose.msra.mxu0 0.0
        %966 = vmatprep.subr.mxu0 0.0
        %967 = vmatpush1.xpose.msra.mxu0 0.0
        %968 = vmatprep.subr.mxu0 0.0
        %969 = vmatpush1.xpose.msra.mxu0 0.0
        %970 = vmatprep.subr.mxu0 0.0
        %971 = vmatpush1.xpose.msra.mxu0 0.0
        %972 = vmatprep.subr.mxu0 0.0
        %973 = vmatpush1.xpose.msra.mxu0 0.0
        %974 = vmatprep.subr.mxu0 0.0
        %975 = vmatpush1.xpose.msra.mxu0 0.0
        %976 = vmatprep.subr.mxu0 0.0
        %977 = vmatpush1.xpose.msra.mxu0 0.0
        %978 = vmatprep.subr.mxu0 0.0
        %979 = vmatpush1.xpose.msra.mxu0 0.0
        %980 = vmatprep.subr.mxu0 0.0
        %981 = vmatpush1.xpose.msra.mxu0 0.0
        %982 = vmatprep.subr.mxu0 0.0
        %983 = vmatpush1.xpose.msra.mxu0 0.0
        %984 = vmatprep.subr.mxu0 0.0
        %985 = vmatpush1.xpose.msra.mxu0 0.0
        %986 = vmatprep.subr.mxu0 0.0
        %987 = vmatpush1.xpose.msra.mxu0 0.0
        %988 = vmatprep.subr.mxu0 0.0
        %989 = vmatpush1.xpose.msra.mxu0 0.0
        %990 = vmatprep.subr.mxu0 0.0
        %991 = vmatpush1.xpose.msra.mxu0 0.0
        %992 = vmatprep.subr.mxu0 0.0
        %993 = vmatpush1.xpose.msra.mxu0 0.0
        %994 = vmatprep.subr.mxu0 0.0
        %995 = vmatpush1.xpose.msra.mxu0 0.0
        %996 = vmatprep.subr.mxu0 0.0
        %997 = vmatpush1.xpose.msra.mxu0 0.0
        %998 = vmatprep.subr.mxu0 0.0
        %999 = vmatpush1.xpose.msra.mxu0 0.0
        %1000 = vmatprep.subr.mxu0 0.0
        %1001 = vmatpush1.xpose.msra.mxu0 0.0
        %1002 = vmatprep.subr.mxu0 0.0
        %1003 = vmatpush1.xpose.msra.mxu0 0.0
        %1004 = vmatprep.subr.mxu0 0.0
        %1005 = vmatpush1.xpose.msra.mxu0 0.0
        %1006 = vmatprep.subr.mxu0 0.0
        %1007 = vmatpush1.xpose.msra.mxu0 0.0
        %1008 = vmatprep.subr.mxu0 0.0
        %1009 = vmatpush1.xpose.msra.mxu0 0.0
        %1010 = vmatprep.subr.mxu0 0.0
        %1011 = vmatpush1.xpose.msra.mxu0 0.0
        %1012 = vmatprep.subr.mxu0 0.0
        %1013 = vmatpush1.xpose.msra.mxu0 0.0
        %1014 = vmatprep.subr.mxu0 0.0
        %1015 = vmatpush1.xpose.msra.mxu0 0.0
        %1016 = vmatprep.mubr.f32.mxu0 0.0
        %1017 = vmatmul.mubr.f32.gmra.mrb[0].mxu0 %v948
        %v1018 = vpop.f32.mrb[0].mxu0
        %v1019 = vadd.f32 0.0, %v1018
        %v1020 = vpop.f32.mrb[0].mxu0
        %1021 = vdwg.mxu0
        %v1022 = vmul.f32 %v1019, 0.35355338
        %v1023 = vadd.f32 %v1022, %v685
        %v1024 = vsel %vm605, %v1023, -inf
        %1025 = vmax.xlane.f32.xlu0 %v1024
        %v1026 = vpop.xlane.xlu0 %1025
        %v1027 = vsub.f32 %v1023, %v1026
        %v1028 = vmul.f32 %v1027, 1.442695
        %v1029 = vpow.pop %v1028
        %v1030 = vsel %vm605, %v1029, 0.0
        %1031 = vadd.xlane.f32.xlu0 %v1030
        %v1032 = vpop.xlane.xlu0 %1031
        %v1033 = vrcp.pop %v1032
        %v1034 = vmul.f32 %v1029, %v1033
        %v1035 = vadd.f32 %v867, %v1034
        %1036 = vrot.lane.b32.xlu0 %v598, 48
        %v1037 = vpop.permute.xlu0 %1036
        %v1040 = vsel %vm605, %v1034, 0
        %1042 = vmatprep.subr.mxu0 0.0
        %1043 = vmatpush1.msra.mxu0 %v1037
        %1044 = vmatprep.subr.mxu0 0.0
        %1045 = vmatpush1.msra.mxu0 0.0
        %1046 = vmatprep.subr.mxu0 0.0
        %1047 = vmatpush1.msra.mxu0 0.0
        %1048 = vmatprep.subr.mxu0 0.0
        %1049 = vmatpush1.msra.mxu0 0.0
        %1050 = vmatprep.subr.mxu0 0.0
        %1051 = vmatpush1.msra.mxu0 0.0
        %1052 = vmatprep.subr.mxu0 0.0
        %1053 = vmatpush1.msra.mxu0 0.0
        %1054 = vmatprep.subr.mxu0 0.0
        %1055 = vmatpush1.msra.mxu0 0.0
        %1056 = vmatprep.subr.mxu0 0.0
        %1057 = vmatpush1.msra.mxu0 0.0
        %1058 = vmatprep.subr.mxu0 0.0
        %1059 = vmatpush1.msra.mxu0 0.0
        %1060 = vmatprep.subr.mxu0 0.0
        %1061 = vmatpush1.msra.mxu0 0.0
        %1062 = vmatprep.subr.mxu0 0.0
        %1063 = vmatpush1.msra.mxu0 0.0
        %1064 = vmatprep.subr.mxu0 0.0
        %1065 = vmatpush1.msra.mxu0 0.0
        %1066 = vmatprep.subr.mxu0 0.0
        %1067 = vmatpush1.msra.mxu0 0.0
        %1068 = vmatprep.subr.mxu0 0.0
        %1069 = vmatpush1.msra.mxu0 0.0
        %1070 = vmatprep.subr.mxu0 0.0
        %1071 = vmatpush1.msra.mxu0 0.0
        %1072 = vmatprep.subr.mxu0 0.0
        %1073 = vmatpush1.msra.mxu0 0.0
        %1074 = vmatprep.subr.mxu0 0.0
        %1075 = vmatpush1.msra.mxu0 0.0
        %1076 = vmatprep.subr.mxu0 0.0
        %1077 = vmatpush1.msra.mxu0 0.0
        %1078 = vmatprep.subr.mxu0 0.0
        %1079 = vmatpush1.msra.mxu0 0.0
        %1080 = vmatprep.subr.mxu0 0.0
        %1081 = vmatpush1.msra.mxu0 0.0
        %1082 = vmatprep.subr.mxu0 0.0
        %1083 = vmatpush1.msra.mxu0 0.0
        %1084 = vmatprep.subr.mxu0 0.0
        %1085 = vmatpush1.msra.mxu0 0.0
        %1086 = vmatprep.subr.mxu0 0.0
        %1087 = vmatpush1.msra.mxu0 0.0
        %1088 = vmatprep.subr.mxu0 0.0
        %1089 = vmatpush1.msra.mxu0 0.0
        %1090 = vmatprep.subr.mxu0 0.0
        %1091 = vmatpush1.msra.mxu0 0.0
        %1092 = vmatprep.subr.mxu0 0.0
        %1093 = vmatpush1.msra.mxu0 0.0
        %1094 = vmatprep.subr.mxu0 0.0
        %1095 = vmatpush1.msra.mxu0 0.0
        %1096 = vmatprep.subr.mxu0 0.0
        %1097 = vmatpush1.msra.mxu0 0.0
        %1098 = vmatprep.subr.mxu0 0.0
        %1099 = vmatpush1.msra.mxu0 0.0
        %1100 = vmatprep.subr.mxu0 0.0
        %1101 = vmatpush1.msra.mxu0 0.0
        %1102 = vmatprep.subr.mxu0 0.0
        %1103 = vmatpush1.msra.mxu0 0.0
        %1104 = vmatprep.subr.mxu0 0.0
        %1105 = vmatpush1.msra.mxu0 0.0
        %1106 = vmatprep.mubr.f32.mxu0 0.0
        %1107 = vmatmul.mubr.f32.gmra.mrb[0].mxu0 %v1040
        %v1108 = vpop.f32.mrb[0].mxu0
        %v1109 = vadd.f32 0.0, %v1108
        %v1110 = vpop.f32.mrb[0].mxu0
        %1111 = vdwg.mxu0
        %1112 = vrot.lane.b32.xlu0 %v598, 104
        %v1113 = vpop.permute.xlu0 %1112
        %1114 = vrot.lane.b32.xlu0 %v598, 72
        %v1115 = vpop.permute.xlu0 %1114
        %v1116 = vsel %vm605, %v1113, 0
        %v1118 = vsel %vm605, %v1115, 0
        %1120 = vmatprep.subr.mxu0 0.0
        %1121 = vmatpush1.xpose.msra.mxu0 %v1118
        %1122 = vmatprep.subr.mxu0 0.0
        %1123 = vmatpush1.xpose.msra.mxu0 0.0
        %1124 = vmatprep.subr.mxu0 0.0
        %1125 = vmatpush1.xpose.msra.mxu0 0.0
        %1126 = vmatprep.subr.mxu0 0.0
        %1127 = vmatpush1.xpose.msra.mxu0 0.0
        %1128 = vmatprep.subr.mxu0 0.0
        %1129 = vmatpush1.xpose.msra.mxu0 0.0
        %1130 = vmatprep.subr.mxu0 0.0
        %1131 = vmatpush1.xpose.msra.mxu0 0.0
        %1132 = vmatprep.subr.mxu0 0.0
        %1133 = vmatpush1.xpose.msra.mxu0 0.0
        %1134 = vmatprep.subr.mxu0 0.0
        %1135 = vmatpush1.xpose.msra.mxu0 0.0
        %1136 = vmatprep.subr.mxu0 0.0
        %1137 = vmatpush1.xpose.msra.mxu0 0.0
        %1138 = vmatprep.subr.mxu0 0.0
        %1139 = vmatpush1.xpose.msra.mxu0 0.0
        %1140 = vmatprep.subr.mxu0 0.0
        %1141 = vmatpush1.xpose.msra.mxu0 0.0
        %1142 = vmatprep.subr.mxu0 0.0
        %1143 = vmatpush1.xpose.msra.mxu0 0.0
        %1144 = vmatprep.subr.mxu0 0.0
        %1145 = vmatpush1.xpose.msra.mxu0 0.0
        %1146 = vmatprep.subr.mxu0 0.0
        %1147 = vmatpush1.xpose.msra.mxu0 0.0
        %1148 = vmatprep.subr.mxu0 0.0
        %1149 = vmatpush1.xpose.msra.mxu0 0.0
        %1150 = vmatprep.subr.mxu0 0.0
        %1151 = vmatpush1.xpose.msra.mxu0 0.0
        %1152 = vmatprep.subr.mxu0 0.0
        %1153 = vmatpush1.xpose.msra.mxu0 0.0
        %1154 = vmatprep.subr.mxu0 0.0
        %1155 = vmatpush1.xpose.msra.mxu0 0.0
        %1156 = vmatprep.subr.mxu0 0.0
        %1157 = vmatpush1.xpose.msra.mxu0 0.0
        %1158 = vmatprep.subr.mxu0 0.0
        %1159 = vmatpush1.xpose.msra.mxu0 0.0
        %1160 = vmatprep.subr.mxu0 0.0
        %1161 = vmatpush1.xpose.msra.mxu0 0.0
        %1162 = vmatprep.subr.mxu0 0.0
        %1163 = vmatpush1.xpose.msra.mxu0 0.0
        %1164 = vmatprep.subr.mxu0 0.0
        %1165 = vmatpush1.xpose.msra.mxu0 0.0
        %1166 = vmatprep.subr.mxu0 0.0
        %1167 = vmatpush1.xpose.msra.mxu0 0.0
        %1168 = vmatprep.subr.mxu0 0.0
        %1169 = vmatpush1.xpose.msra.mxu0 0.0
        %1170 = vmatprep.subr.mxu0 0.0
        %1171 = vmatpush1.xpose.msra.mxu0 0.0
        %1172 = vmatprep.subr.mxu0 0.0
        %1173 = vmatpush1.xpose.msra.mxu0 0.0
        %1174 = vmatprep.subr.mxu0 0.0
        %1175 = vmatpush1.xpose.msra.mxu0 0.0
        %1176 = vmatprep.subr.mxu0 0.0
        %1177 = vmatpush1.xpose.msra.mxu0 0.0
        %1178 = vmatprep.subr.mxu0 0.0
        %1179 = vmatpush1.xpose.msra.mxu0 0.0
        %1180 = vmatprep.subr.mxu0 0.0
        %1181 = vmatpush1.xpose.msra.mxu0 0.0
        %1182 = vmatprep.subr.mxu0 0.0
        %1183 = vmatpush1.xpose.msra.mxu0 0.0
        %1184 = vmatprep.mubr.f32.mxu0 0.0
        %1185 = vmatmul.mubr.f32.gmra.mrb[0].mxu0 %v1116
        %v1186 = vpop.f32.mrb[0].mxu0
        %v1187 = vadd.f32 0.0, %v1186
        %v1188 = vpop.f32.mrb[0].mxu0
        %1189 = vdwg.mxu0
        %v1190 = vmul.f32 %v1187, 0.35355338
        %v1191 = vadd.f32 %v1190, %v685
        %v1192 = vsel %vm605, %v1191, -inf
        %1193 = vmax.xlane.f32.xlu0 %v1192
        %v1194 = vpop.xlane.xlu0 %1193
        %v1195 = vsub.f32 %v1191, %v1194
        %v1196 = vmul.f32 %v1195, 1.442695
        %v1197 = vpow.pop %v1196
        %v1198 = vsel %vm605, %v1197, 0.0
        %1199 = vadd.xlane.f32.xlu0 %v1198
        %v1200 = vpop.xlane.xlu0 %1199
        %v1201 = vrcp.pop %v1200
        %v1202 = vmul.f32 %v1197, %v1201
        %v1203 = vadd.f32 %v1035, %v1202
        %1204 = vrot.lane.b32.xlu0 %v598, 40
        %v1205 = vpop.permute.xlu0 %1204
        %v1208 = vsel %vm605, %v1202, 0
        %1210 = vmatprep.subr.mxu0 0.0
        %1211 = vmatpush1.msra.mxu0 %v1205
        %1212 = vmatprep.subr.mxu0 0.0
        %1213 = vmatpush1.msra.mxu0 0.0
        %1214 = vmatprep.subr.mxu0 0.0
        %1215 = vmatpush1.msra.mxu0 0.0
        %1216 = vmatprep.subr.mxu0 0.0
        %1217 = vmatpush1.msra.mxu0 0.0
        %1218 = vmatprep.subr.mxu0 0.0
        %1219 = vmatpush1.msra.mxu0 0.0
        %1220 = vmatprep.subr.mxu0 0.0
        %1221 = vmatpush1.msra.mxu0 0.0
        %1222 = vmatprep.subr.mxu0 0.0
        %1223 = vmatpush1.msra.mxu0 0.0
        %1224 = vmatprep.subr.mxu0 0.0
        %1225 = vmatpush1.msra.mxu0 0.0
        %1226 = vmatprep.subr.mxu0 0.0
        %1227 = vmatpush1.msra.mxu0 0.0
        %1228 = vmatprep.subr.mxu0 0.0
        %1229 = vmatpush1.msra.mxu0 0.0
        %1230 = vmatprep.subr.mxu0 0.0
        %1231 = vmatpush1.msra.mxu0 0.0
        %1232 = vmatprep.subr.mxu0 0.0
        %1233 = vmatpush1.msra.mxu0 0.0
        %1234 = vmatprep.subr.mxu0 0.0
        %1235 = vmatpush1.msra.mxu0 0.0
        %1236 = vmatprep.subr.mxu0 0.0
        %1237 = vmatpush1.msra.mxu0 0.0
        %1238 = vmatprep.subr.mxu0 0.0
        %1239 = vmatpush1.msra.mxu0 0.0
        %1240 = vmatprep.subr.mxu0 0.0
        %1241 = vmatpush1.msra.mxu0 0.0
        %1242 = vmatprep.subr.mxu0 0.0
        %1243 = vmatpush1.msra.mxu0 0.0
        %1244 = vmatprep.subr.mxu0 0.0
        %1245 = vmatpush1.msra.mxu0 0.0
        %1246 = vmatprep.subr.mxu0 0.0
        %1247 = vmatpush1.msra.mxu0 0.0
        %1248 = vmatprep.subr.mxu0 0.0
        %1249 = vmatpush1.msra.mxu0 0.0
        %1250 = vmatprep.subr.mxu0 0.0
        %1251 = vmatpush1.msra.mxu0 0.0
        %1252 = vmatprep.subr.mxu0 0.0
        %1253 = vmatpush1.msra.mxu0 0.0
        %1254 = vmatprep.subr.mxu0 0.0
        %1255 = vmatpush1.msra.mxu0 0.0
        %1256 = vmatprep.subr.mxu0 0.0
        %1257 = vmatpush1.msra.mxu0 0.0
        %1258 = vmatprep.subr.mxu0 0.0
        %1259 = vmatpush1.msra.mxu0 0.0
        %1260 = vmatprep.subr.mxu0 0.0
        %1261 = vmatpush1.msra.mxu0 0.0
        %1262 = vmatprep.subr.mxu0 0.0
        %1263 = vmatpush1.msra.mxu0 0.0
        %1264 = vmatprep.subr.mxu0 0.0
        %1265 = vmatpush1.msra.mxu0 0.0
        %1266 = vmatprep.subr.mxu0 0.0
        %1267 = vmatpush1.msra.mxu0 0.0
        %1268 = vmatprep.subr.mxu0 0.0
        %1269 = vmatpush1.msra.mxu0 0.0
        %1270 = vmatprep.subr.mxu0 0.0
        %1271 = vmatpush1.msra.mxu0 0.0
        %1272 = vmatprep.subr.mxu0 0.0
        %1273 = vmatpush1.msra.mxu0 0.0
        %1274 = vmatprep.mubr.f32.mxu0 0.0
        %1275 = vmatmul.mubr.f32.gmra.mrb[0].mxu0 %v1208
        %v1276 = vpop.f32.mrb[0].mxu0
        %v1277 = vadd.f32 0.0, %v1276
        %v1278 = vpop.f32.mrb[0].mxu0
        %1279 = vdwg.mxu0
        %1281 = vrot.lane.b32.xlu0 %v941, 8
        %v1282 = vpop.permute.xlu0 %1281
        %1285 = vrot.lane.b32.xlu0 %v1109, 16
        %v1286 = vpop.permute.xlu0 %1285
        %1289 = vrot.lane.b32.xlu0 %v1277, 24
        %v1290 = vpop.permute.xlu0 %1289
        %v1292 = vsel %vm605, %v773, %v1282
        %vm1293 = vcmask 130048
        %v1294 = vsel %vm1293, %v1292, %v1286
        %vm1295 = vcmask 195584
        %v1296 = vsel %vm1295, %v1294, %v1290
        %v1297 = vlaneseq
        %v1298 = vshrl.u32 %v1297, 7
        %v1299 = vsub.s32 1, %v1298
        %v1300 = vrot.slane %v521, %v1299
        %1305 = vrot.lane.b32.xlu0 %v509, 32
        %v1306 = vpop.permute.xlu0 %1305
        %1307 = vrot.lane.b32.xlu0 %v512, 32
        %v1308 = vpop.permute.xlu0 %1307
        %1309 = vrot.lane.b32.xlu0 %v515, 32
        %v1310 = vpop.permute.xlu0 %1309
        %1311 = vrot.lane.b32.xlu0 %v518, 32
        %v1312 = vpop.permute.xlu0 %1311
        %v1318 = vsel %vm527, %v1296, 0
        %1320 = vmatprep.subr.mxu0 0.0
        %1321 = vmatpush1.msra.mxu0 %v1306
        %1322 = vmatprep.subr.mxu0 0.0
        %1323 = vmatpush1.msra.mxu0 %v1308
        %1324 = vmatprep.subr.mxu0 0.0
        %1325 = vmatpush1.msra.mxu0 %v1310
        %1326 = vmatprep.subr.mxu0 0.0
        %1327 = vmatpush1.msra.mxu0 %v1312
        %1328 = vmatprep.subr.mxu0 0.0
        %1329 = vmatpush1.msra.mxu0 0.0
        %1330 = vmatprep.subr.mxu0 0.0
        %1331 = vmatpush1.msra.mxu0 0.0
        %1332 = vmatprep.subr.mxu0 0.0
        %1333 = vmatpush1.msra.mxu0 0.0
        %1334 = vmatprep.subr.mxu0 0.0
        %1335 = vmatpush1.msra.mxu0 0.0
        %1336 = vmatprep.subr.mxu0 0.0
        %1337 = vmatpush1.msra.mxu0 0.0
        %1338 = vmatprep.subr.mxu0 0.0
        %1339 = vmatpush1.msra.mxu0 0.0
        %1340 = vmatprep.subr.mxu0 0.0
        %1341 = vmatpush1.msra.mxu0 0.0
        %1342 = vmatprep.subr.mxu0 0.0
        %1343 = vmatpush1.msra.mxu0 0.0
        %1344 = vmatprep.subr.mxu0 0.0
        %1345 = vmatpush1.msra.mxu0 0.0
        %1346 = vmatprep.subr.mxu0 0.0
        %1347 = vmatpush1.msra.mxu0 0.0
        %1348 = vmatprep.subr.mxu0 0.0
        %1349 = vmatpush1.msra.mxu0 0.0
        %1350 = vmatprep.subr.mxu0 0.0
        %1351 = vmatpush1.msra.mxu0 0.0
        %1352 = vmatprep.subr.mxu0 0.0
        %1353 = vmatpush1.msra.mxu0 0.0
        %1354 = vmatprep.subr.mxu0 0.0
        %1355 = vmatpush1.msra.mxu0 0.0
        %1356 = vmatprep.subr.mxu0 0.0
        %1357 = vmatpush1.msra.mxu0 0.0
        %1358 = vmatprep.subr.mxu0 0.0
        %1359 = vmatpush1.msra.mxu0 0.0
        %1360 = vmatprep.subr.mxu0 0.0
        %1361 = vmatpush1.msra.mxu0 0.0
        %1362 = vmatprep.subr.mxu0 0.0
        %1363 = vmatpush1.msra.mxu0 0.0
        %1364 = vmatprep.subr.mxu0 0.0
        %1365 = vmatpush1.msra.mxu0 0.0
        %1366 = vmatprep.subr.mxu0 0.0
        %1367 = vmatpush1.msra.mxu0 0.0
        %1368 = vmatprep.subr.mxu0 0.0
        %1369 = vmatpush1.msra.mxu0 0.0
        %1370 = vmatprep.subr.mxu0 0.0
        %1371 = vmatpush1.msra.mxu0 0.0
        %1372 = vmatprep.subr.mxu0 0.0
        %1373 = vmatpush1.msra.mxu0 0.0
        %1374 = vmatprep.subr.mxu0 0.0
        %1375 = vmatpush1.msra.mxu0 0.0
        %1376 = vmatprep.subr.mxu0 0.0
        %1377 = vmatpush1.msra.mxu0 0.0
        %1378 = vmatprep.subr.mxu0 0.0
        %1379 = vmatpush1.msra.mxu0 0.0
        %1380 = vmatprep.subr.mxu0 0.0
        %1381 = vmatpush1.msra.mxu0 0.0
        %1382 = vmatprep.subr.mxu0 0.0
        %1383 = vmatpush1.msra.mxu0 0.0
        %1384 = vmatprep.mubr.f32.mxu0 0.0
        %1385 = vmatmul.mubr.f32.gmra.mrb[0].mxu0 %v1318
        %v1386 = vpop.f32.mrb[0].mxu0
        %v1387 = vadd.f32 %v1300, %v1386
        %v1388 = vpop.f32.mrb[0].mxu0
        %1389 = vdwg.mxu0
        %v1390 = vmul.f32 %v1203, 0.25
        %v1391 = vadd.f32 %v507, %v1387
        %v1392 = vsel %vm527, %v1391, 0.0
        %1393 = vadd.xlane.f32.xlu0 %v1392
        %v1394 = vpop.xlane.xlu0 %1393
        %v1395 = vrcp.pop 32.0
        %v1396 = vmul.f32 %v1394, %v1395
        %v1397 = vsub.f32 %v1391, %v1396
        %v1398 = vmul.f32 %v1397, %v1397
        %v1399 = vsel %vm527, %v1398, 0.0
        %1400 = vadd.xlane.f32.xlu0 %v1399
        %v1401 = vpop.xlane.xlu0 %1400
        %v1402 = vmul.f32 %v1401, %v1395
        %v1403 = vadd.f32 %v1402, 1e-05
        %v1404 = vrsqrt.pop %v1403
        %v1405 = vmul.f32 %v1397, %v1404
        %v1406 = vlaneseq
        %v1407 = vshrl.u32 %v1406, 7
        %v1408 = vsub.s32 7, %v1407
        %v1409 = vrot.slane %v521, %v1408
        %v1410 = vmul.f32 %v1405, %v1409
        %v1411 = vlaneseq
        %v1412 = vshrl.u32 %v1411, 7
        %v1413 = vsub.s32 0, %v1412
        %v1414 = vrot.slane %v522, %v1413
        %v1415 = vadd.f32 %v1410, %v1414
        %v1416 = vlaneseq
        %v1417 = vshrl.u32 %v1416, 7
        %v1418 = vsub.s32 2, %v1417
        %v1419 = vrot.slane %v521, %v1418
        %v1421 = vsel %vm527, %v1415, 0
        %1423 = vmatprep.subr.mxu0 0.0
        %1424 = vmatpush1.msra.mxu0 %v510
        %1425 = vmatprep.subr.mxu0 0.0
        %1426 = vmatpush1.msra.mxu0 %v513
        %1427 = vmatprep.subr.mxu0 0.0
        %1428 = vmatpush1.msra.mxu0 %v516
        %1429 = vmatprep.subr.mxu0 0.0
        %1430 = vmatpush1.msra.mxu0 %v519
        %1431 = vmatprep.subr.mxu0 0.0
        %1432 = vmatpush1.msra.mxu0 0.0
        %1433 = vmatprep.subr.mxu0 0.0
        %1434 = vmatpush1.msra.mxu0 0.0
        %1435 = vmatprep.subr.mxu0 0.0
        %1436 = vmatpush1.msra.mxu0 0.0
        %1437 = vmatprep.subr.mxu0 0.0
        %1438 = vmatpush1.msra.mxu0 0.0
        %1439 = vmatprep.subr.mxu0 0.0
        %1440 = vmatpush1.msra.mxu0 0.0
        %1441 = vmatprep.subr.mxu0 0.0
        %1442 = vmatpush1.msra.mxu0 0.0
        %1443 = vmatprep.subr.mxu0 0.0
        %1444 = vmatpush1.msra.mxu0 0.0
        %1445 = vmatprep.subr.mxu0 0.0
        %1446 = vmatpush1.msra.mxu0 0.0
        %1447 = vmatprep.subr.mxu0 0.0
        %1448 = vmatpush1.msra.mxu0 0.0
        %1449 = vmatprep.subr.mxu0 0.0
        %1450 = vmatpush1.msra.mxu0 0.0
        %1451 = vmatprep.subr.mxu0 0.0
        %1452 = vmatpush1.msra.mxu0 0.0
        %1453 = vmatprep.subr.mxu0 0.0
        %1454 = vmatpush1.msra.mxu0 0.0
        %1455 = vmatprep.subr.mxu0 0.0
        %1456 = vmatpush1.msra.mxu0 0.0
        %1457 = vmatprep.subr.mxu0 0.0
        %1458 = vmatpush1.msra.mxu0 0.0
        %1459 = vmatprep.subr.mxu0 0.0
        %1460 = vmatpush1.msra.mxu0 0.0
        %1461 = vmatprep.subr.mxu0 0.0
        %1462 = vmatpush1.msra.mxu0 0.0
        %1463 = vmatprep.subr.mxu0 0.0
        %1464 = vmatpush1.msra.mxu0 0.0
        %1465 = vmatprep.subr.mxu0 0.0
        %1466 = vmatpush1.msra.mxu0 0.0
        %1467 = vmatprep.subr.mxu0 0.0
        %1468 = vmatpush1.msra.mxu0 0.0
        %1469 = vmatprep.subr.mxu0 0.0
        %1470 = vmatpush1.msra.mxu0 0.0
        %1471 = vmatprep.subr.mxu0 0.0
        %1472 = vmatpush1.msra.mxu0 0.0
        %1473 = vmatprep.subr.mxu0 0.0
        %1474 = vmatpush1.msra.mxu0 0.0
        %1475 = vmatprep.subr.mxu0 0.0
        %1476 = vmatpush1.msra.mxu0 0.0
        %1477 = vmatprep.subr.mxu0 0.0
        %1478 = vmatpush1.msra.mxu0 0.0
        %1479 = vmatprep.subr.mxu0 0.0
        %1480 = vmatpush1.msra.mxu0 0.0
        %1481 = vmatprep.subr.mxu0 0.0
        %1482 = vmatpush1.msra.mxu0 0.0
        %1483 = vmatprep.subr.mxu0 0.0
        %1484 = vmatpush1.msra.mxu0 0.0
        %1485 = vmatprep.subr.mxu0 0.0
        %1486 = vmatpush1.msra.mxu0 0.0
        %1487 = vmatprep.mubr.f32.mxu0 0.0
        %1488 = vmatmul.mubr.f32.gmra.mrb[0].mxu0 %v1421
        %v1489 = vpop.f32.mrb[0].mxu0
        %v1490 = vadd.f32 %v1419, %v1489
        %v1491 = vpop.f32.mrb[0].mxu0
        %1492 = vdwg.mxu0
        %v1493 = vlaneseq
        %v1494 = vshrl.u32 %v1493, 7
        %v1495 = vsub.s32 3, %v1494
        %v1496 = vrot.slane %v521, %v1495
        %1501 = vrot.lane.b32.xlu0 %v510, 96
        %v1502 = vpop.permute.xlu0 %1501
        %1503 = vrot.lane.b32.xlu0 %v513, 96
        %v1504 = vpop.permute.xlu0 %1503
        %1505 = vrot.lane.b32.xlu0 %v516, 96
        %v1506 = vpop.permute.xlu0 %1505
        %1507 = vrot.lane.b32.xlu0 %v519, 96
        %v1508 = vpop.permute.xlu0 %1507
        %v1514 = vsel %vm527, %v508, 0
        %1516 = vmatprep.subr.mxu0 0.0
        %1517 = vmatpush1.msra.mxu0 %v1502
        %1518 = vmatprep.subr.mxu0 0.0
        %1519 = vmatpush1.msra.mxu0 %v1504
        %1520 = vmatprep.subr.mxu0 0.0
        %1521 = vmatpush1.msra.mxu0 %v1506
        %1522 = vmatprep.subr.mxu0 0.0
        %1523 = vmatpush1.msra.mxu0 %v1508
        %1524 = vmatprep.subr.mxu0 0.0
        %1525 = vmatpush1.msra.mxu0 0.0
        %1526 = vmatprep.subr.mxu0 0.0
        %1527 = vmatpush1.msra.mxu0 0.0
        %1528 = vmatprep.subr.mxu0 0.0
        %1529 = vmatpush1.msra.mxu0 0.0
        %1530 = vmatprep.subr.mxu0 0.0
        %1531 = vmatpush1.msra.mxu0 0.0
        %1532 = vmatprep.subr.mxu0 0.0
        %1533 = vmatpush1.msra.mxu0 0.0
        %1534 = vmatprep.subr.mxu0 0.0
        %1535 = vmatpush1.msra.mxu0 0.0
        %1536 = vmatprep.subr.mxu0 0.0
        %1537 = vmatpush1.msra.mxu0 0.0
        %1538 = vmatprep.subr.mxu0 0.0
        %1539 = vmatpush1.msra.mxu0 0.0
        %1540 = vmatprep.subr.mxu0 0.0
        %1541 = vmatpush1.msra.mxu0 0.0
        %1542 = vmatprep.subr.mxu0 0.0
        %1543 = vmatpush1.msra.mxu0 0.0
        %1544 = vmatprep.subr.mxu0 0.0
        %1545 = vmatpush1.msra.mxu0 0.0
        %1546 = vmatprep.subr.mxu0 0.0
        %1547 = vmatpush1.msra.mxu0 0.0
        %1548 = vmatprep.subr.mxu0 0.0
        %1549 = vmatpush1.msra.mxu0 0.0
        %1550 = vmatprep.subr.mxu0 0.0
        %1551 = vmatpush1.msra.mxu0 0.0
        %1552 = vmatprep.subr.mxu0 0.0
        %1553 = vmatpush1.msra.mxu0 0.0
        %1554 = vmatprep.subr.mxu0 0.0
        %1555 = vmatpush1.msra.mxu0 0.0
        %1556 = vmatprep.subr.mxu0 0.0
        %1557 = vmatpush1.msra.mxu0 0.0
        %1558 = vmatprep.subr.mxu0 0.0
        %1559 = vmatpush1.msra.mxu0 0.0
        %1560 = vmatprep.subr.mxu0 0.0
        %1561 = vmatpush1.msra.mxu0 0.0
        %1562 = vmatprep.subr.mxu0 0.0
        %1563 = vmatpush1.msra.mxu0 0.0
        %1564 = vmatprep.subr.mxu0 0.0
        %1565 = vmatpush1.msra.mxu0 0.0
        %1566 = vmatprep.subr.mxu0 0.0
        %1567 = vmatpush1.msra.mxu0 0.0
        %1568 = vmatprep.subr.mxu0 0.0
        %1569 = vmatpush1.msra.mxu0 0.0
        %1570 = vmatprep.subr.mxu0 0.0
        %1571 = vmatpush1.msra.mxu0 0.0
        %1572 = vmatprep.subr.mxu0 0.0
        %1573 = vmatpush1.msra.mxu0 0.0
        %1574 = vmatprep.subr.mxu0 0.0
        %1575 = vmatpush1.msra.mxu0 0.0
        %1576 = vmatprep.subr.mxu0 0.0
        %1577 = vmatpush1.msra.mxu0 0.0
        %1578 = vmatprep.subr.mxu0 0.0
        %1579 = vmatpush1.msra.mxu0 0.0
        %1580 = vmatprep.mubr.f32.mxu0 0.0
        %1581 = vmatmul.mubr.f32.gmra.mrb[0].mxu0 %v1514
        %v1582 = vpop.f32.mrb[0].mxu0
        %v1583 = vadd.f32 %v1496, %v1582
        %v1584 = vpop.f32.mrb[0].mxu0
        %1585 = vdwg.mxu0
        %v1586 = vld [vmem:[%s478] sm:$0x1]
        %v1588 = vsel %vm605, %v1490, 0
        %v1591 = vsel %vm605, %v1583, 0
        %1593 = vmatprep.subr.mxu0 0.0
        %1594 = vmatpush1.xpose.msra.mxu0 %v1591
        %1595 = vmatprep.subr.mxu0 0.0
        %1596 = vmatpush1.xpose.msra.mxu0 0.0
        %1597 = vmatprep.subr.mxu0 0.0
        %1598 = vmatpush1.xpose.msra.mxu0 0.0
        %1599 = vmatprep.subr.mxu0 0.0
        %1600 = vmatpush1.xpose.msra.mxu0 0.0
        %1601 = vmatprep.subr.mxu0 0.0
        %1602 = vmatpush1.xpose.msra.mxu0 0.0
        %1603 = vmatprep.subr.mxu0 0.0
        %1604 = vmatpush1.xpose.msra.mxu0 0.0
        %1605 = vmatprep.subr.mxu0 0.0
        %1606 = vmatpush1.xpose.msra.mxu0 0.0
        %1607 = vmatprep.subr.mxu0 0.0
        %1608 = vmatpush1.xpose.msra.mxu0 0.0
        %1609 = vmatprep.subr.mxu0 0.0
        %1610 = vmatpush1.xpose.msra.mxu0 0.0
        %1611 = vmatprep.subr.mxu0 0.0
        %1612 = vmatpush1.xpose.msra.mxu0 0.0
        %1613 = vmatprep.subr.mxu0 0.0
        %1614 = vmatpush1.xpose.msra.mxu0 0.0
        %1615 = vmatprep.subr.mxu0 0.0
        %1616 = vmatpush1.xpose.msra.mxu0 0.0
        %1617 = vmatprep.subr.mxu0 0.0
        %1618 = vmatpush1.xpose.msra.mxu0 0.0
        %1619 = vmatprep.subr.mxu0 0.0
        %1620 = vmatpush1.xpose.msra.mxu0 0.0
        %1621 = vmatprep.subr.mxu0 0.0
        %1622 = vmatpush1.xpose.msra.mxu0 0.0
        %1623 = vmatprep.subr.mxu0 0.0
        %1624 = vmatpush1.xpose.msra.mxu0 0.0
        %1625 = vmatprep.subr.mxu0 0.0
        %1626 = vmatpush1.xpose.msra.mxu0 0.0
        %1627 = vmatprep.subr.mxu0 0.0
        %1628 = vmatpush1.xpose.msra.mxu0 0.0
        %1629 = vmatprep.subr.mxu0 0.0
        %1630 = vmatpush1.xpose.msra.mxu0 0.0
        %1631 = vmatprep.subr.mxu0 0.0
        %1632 = vmatpush1.xpose.msra.mxu0 0.0
        %1633 = vmatprep.subr.mxu0 0.0
        %1634 = vmatpush1.xpose.msra.mxu0 0.0
        %1635 = vmatprep.subr.mxu0 0.0
        %1636 = vmatpush1.xpose.msra.mxu0 0.0
        %1637 = vmatprep.subr.mxu0 0.0
        %1638 = vmatpush1.xpose.msra.mxu0 0.0
        %1639 = vmatprep.subr.mxu0 0.0
        %1640 = vmatpush1.xpose.msra.mxu0 0.0
        %1641 = vmatprep.subr.mxu0 0.0
        %1642 = vmatpush1.xpose.msra.mxu0 0.0
        %1643 = vmatprep.subr.mxu0 0.0
        %1644 = vmatpush1.xpose.msra.mxu0 0.0
        %1645 = vmatprep.subr.mxu0 0.0
        %1646 = vmatpush1.xpose.msra.mxu0 0.0
        %1647 = vmatprep.subr.mxu0 0.0
        %1648 = vmatpush1.xpose.msra.mxu0 0.0
        %1649 = vmatprep.subr.mxu0 0.0
        %1650 = vmatpush1.xpose.msra.mxu0 0.0
        %1651 = vmatprep.subr.mxu0 0.0
        %1652 = vmatpush1.xpose.msra.mxu0 0.0
        %1653 = vmatprep.subr.mxu0 0.0
        %1654 = vmatpush1.xpose.msra.mxu0 0.0
        %1655 = vmatprep.subr.mxu0 0.0
        %1656 = vmatpush1.xpose.msra.mxu0 0.0
        %1657 = vmatprep.mubr.f32.mxu0 0.0
        %1658 = vmatmul.mubr.f32.gmra.mrb[0].mxu0 %v1588
        %v1659 = vpop.f32.mrb[0].mxu0
        %v1660 = vadd.f32 0.0, %v1659
        %v1661 = vpop.f32.mrb[0].mxu0
        %1662 = vdwg.mxu0
        %v1663 = vmul.f32 %v1660, 0.35355338
        %v1665 = vlaneseq
        %v1666 = vshrl.u32 %v1665, 7
        %v1667 = vsub.s32 0, %v1666
        %v1668 = vrot.slane %v1586, %v1667
        %v1670 = vadd.f32 %v1663, %v1668
        %v1671 = vsel %vm605, %v1670, -inf
        %1672 = vmax.xlane.f32.xlu0 %v1671
        %v1673 = vpop.xlane.xlu0 %1672
        %v1674 = vsub.f32 %v1670, %v1673
        %v1675 = vmul.f32 %v1674, 1.442695
        %v1676 = vpow.pop %v1675
        %v1677 = vsel %vm605, %v1676, 0.0
        %1678 = vadd.xlane.f32.xlu0 %v1677
        %v1679 = vpop.xlane.xlu0 %1678
        %v1680 = vrcp.pop %v1679
        %v1681 = vmul.f32 %v1676, %v1680
        %v1682 = vadd.f32 %v1681, 0.0
        %1683 = vrot.lane.b32.xlu0 %v1583, 96
        %v1684 = vpop.permute.xlu0 %1683
        %v1687 = vsel %vm605, %v1681, 0
        %1689 = vmatprep.subr.mxu0 0.0
        %1690 = vmatpush1.msra.mxu0 %v1684
        %1691 = vmatprep.subr.mxu0 0.0
        %1692 = vmatpush1.msra.mxu0 0.0
        %1693 = vmatprep.subr.mxu0 0.0
        %1694 = vmatpush1.msra.mxu0 0.0
        %1695 = vmatprep.subr.mxu0 0.0
        %1696 = vmatpush1.msra.mxu0 0.0
        %1697 = vmatprep.subr.mxu0 0.0
        %1698 = vmatpush1.msra.mxu0 0.0
        %1699 = vmatprep.subr.mxu0 0.0
        %1700 = vmatpush1.msra.mxu0 0.0
        %1701 = vmatprep.subr.mxu0 0.0
        %1702 = vmatpush1.msra.mxu0 0.0
        %1703 = vmatprep.subr.mxu0 0.0
        %1704 = vmatpush1.msra.mxu0 0.0
        %1705 = vmatprep.subr.mxu0 0.0
        %1706 = vmatpush1.msra.mxu0 0.0
        %1707 = vmatprep.subr.mxu0 0.0
        %1708 = vmatpush1.msra.mxu0 0.0
        %1709 = vmatprep.subr.mxu0 0.0
        %1710 = vmatpush1.msra.mxu0 0.0
        %1711 = vmatprep.subr.mxu0 0.0
        %1712 = vmatpush1.msra.mxu0 0.0
        %1713 = vmatprep.subr.mxu0 0.0
        %1714 = vmatpush1.msra.mxu0 0.0
        %1715 = vmatprep.subr.mxu0 0.0
        %1716 = vmatpush1.msra.mxu0 0.0
        %1717 = vmatprep.subr.mxu0 0.0
        %1718 = vmatpush1.msra.mxu0 0.0
        %1719 = vmatprep.subr.mxu0 0.0
        %1720 = vmatpush1.msra.mxu0 0.0
        %1721 = vmatprep.subr.mxu0 0.0
        %1722 = vmatpush1.msra.mxu0 0.0
        %1723 = vmatprep.subr.mxu0 0.0
        %1724 = vmatpush1.msra.mxu0 0.0
        %1725 = vmatprep.subr.mxu0 0.0
        %1726 = vmatpush1.msra.mxu0 0.0
        %1727 = vmatprep.subr.mxu0 0.0
        %1728 = vmatpush1.msra.mxu0 0.0
        %1729 = vmatprep.subr.mxu0 0.0
        %1730 = vmatpush1.msra.mxu0 0.0
        %1731 = vmatprep.subr.mxu0 0.0
        %1732 = vmatpush1.msra.mxu0 0.0
        %1733 = vmatprep.subr.mxu0 0.0
        %1734 = vmatpush1.msra.mxu0 0.0
        %1735 = vmatprep.subr.mxu0 0.0
        %1736 = vmatpush1.msra.mxu0 0.0
        %1737 = vmatprep.subr.mxu0 0.0
        %1738 = vmatpush1.msra.mxu0 0.0
        %1739 = vmatprep.subr.mxu0 0.0
        %1740 = vmatpush1.msra.mxu0 0.0
        %1741 = vmatprep.subr.mxu0 0.0
        %1742 = vmatpush1.msra.mxu0 0.0
        %1743 = vmatprep.subr.mxu0 0.0
        %1744 = vmatpush1.msra.mxu0 0.0
        %1745 = vmatprep.subr.mxu0 0.0
        %1746 = vmatpush1.msra.mxu0 0.0
        %1747 = vmatprep.subr.mxu0 0.0
        %1748 = vmatpush1.msra.mxu0 0.0
        %1749 = vmatprep.subr.mxu0 0.0
        %1750 = vmatpush1.msra.mxu0 0.0
        %1751 = vmatprep.subr.mxu0 0.0
        %1752 = vmatpush1.msra.mxu0 0.0
        %1753 = vmatprep.mubr.f32.mxu0 0.0
        %1754 = vmatmul.mubr.f32.gmra.mrb[0].mxu0 %v1687
        %v1755 = vpop.f32.mrb[0].mxu0
        %v1756 = vadd.f32 0.0, %v1755
        %v1757 = vpop.f32.mrb[0].mxu0
        %1758 = vdwg.mxu0
        %1759 = vrot.lane.b32.xlu0 %v1490, 120
        %v1760 = vpop.permute.xlu0 %1759
        %1761 = vrot.lane.b32.xlu0 %v1583, 120
        %v1762 = vpop.permute.xlu0 %1761
        %v1763 = vsel %vm605, %v1760, 0
        %v1765 = vsel %vm605, %v1762, 0
        %1767 = vmatprep.subr.mxu0 0.0
        %1768 = vmatpush1.xpose.msra.mxu0 %v1765
        %1769 = vmatprep.subr.mxu0 0.0
        %1770 = vmatpush1.xpose.msra.mxu0 0.0
        %1771 = vmatprep.subr.mxu0 0.0
        %1772 = vmatpush1.xpose.msra.mxu0 0.0
        %1773 = vmatprep.subr.mxu0 0.0
        %1774 = vmatpush1.xpose.msra.mxu0 0.0
        %1775 = vmatprep.subr.mxu0 0.0
        %1776 = vmatpush1.xpose.msra.mxu0 0.0
        %1777 = vmatprep.subr.mxu0 0.0
        %1778 = vmatpush1.xpose.msra.mxu0 0.0
        %1779 = vmatprep.subr.mxu0 0.0
        %1780 = vmatpush1.xpose.msra.mxu0 0.0
        %1781 = vmatprep.subr.mxu0 0.0
        %1782 = vmatpush1.xpose.msra.mxu0 0.0
        %1783 = vmatprep.subr.mxu0 0.0
        %1784 = vmatpush1.xpose.msra.mxu0 0.0
        %1785 = vmatprep.subr.mxu0 0.0
        %1786 = vmatpush1.xpose.msra.mxu0 0.0
        %1787 = vmatprep.subr.mxu0 0.0
        %1788 = vmatpush1.xpose.msra.mxu0 0.0
        %1789 = vmatprep.subr.mxu0 0.0
        %1790 = vmatpush1.xpose.msra.mxu0 0.0
        %1791 = vmatprep.subr.mxu0 0.0
        %1792 = vmatpush1.xpose.msra.mxu0 0.0
        %1793 = vmatprep.subr.mxu0 0.0
        %1794 = vmatpush1.xpose.msra.mxu0 0.0
        %1795 = vmatprep.subr.mxu0 0.0
        %1796 = vmatpush1.xpose.msra.mxu0 0.0
        %1797 = vmatprep.subr.mxu0 0.0
        %1798 = vmatpush1.xpose.msra.mxu0 0.0
        %1799 = vmatprep.subr.mxu0 0.0
        %1800 = vmatpush1.xpose.msra.mxu0 0.0
        %1801 = vmatprep.subr.mxu0 0.0
        %1802 = vmatpush1.xpose.msra.mxu0 0.0
        %1803 = vmatprep.subr.mxu0 0.0
        %1804 = vmatpush1.xpose.msra.mxu0 0.0
        %1805 = vmatprep.subr.mxu0 0.0
        %1806 = vmatpush1.xpose.msra.mxu0 0.0
        %1807 = vmatprep.subr.mxu0 0.0
        %1808 = vmatpush1.xpose.msra.mxu0 0.0
        %1809 = vmatprep.subr.mxu0 0.0
        %1810 = vmatpush1.xpose.msra.mxu0 0.0
        %1811 = vmatprep.subr.mxu0 0.0
        %1812 = vmatpush1.xpose.msra.mxu0 0.0
        %1813 = vmatprep.subr.mxu0 0.0
        %1814 = vmatpush1.xpose.msra.mxu0 0.0
        %1815 = vmatprep.subr.mxu0 0.0
        %1816 = vmatpush1.xpose.msra.mxu0 0.0
        %1817 = vmatprep.subr.mxu0 0.0
        %1818 = vmatpush1.xpose.msra.mxu0 0.0
        %1819 = vmatprep.subr.mxu0 0.0
        %1820 = vmatpush1.xpose.msra.mxu0 0.0
        %1821 = vmatprep.subr.mxu0 0.0
        %1822 = vmatpush1.xpose.msra.mxu0 0.0
        %1823 = vmatprep.subr.mxu0 0.0
        %1824 = vmatpush1.xpose.msra.mxu0 0.0
        %1825 = vmatprep.subr.mxu0 0.0
        %1826 = vmatpush1.xpose.msra.mxu0 0.0
        %1827 = vmatprep.subr.mxu0 0.0
        %1828 = vmatpush1.xpose.msra.mxu0 0.0
        %1829 = vmatprep.subr.mxu0 0.0
        %1830 = vmatpush1.xpose.msra.mxu0 0.0
        %1831 = vmatprep.mubr.f32.mxu0 0.0
        %1832 = vmatmul.mubr.f32.gmra.mrb[0].mxu0 %v1763
        %v1833 = vpop.f32.mrb[0].mxu0
        %v1834 = vadd.f32 0.0, %v1833
        %v1835 = vpop.f32.mrb[0].mxu0
        %1836 = vdwg.mxu0
        %v1837 = vmul.f32 %v1834, 0.35355338
        %v1838 = vadd.f32 %v1837, %v1668
        %v1839 = vsel %vm605, %v1838, -inf
        %1840 = vmax.xlane.f32.xlu0 %v1839
        %v1841 = vpop.xlane.xlu0 %1840
        %v1842 = vsub.f32 %v1838, %v1841
        %v1843 = vmul.f32 %v1842, 1.442695
        %v1844 = vpow.pop %v1843
        %v1845 = vsel %vm605, %v1844, 0.0
        %1846 = vadd.xlane.f32.xlu0 %v1845
        %v1847 = vpop.xlane.xlu0 %1846
        %v1848 = vrcp.pop %v1847
        %v1849 = vmul.f32 %v1844, %v1848
        %v1850 = vadd.f32 %v1682, %v1849
        %1851 = vrot.lane.b32.xlu0 %v1583, 88
        %v1852 = vpop.permute.xlu0 %1851
        %v1855 = vsel %vm605, %v1849, 0
        %1857 = vmatprep.subr.mxu0 0.0
        %1858 = vmatpush1.msra.mxu0 %v1852
        %1859 = vmatprep.subr.mxu0 0.0
        %1860 = vmatpush1.msra.mxu0 0.0
        %1861 = vmatprep.subr.mxu0 0.0
        %1862 = vmatpush1.msra.mxu0 0.0
        %1863 = vmatprep.subr.mxu0 0.0
        %1864 = vmatpush1.msra.mxu0 0.0
        %1865 = vmatprep.subr.mxu0 0.0
        %1866 = vmatpush1.msra.mxu0 0.0
        %1867 = vmatprep.subr.mxu0 0.0
        %1868 = vmatpush1.msra.mxu0 0.0
        %1869 = vmatprep.subr.mxu0 0.0
        %1870 = vmatpush1.msra.mxu0 0.0
        %1871 = vmatprep.subr.mxu0 0.0
        %1872 = vmatpush1.msra.mxu0 0.0
        %1873 = vmatprep.subr.mxu0 0.0
        %1874 = vmatpush1.msra.mxu0 0.0
        %1875 = vmatprep.subr.mxu0 0.0
        %1876 = vmatpush1.msra.mxu0 0.0
        %1877 = vmatprep.subr.mxu0 0.0
        %1878 = vmatpush1.msra.mxu0 0.0
        %1879 = vmatprep.subr.mxu0 0.0
        %1880 = vmatpush1.msra.mxu0 0.0
        %1881 = vmatprep.subr.mxu0 0.0
        %1882 = vmatpush1.msra.mxu0 0.0
        %1883 = vmatprep.subr.mxu0 0.0
        %1884 = vmatpush1.msra.mxu0 0.0
        %1885 = vmatprep.subr.mxu0 0.0
        %1886 = vmatpush1.msra.mxu0 0.0
        %1887 = vmatprep.subr.mxu0 0.0
        %1888 = vmatpush1.msra.mxu0 0.0
        %1889 = vmatprep.subr.mxu0 0.0
        %1890 = vmatpush1.msra.mxu0 0.0
        %1891 = vmatprep.subr.mxu0 0.0
        %1892 = vmatpush1.msra.mxu0 0.0
        %1893 = vmatprep.subr.mxu0 0.0
        %1894 = vmatpush1.msra.mxu0 0.0
        %1895 = vmatprep.subr.mxu0 0.0
        %1896 = vmatpush1.msra.mxu0 0.0
        %1897 = vmatprep.subr.mxu0 0.0
        %1898 = vmatpush1.msra.mxu0 0.0
        %1899 = vmatprep.subr.mxu0 0.0
        %1900 = vmatpush1.msra.mxu0 0.0
        %1901 = vmatprep.subr.mxu0 0.0
        %1902 = vmatpush1.msra.mxu0 0.0
        %1903 = vmatprep.subr.mxu0 0.0
        %1904 = vmatpush1.msra.mxu0 0.0
        %1905 = vmatprep.subr.mxu0 0.0
        %1906 = vmatpush1.msra.mxu0 0.0
        %1907 = vmatprep.subr.mxu0 0.0
        %1908 = vmatpush1.msra.mxu0 0.0
        %1909 = vmatprep.subr.mxu0 0.0
        %1910 = vmatpush1.msra.mxu0 0.0
        %1911 = vmatprep.subr.mxu0 0.0
        %1912 = vmatpush1.msra.mxu0 0.0
        %1913 = vmatprep.subr.mxu0 0.0
        %1914 = vmatpush1.msra.mxu0 0.0
        %1915 = vmatprep.subr.mxu0 0.0
        %1916 = vmatpush1.msra.mxu0 0.0
        %1917 = vmatprep.subr.mxu0 0.0
        %1918 = vmatpush1.msra.mxu0 0.0
        %1919 = vmatprep.subr.mxu0 0.0
        %1920 = vmatpush1.msra.mxu0 0.0
        %1921 = vmatprep.mubr.f32.mxu0 0.0
        %1922 = vmatmul.mubr.f32.gmra.mrb[0].mxu0 %v1855
        %v1923 = vpop.f32.mrb[0].mxu0
        %v1924 = vadd.f32 0.0, %v1923
        %v1925 = vpop.f32.mrb[0].mxu0
        %1926 = vdwg.mxu0
        %1927 = vrot.lane.b32.xlu0 %v1490, 112
        %v1928 = vpop.permute.xlu0 %1927
        %1929 = vrot.lane.b32.xlu0 %v1583, 112
        %v1930 = vpop.permute.xlu0 %1929
        %v1931 = vsel %vm605, %v1928, 0
        %v1933 = vsel %vm605, %v1930, 0
        %1935 = vmatprep.subr.mxu0 0.0
        %1936 = vmatpush1.xpose.msra.mxu0 %v1933
        %1937 = vmatprep.subr.mxu0 0.0
        %1938 = vmatpush1.xpose.msra.mxu0 0.0
        %1939 = vmatprep.subr.mxu0 0.0
        %1940 = vmatpush1.xpose.msra.mxu0 0.0
        %1941 = vmatprep.subr.mxu0 0.0
        %1942 = vmatpush1.xpose.msra.mxu0 0.0
        %1943 = vmatprep.subr.mxu0 0.0
        %1944 = vmatpush1.xpose.msra.mxu0 0.0
        %1945 = vmatprep.subr.mxu0 0.0
        %1946 = vmatpush1.xpose.msra.mxu0 0.0
        %1947 = vmatprep.subr.mxu0 0.0
        %1948 = vmatpush1.xpose.msra.mxu0 0.0
        %1949 = vmatprep.subr.mxu0 0.0
        %1950 = vmatpush1.xpose.msra.mxu0 0.0
        %1951 = vmatprep.subr.mxu0 0.0
        %1952 = vmatpush1.xpose.msra.mxu0 0.0
        %1953 = vmatprep.subr.mxu0 0.0
        %1954 = vmatpush1.xpose.msra.mxu0 0.0
        %1955 = vmatprep.subr.mxu0 0.0
        %1956 = vmatpush1.xpose.msra.mxu0 0.0
        %1957 = vmatprep.subr.mxu0 0.0
        %1958 = vmatpush1.xpose.msra.mxu0 0.0
        %1959 = vmatprep.subr.mxu0 0.0
        %1960 = vmatpush1.xpose.msra.mxu0 0.0
        %1961 = vmatprep.subr.mxu0 0.0
        %1962 = vmatpush1.xpose.msra.mxu0 0.0
        %1963 = vmatprep.subr.mxu0 0.0
        %1964 = vmatpush1.xpose.msra.mxu0 0.0
        %1965 = vmatprep.subr.mxu0 0.0
        %1966 = vmatpush1.xpose.msra.mxu0 0.0
        %1967 = vmatprep.subr.mxu0 0.0
        %1968 = vmatpush1.xpose.msra.mxu0 0.0
        %1969 = vmatprep.subr.mxu0 0.0
        %1970 = vmatpush1.xpose.msra.mxu0 0.0
        %1971 = vmatprep.subr.mxu0 0.0
        %1972 = vmatpush1.xpose.msra.mxu0 0.0
        %1973 = vmatprep.subr.mxu0 0.0
        %1974 = vmatpush1.xpose.msra.mxu0 0.0
        %1975 = vmatprep.subr.mxu0 0.0
        %1976 = vmatpush1.xpose.msra.mxu0 0.0
        %1977 = vmatprep.subr.mxu0 0.0
        %1978 = vmatpush1.xpose.msra.mxu0 0.0
        %1979 = vmatprep.subr.mxu0 0.0
        %1980 = vmatpush1.xpose.msra.mxu0 0.0
        %1981 = vmatprep.subr.mxu0 0.0
        %1982 = vmatpush1.xpose.msra.mxu0 0.0
        %1983 = vmatprep.subr.mxu0 0.0
        %1984 = vmatpush1.xpose.msra.mxu0 0.0
        %1985 = vmatprep.subr.mxu0 0.0
        %1986 = vmatpush1.xpose.msra.mxu0 0.0
        %1987 = vmatprep.subr.mxu0 0.0
        %1988 = vmatpush1.xpose.msra.mxu0 0.0
        %1989 = vmatprep.subr.mxu0 0.0
        %1990 = vmatpush1.xpose.msra.mxu0 0.0
        %1991 = vmatprep.subr.mxu0 0.0
        %1992 = vmatpush1.xpose.msra.mxu0 0.0
        %1993 = vmatprep.subr.mxu0 0.0
        %1994 = vmatpush1.xpose.msra.mxu0 0.0
        %1995 = vmatprep.subr.mxu0 0.0
        %1996 = vmatpush1.xpose.msra.mxu0 0.0
        %1997 = vmatprep.subr.mxu0 0.0
        %1998 = vmatpush1.xpose.msra.mxu0 0.0
        %1999 = vmatprep.mubr.f32.mxu0 0.0
        %2000 = vmatmul.mubr.f32.gmra.mrb[0].mxu0 %v1931
        %v2001 = vpop.f32.mrb[0].mxu0
        %v2002 = vadd.f32 0.0, %v2001
        %v2003 = vpop.f32.mrb[0].mxu0
        %2004 = vdwg.mxu0
        %v2005 = vmul.f32 %v2002, 0.35355338
        %v2006 = vadd.f32 %v2005, %v1668
        %v2007 = vsel %vm605, %v2006, -inf
        %2008 = vmax.xlane.f32.xlu0 %v2007
        %v2009 = vpop.xlane.xlu0 %2008
        %v2010 = vsub.f32 %v2006, %v2009
        %v2011 = vmul.f32 %v2010, 1.442695
        %v2012 = vpow.pop %v2011
        %v2013 = vsel %vm605, %v2012, 0.0
        %2014 = vadd.xlane.f32.xlu0 %v2013
        %v2015 = vpop.xlane.xlu0 %2014
        %v2016 = vrcp.pop %v2015
        %v2017 = vmul.f32 %v2012, %v2016
        %v2018 = vadd.f32 %v1850, %v2017
        %2019 = vrot.lane.b32.xlu0 %v1583, 80
        %v2020 = vpop.permute.xlu0 %2019
        %v2023 = vsel %vm605, %v2017, 0
        %2025 = vmatprep.subr.mxu0 0.0
        %2026 = vmatpush1.msra.mxu0 %v2020
        %2027 = vmatprep.subr.mxu0 0.0
        %2028 = vmatpush1.msra.mxu0 0.0
        %2029 = vmatprep.subr.mxu0 0.0
        %2030 = vmatpush1.msra.mxu0 0.0
        %2031 = vmatprep.subr.mxu0 0.0
        %2032 = vmatpush1.msra.mxu0 0.0
        %2033 = vmatprep.subr.mxu0 0.0
        %2034 = vmatpush1.msra.mxu0 0.0
        %2035 = vmatprep.subr.mxu0 0.0
        %2036 = vmatpush1.msra.mxu0 0.0
        %2037 = vmatprep.subr.mxu0 0.0
        %2038 = vmatpush1.msra.mxu0 0.0
        %2039 = vmatprep.subr.mxu0 0.0
        %2040 = vmatpush1.msra.mxu0 0.0
        %2041 = vmatprep.subr.mxu0 0.0
        %2042 = vmatpush1.msra.mxu0 0.0
        %2043 = vmatprep.subr.mxu0 0.0
        %2044 = vmatpush1.msra.mxu0 0.0
        %2045 = vmatprep.subr.mxu0 0.0
        %2046 = vmatpush1.msra.mxu0 0.0
        %2047 = vmatprep.subr.mxu0 0.0
        %2048 = vmatpush1.msra.mxu0 0.0
        %2049 = vmatprep.subr.mxu0 0.0
        %2050 = vmatpush1.msra.mxu0 0.0
        %2051 = vmatprep.subr.mxu0 0.0
        %2052 = vmatpush1.msra.mxu0 0.0
        %2053 = vmatprep.subr.mxu0 0.0
        %2054 = vmatpush1.msra.mxu0 0.0
        %2055 = vmatprep.subr.mxu0 0.0
        %2056 = vmatpush1.msra.mxu0 0.0
        %2057 = vmatprep.subr.mxu0 0.0
        %2058 = vmatpush1.msra.mxu0 0.0
        %2059 = vmatprep.subr.mxu0 0.0
        %2060 = vmatpush1.msra.mxu0 0.0
        %2061 = vmatprep.subr.mxu0 0.0
        %2062 = vmatpush1.msra.mxu0 0.0
        %2063 = vmatprep.subr.mxu0 0.0
        %2064 = vmatpush1.msra.mxu0 0.0
        %2065 = vmatprep.subr.mxu0 0.0
        %2066 = vmatpush1.msra.mxu0 0.0
        %2067 = vmatprep.subr.mxu0 0.0
        %2068 = vmatpush1.msra.mxu0 0.0
        %2069 = vmatprep.subr.mxu0 0.0
        %2070 = vmatpush1.msra.mxu0 0.0
        %2071 = vmatprep.subr.mxu0 0.0
        %2072 = vmatpush1.msra.mxu0 0.0
        %2073 = vmatprep.subr.mxu0 0.0
        %2074 = vmatpush1.msra.mxu0 0.0
        %2075 = vmatprep.subr.mxu0 0.0
        %2076 = vmatpush1.msra.mxu0 0.0
        %2077 = vmatprep.subr.mxu0 0.0
        %2078 = vmatpush1.msra.mxu0 0.0
        %2079 = vmatprep.subr.mxu0 0.0
        %2080 = vmatpush1.msra.mxu0 0.0
        %2081 = vmatprep.subr.mxu0 0.0
        %2082 = vmatpush1.msra.mxu0 0.0
        %2083 = vmatprep.subr.mxu0 0.0
        %2084 = vmatpush1.msra.mxu0 0.0
        %2085 = vmatprep.subr.mxu0 0.0
        %2086 = vmatpush1.msra.mxu0 0.0
        %2087 = vmatprep.subr.mxu0 0.0
        %2088 = vmatpush1.msra.mxu0 0.0
        %2089 = vmatprep.mubr.f32.mxu0 0.0
        %2090 = vmatmul.mubr.f32.gmra.mrb[0].mxu0 %v2023
        %v2091 = vpop.f32.mrb[0].mxu0
        %v2092 = vadd.f32 0.0, %v2091
        %v2093 = vpop.f32.mrb[0].mxu0
        %2094 = vdwg.mxu0
        %2095 = vrot.lane.b32.xlu0 %v1490, 104
        %v2096 = vpop.permute.xlu0 %2095
        %2097 = vrot.lane.b32.xlu0 %v1583, 104
        %v2098 = vpop.permute.xlu0 %2097
        %v2099 = vsel %vm605, %v2096, 0
        %v2101 = vsel %vm605, %v2098, 0
        %2103 = vmatprep.subr.mxu0 0.0
        %2104 = vmatpush1.xpose.msra.mxu0 %v2101
        %2105 = vmatprep.subr.mxu0 0.0
        %2106 = vmatpush1.xpose.msra.mxu0 0.0
        %2107 = vmatprep.subr.mxu0 0.0
        %2108 = vmatpush1.xpose.msra.mxu0 0.0
        %2109 = vmatprep.subr.mxu0 0.0
        %2110 = vmatpush1.xpose.msra.mxu0 0.0
        %2111 = vmatprep.subr.mxu0 0.0
        %2112 = vmatpush1.xpose.msra.mxu0 0.0
        %2113 = vmatprep.subr.mxu0 0.0
        %2114 = vmatpush1.xpose.msra.mxu0 0.0
        %2115 = vmatprep.subr.mxu0 0.0
        %2116 = vmatpush1.xpose.msra.mxu0 0.0
        %2117 = vmatprep.subr.mxu0 0.0
        %2118 = vmatpush1.xpose.msra.mxu0 0.0
        %2119 = vmatprep.subr.mxu0 0.0
        %2120 = vmatpush1.xpose.msra.mxu0 0.0
        %2121 = vmatprep.subr.mxu0 0.0
        %2122 = vmatpush1.xpose.msra.mxu0 0.0
        %2123 = vmatprep.subr.mxu0 0.0
        %2124 = vmatpush1.xpose.msra.mxu0 0.0
        %2125 = vmatprep.subr.mxu0 0.0
        %2126 = vmatpush1.xpose.msra.mxu0 0.0
        %2127 = vmatprep.subr.mxu0 0.0
        %2128 = vmatpush1.xpose.msra.mxu0 0.0
        %2129 = vmatprep.subr.mxu0 0.0
        %2130 = vmatpush1.xpose.msra.mxu0 0.0
        %2131 = vmatprep.subr.mxu0 0.0
        %2132 = vmatpush1.xpose.msra.mxu0 0.0
        %2133 = vmatprep.subr.mxu0 0.0
        %2134 = vmatpush1.xpose.msra.mxu0 0.0
        %2135 = vmatprep.subr.mxu0 0.0
        %2136 = vmatpush1.xpose.msra.mxu0 0.0
        %2137 = vmatprep.subr.mxu0 0.0
        %2138 = vmatpush1.xpose.msra.mxu0 0.0
        %2139 = vmatprep.subr.mxu0 0.0
        %2140 = vmatpush1.xpose.msra.mxu0 0.0
        %2141 = vmatprep.subr.mxu0 0.0
        %2142 = vmatpush1.xpose.msra.mxu0 0.0
        %2143 = vmatprep.subr.mxu0 0.0
        %2144 = vmatpush1.xpose.msra.mxu0 0.0
        %2145 = vmatprep.subr.mxu0 0.0
        %2146 = vmatpush1.xpose.msra.mxu0 0.0
        %2147 = vmatprep.subr.mxu0 0.0
        %2148 = vmatpush1.xpose.msra.mxu0 0.0
        %2149 = vmatprep.subr.mxu0 0.0
        %2150 = vmatpush1.xpose.msra.mxu0 0.0
        %2151 = vmatprep.subr.mxu0 0.0
        %2152 = vmatpush1.xpose.msra.mxu0 0.0
        %2153 = vmatprep.subr.mxu0 0.0
        %2154 = vmatpush1.xpose.msra.mxu0 0.0
        %2155 = vmatprep.subr.mxu0 0.0
        %2156 = vmatpush1.xpose.msra.mxu0 0.0
        %2157 = vmatprep.subr.mxu0 0.0
        %2158 = vmatpush1.xpose.msra.mxu0 0.0
        %2159 = vmatprep.subr.mxu0 0.0
        %2160 = vmatpush1.xpose.msra.mxu0 0.0
        %2161 = vmatprep.subr.mxu0 0.0
        %2162 = vmatpush1.xpose.msra.mxu0 0.0
        %2163 = vmatprep.subr.mxu0 0.0
        %2164 = vmatpush1.xpose.msra.mxu0 0.0
        %2165 = vmatprep.subr.mxu0 0.0
        %2166 = vmatpush1.xpose.msra.mxu0 0.0
        %2167 = vmatprep.mubr.f32.mxu0 0.0
        %2168 = vmatmul.mubr.f32.gmra.mrb[0].mxu0 %v2099
        %v2169 = vpop.f32.mrb[0].mxu0
        %v2170 = vadd.f32 0.0, %v2169
        %v2171 = vpop.f32.mrb[0].mxu0
        %2172 = vdwg.mxu0
        %v2173 = vmul.f32 %v2170, 0.35355338
        %v2174 = vadd.f32 %v2173, %v1668
        %v2175 = vsel %vm605, %v2174, -inf
        %2176 = vmax.xlane.f32.xlu0 %v2175
        %v2177 = vpop.xlane.xlu0 %2176
        %v2178 = vsub.f32 %v2174, %v2177
        %v2179 = vmul.f32 %v2178, 1.442695
        %v2180 = vpow.pop %v2179
        %v2181 = vsel %vm605, %v2180, 0.0
        %2182 = vadd.xlane.f32.xlu0 %v2181
        %v2183 = vpop.xlane.xlu0 %2182
        %v2184 = vrcp.pop %v2183
        %v2185 = vmul.f32 %v2180, %v2184
        %v2186 = vadd.f32 %v2018, %v2185
        %2187 = vrot.lane.b32.xlu0 %v1583, 72
        %v2188 = vpop.permute.xlu0 %2187
        %v2191 = vsel %vm605, %v2185, 0
        %2193 = vmatprep.subr.mxu0 0.0
        %2194 = vmatpush1.msra.mxu0 %v2188
        %2195 = vmatprep.subr.mxu0 0.0
        %2196 = vmatpush1.msra.mxu0 0.0
        %2197 = vmatprep.subr.mxu0 0.0
        %2198 = vmatpush1.msra.mxu0 0.0
        %2199 = vmatprep.subr.mxu0 0.0
        %2200 = vmatpush1.msra.mxu0 0.0
        %2201 = vmatprep.subr.mxu0 0.0
        %2202 = vmatpush1.msra.mxu0 0.0
        %2203 = vmatprep.subr.mxu0 0.0
        %2204 = vmatpush1.msra.mxu0 0.0
        %2205 = vmatprep.subr.mxu0 0.0
        %2206 = vmatpush1.msra.mxu0 0.0
        %2207 = vmatprep.subr.mxu0 0.0
        %2208 = vmatpush1.msra.mxu0 0.0
        %2209 = vmatprep.subr.mxu0 0.0
        %2210 = vmatpush1.msra.mxu0 0.0
        %2211 = vmatprep.subr.mxu0 0.0
        %2212 = vmatpush1.msra.mxu0 0.0
        %2213 = vmatprep.subr.mxu0 0.0
        %2214 = vmatpush1.msra.mxu0 0.0
        %2215 = vmatprep.subr.mxu0 0.0
        %2216 = vmatpush1.msra.mxu0 0.0
        %2217 = vmatprep.subr.mxu0 0.0
        %2218 = vmatpush1.msra.mxu0 0.0
        %2219 = vmatprep.subr.mxu0 0.0
        %2220 = vmatpush1.msra.mxu0 0.0
        %2221 = vmatprep.subr.mxu0 0.0
        %2222 = vmatpush1.msra.mxu0 0.0
        %2223 = vmatprep.subr.mxu0 0.0
        %2224 = vmatpush1.msra.mxu0 0.0
        %2225 = vmatprep.subr.mxu0 0.0
        %2226 = vmatpush1.msra.mxu0 0.0
        %2227 = vmatprep.subr.mxu0 0.0
        %2228 = vmatpush1.msra.mxu0 0.0
        %2229 = vmatprep.subr.mxu0 0.0
        %2230 = vmatpush1.msra.mxu0 0.0
        %2231 = vmatprep.subr.mxu0 0.0
        %2232 = vmatpush1.msra.mxu0 0.0
        %2233 = vmatprep.subr.mxu0 0.0
        %2234 = vmatpush1.msra.mxu0 0.0
        %2235 = vmatprep.subr.mxu0 0.0
        %2236 = vmatpush1.msra.mxu0 0.0
        %2237 = vmatprep.subr.mxu0 0.0
        %2238 = vmatpush1.msra.mxu0 0.0
        %2239 = vmatprep.subr.mxu0 0.0
        %2240 = vmatpush1.msra.mxu0 0.0
        %2241 = vmatprep.subr.mxu0 0.0
        %2242 = vmatpush1.msra.mxu0 0.0
        %2243 = vmatprep.subr.mxu0 0.0
        %2244 = vmatpush1.msra.mxu0 0.0
        %2245 = vmatprep.subr.mxu0 0.0
        %2246 = vmatpush1.msra.mxu0 0.0
        %2247 = vmatprep.subr.mxu0 0.0
        %2248 = vmatpush1.msra.mxu0 0.0
        %2249 = vmatprep.subr.mxu0 0.0
        %2250 = vmatpush1.msra.mxu0 0.0
        %2251 = vmatprep.subr.mxu0 0.0
        %2252 = vmatpush1.msra.mxu0 0.0
        %2253 = vmatprep.subr.mxu0 0.0
        %2254 = vmatpush1.msra.mxu0 0.0
        %2255 = vmatprep.subr.mxu0 0.0
        %2256 = vmatpush1.msra.mxu0 0.0
        %2257 = vmatprep.mubr.f32.mxu0 0.0
        %2258 = vmatmul.mubr.f32.gmra.mrb[0].mxu0 %v2191
        %v2259 = vpop.f32.mrb[0].mxu0
        %v2260 = vadd.f32 0.0, %v2259
        %v2261 = vpop.f32.mrb[0].mxu0
        %2262 = vdwg.mxu0
        %2264 = vrot.lane.b32.xlu0 %v1924, 8
        %v2265 = vpop.permute.xlu0 %2264
        %2268 = vrot.lane.b32.xlu0 %v2092, 16
        %v2269 = vpop.permute.xlu0 %2268
        %2272 = vrot.lane.b32.xlu0 %v2260, 24
        %v2273 = vpop.permute.xlu0 %2272
        %v2275 = vsel %vm605, %v1756, %v2265
        %v2276 = vsel %vm1293, %v2275, %v2269
        %v2277 = vsel %vm1295, %v2276, %v2273
        %v2278 = vlaneseq
        %v2279 = vshrl.u32 %v2278, 7
        %v2280 = vsub.s32 4, %v2279
        %v2281 = vrot.slane %v521, %v2280
        %2282 = vrot.lane.b32.xlu0 %v510, 32
        %v2283 = vpop.permute.xlu0 %2282
        %2284 = vrot.lane.b32.xlu0 %v513, 32
        %v2285 = vpop.permute.xlu0 %2284
        %2286 = vrot.lane.b32.xlu0 %v516, 32
        %v2287 = vpop.permute.xlu0 %2286
        %2288 = vrot.lane.b32.xlu0 %v519, 32
        %v2289 = vpop.permute.xlu0 %2288
        %v2295 = vsel %vm527, %v2277, 0
        %2297 = vmatprep.subr.mxu0 0.0
        %2298 = vmatpush1.msra.mxu0 %v2283
        %2299 = vmatprep.subr.mxu0 0.0
        %2300 = vmatpush1.msra.mxu0 %v2285
        %2301 = vmatprep.subr.mxu0 0.0
        %2302 = vmatpush1.msra.mxu0 %v2287
        %2303 = vmatprep.subr.mxu0 0.0
        %2304 = vmatpush1.msra.mxu0 %v2289
        %2305 = vmatprep.subr.mxu0 0.0
        %2306 = vmatpush1.msra.mxu0 0.0
        %2307 = vmatprep.subr.mxu0 0.0
        %2308 = vmatpush1.msra.mxu0 0.0
        %2309 = vmatprep.subr.mxu0 0.0
        %2310 = vmatpush1.msra.mxu0 0.0
        %2311 = vmatprep.subr.mxu0 0.0
        %2312 = vmatpush1.msra.mxu0 0.0
        %2313 = vmatprep.subr.mxu0 0.0
        %2314 = vmatpush1.msra.mxu0 0.0
        %2315 = vmatprep.subr.mxu0 0.0
        %2316 = vmatpush1.msra.mxu0 0.0
        %2317 = vmatprep.subr.mxu0 0.0
        %2318 = vmatpush1.msra.mxu0 0.0
        %2319 = vmatprep.subr.mxu0 0.0
        %2320 = vmatpush1.msra.mxu0 0.0
        %2321 = vmatprep.subr.mxu0 0.0
        %2322 = vmatpush1.msra.mxu0 0.0
        %2323 = vmatprep.subr.mxu0 0.0
        %2324 = vmatpush1.msra.mxu0 0.0
        %2325 = vmatprep.subr.mxu0 0.0
        %2326 = vmatpush1.msra.mxu0 0.0
        %2327 = vmatprep.subr.mxu0 0.0
        %2328 = vmatpush1.msra.mxu0 0.0
        %2329 = vmatprep.subr.mxu0 0.0
        %2330 = vmatpush1.msra.mxu0 0.0
        %2331 = vmatprep.subr.mxu0 0.0
        %2332 = vmatpush1.msra.mxu0 0.0
        %2333 = vmatprep.subr.mxu0 0.0
        %2334 = vmatpush1.msra.mxu0 0.0
        %2335 = vmatprep.subr.mxu0 0.0
        %2336 = vmatpush1.msra.mxu0 0.0
        %2337 = vmatprep.subr.mxu0 0.0
        %2338 = vmatpush1.msra.mxu0 0.0
        %2339 = vmatprep.subr.mxu0 0.0
        %2340 = vmatpush1.msra.mxu0 0.0
        %2341 = vmatprep.subr.mxu0 0.0
        %2342 = vmatpush1.msra.mxu0 0.0
        %2343 = vmatprep.subr.mxu0 0.0
        %2344 = vmatpush1.msra.mxu0 0.0
        %2345 = vmatprep.subr.mxu0 0.0
        %2346 = vmatpush1.msra.mxu0 0.0
        %2347 = vmatprep.subr.mxu0 0.0
        %2348 = vmatpush1.msra.mxu0 0.0
        %2349 = vmatprep.subr.mxu0 0.0
        %2350 = vmatpush1.msra.mxu0 0.0
        %2351 = vmatprep.subr.mxu0 0.0
        %2352 = vmatpush1.msra.mxu0 0.0
        %2353 = vmatprep.subr.mxu0 0.0
        %2354 = vmatpush1.msra.mxu0 0.0
        %2355 = vmatprep.subr.mxu0 0.0
        %2356 = vmatpush1.msra.mxu0 0.0
        %2357 = vmatprep.subr.mxu0 0.0
        %2358 = vmatpush1.msra.mxu0 0.0
        %2359 = vmatprep.subr.mxu0 0.0
        %2360 = vmatpush1.msra.mxu0 0.0
        %2361 = vmatprep.mubr.f32.mxu0 0.0
        %2362 = vmatmul.mubr.f32.gmra.mrb[0].mxu0 %v2295
        %v2363 = vpop.f32.mrb[0].mxu0
        %v2364 = vadd.f32 %v2281, %v2363
        %v2365 = vpop.f32.mrb[0].mxu0
        %2366 = vdwg.mxu0
        %v2367 = vmul.f32 %v2186, 0.25
        %v2368 = vadd.f32 %v1415, %v2364
        %v2369 = vld [vmem:[%s472] sm:$0x1]
        %v2371 = vlaneseq
        %v2372 = vshrl.u32 %v2371, 7
        %v2373 = vsub.s32 0, %v2372
        %v2374 = vrot.slane %v2369, %v2373
        %v2376 = vadd.f32 %v2368, %v2374
        %v2377 = vsel %vm527, %v2376, 0.0
        %2378 = vadd.xlane.f32.xlu0 %v2377
        %v2379 = vpop.xlane.xlu0 %2378
        %v2380 = vmul.f32 %v2379, %v1395
        %v2381 = vsub.f32 %v2376, %v2380
        %v2382 = vmul.f32 %v2381, %v2381
        %v2383 = vsel %vm527, %v2382, 0.0
        %2384 = vadd.xlane.f32.xlu0 %v2383
        %v2385 = vpop.xlane.xlu0 %2384
        %v2386 = vmul.f32 %v2385, %v1395
        %v2387 = vadd.f32 %v2386, 1e-05
        %v2388 = vrsqrt.pop %v2387
        %v2389 = vmul.f32 %v2381, %v2388
        %v2390 = vlaneseq
        %v2391 = vshrl.u32 %v2390, 7
        %v2392 = vsub.s32 1, %v2391
        %v2393 = vrot.slane %v522, %v2392
        %v2394 = vmul.f32 %v2389, %v2393
        %v2395 = vlaneseq
        %v2396 = vshrl.u32 %v2395, 7
        %v2397 = vsub.s32 2, %v2396
        %v2398 = vrot.slane %v522, %v2397
        %v2399 = vadd.f32 %v2394, %v2398
        %v2400 = vlaneseq
        %v2401 = vshrl.u32 %v2400, 7
        %v2402 = vsub.s32 5, %v2401
        %v2403 = vrot.slane %v521, %v2402
        %v2405 = vsel %vm527, %v2399, 0
        %2407 = vmatprep.subr.mxu0 0.0
        %2408 = vmatpush1.msra.mxu0 %v511
        %2409 = vmatprep.subr.mxu0 0.0
        %2410 = vmatpush1.msra.mxu0 %v514
        %2411 = vmatprep.subr.mxu0 0.0
        %2412 = vmatpush1.msra.mxu0 %v517
        %2413 = vmatprep.subr.mxu0 0.0
        %2414 = vmatpush1.msra.mxu0 %v520
        %2415 = vmatprep.subr.mxu0 0.0
        %2416 = vmatpush1.msra.mxu0 0.0
        %2417 = vmatprep.subr.mxu0 0.0
        %2418 = vmatpush1.msra.mxu0 0.0
        %2419 = vmatprep.subr.mxu0 0.0
        %2420 = vmatpush1.msra.mxu0 0.0
        %2421 = vmatprep.subr.mxu0 0.0
        %2422 = vmatpush1.msra.mxu0 0.0
        %2423 = vmatprep.subr.mxu0 0.0
        %2424 = vmatpush1.msra.mxu0 0.0
        %2425 = vmatprep.subr.mxu0 0.0
        %2426 = vmatpush1.msra.mxu0 0.0
        %2427 = vmatprep.subr.mxu0 0.0
        %2428 = vmatpush1.msra.mxu0 0.0
        %2429 = vmatprep.subr.mxu0 0.0
        %2430 = vmatpush1.msra.mxu0 0.0
        %2431 = vmatprep.subr.mxu0 0.0
        %2432 = vmatpush1.msra.mxu0 0.0
        %2433 = vmatprep.subr.mxu0 0.0
        %2434 = vmatpush1.msra.mxu0 0.0
        %2435 = vmatprep.subr.mxu0 0.0
        %2436 = vmatpush1.msra.mxu0 0.0
        %2437 = vmatprep.subr.mxu0 0.0
        %2438 = vmatpush1.msra.mxu0 0.0
        %2439 = vmatprep.subr.mxu0 0.0
        %2440 = vmatpush1.msra.mxu0 0.0
        %2441 = vmatprep.subr.mxu0 0.0
        %2442 = vmatpush1.msra.mxu0 0.0
        %2443 = vmatprep.subr.mxu0 0.0
        %2444 = vmatpush1.msra.mxu0 0.0
        %2445 = vmatprep.subr.mxu0 0.0
        %2446 = vmatpush1.msra.mxu0 0.0
        %2447 = vmatprep.subr.mxu0 0.0
        %2448 = vmatpush1.msra.mxu0 0.0
        %2449 = vmatprep.subr.mxu0 0.0
        %2450 = vmatpush1.msra.mxu0 0.0
        %2451 = vmatprep.subr.mxu0 0.0
        %2452 = vmatpush1.msra.mxu0 0.0
        %2453 = vmatprep.subr.mxu0 0.0
        %2454 = vmatpush1.msra.mxu0 0.0
        %2455 = vmatprep.subr.mxu0 0.0
        %2456 = vmatpush1.msra.mxu0 0.0
        %2457 = vmatprep.subr.mxu0 0.0
        %2458 = vmatpush1.msra.mxu0 0.0
        %2459 = vmatprep.subr.mxu0 0.0
        %2460 = vmatpush1.msra.mxu0 0.0
        %2461 = vmatprep.subr.mxu0 0.0
        %2462 = vmatpush1.msra.mxu0 0.0
        %2463 = vmatprep.subr.mxu0 0.0
        %2464 = vmatpush1.msra.mxu0 0.0
        %2465 = vmatprep.subr.mxu0 0.0
        %2466 = vmatpush1.msra.mxu0 0.0
        %2467 = vmatprep.subr.mxu0 0.0
        %2468 = vmatpush1.msra.mxu0 0.0
        %2469 = vmatprep.subr.mxu0 0.0
        %2470 = vmatpush1.msra.mxu0 0.0
        %2471 = vmatprep.mubr.f32.mxu0 0.0
        %2472 = vmatmul.mubr.f32.gmra.mrb[0].mxu0 %v2405
        %v2473 = vpop.f32.mrb[0].mxu0
        %v2474 = vadd.f32 %v2403, %v2473
        %v2475 = vpop.f32.mrb[0].mxu0
        %2476 = vdwg.mxu0
        %v2477 = vmax.f32 %v2474, 0.0
        %v2478 = vlaneseq
        %v2479 = vshrl.u32 %v2478, 7
        %v2480 = vsub.s32 6, %v2479
        %v2481 = vrot.slane %v521, %v2480
        %2486 = vrot.lane.b32.xlu0 %v511, 64
        %v2487 = vpop.permute.xlu0 %2486
        %2488 = vrot.lane.b32.xlu0 %v514, 64
        %v2489 = vpop.permute.xlu0 %2488
        %2490 = vrot.lane.b32.xlu0 %v517, 64
        %v2491 = vpop.permute.xlu0 %2490
        %2492 = vrot.lane.b32.xlu0 %v520, 64
        %v2493 = vpop.permute.xlu0 %2492
        %vm2494 = vcmask 523264
        %v2496 = vsel %vm2494, %v2477, 0
        %v2498 = vsel %vm2494, %v2487, 0
        %v2500 = vsel %vm2494, %v2489, 0
        %v2502 = vsel %vm2494, %v2491, 0
        %v2504 = vsel %vm2494, %v2493, 0
        %2506 = vmatprep.subr.mxu0 0.0
        %2507 = vmatpush1.xpose.msra.mxu0 %v2498
        %2508 = vmatprep.subr.mxu0 0.0
        %2509 = vmatpush1.xpose.msra.mxu0 %v2500
        %2510 = vmatprep.subr.mxu0 0.0
        %2511 = vmatpush1.xpose.msra.mxu0 %v2502
        %2512 = vmatprep.subr.mxu0 0.0
        %2513 = vmatpush1.xpose.msra.mxu0 %v2504
        %2514 = vmatprep.subr.mxu0 0.0
        %2515 = vmatpush1.xpose.msra.mxu0 0.0
        %2516 = vmatprep.subr.mxu0 0.0
        %2517 = vmatpush1.xpose.msra.mxu0 0.0
        %2518 = vmatprep.subr.mxu0 0.0
        %2519 = vmatpush1.xpose.msra.mxu0 0.0
        %2520 = vmatprep.subr.mxu0 0.0
        %2521 = vmatpush1.xpose.msra.mxu0 0.0
        %2522 = vmatprep.subr.mxu0 0.0
        %2523 = vmatpush1.xpose.msra.mxu0 0.0
        %2524 = vmatprep.subr.mxu0 0.0
        %2525 = vmatpush1.xpose.msra.mxu0 0.0
        %2526 = vmatprep.subr.mxu0 0.0
        %2527 = vmatpush1.xpose.msra.mxu0 0.0
        %2528 = vmatprep.subr.mxu0 0.0
        %2529 = vmatpush1.xpose.msra.mxu0 0.0
        %2530 = vmatprep.subr.mxu0 0.0
        %2531 = vmatpush1.xpose.msra.mxu0 0.0
        %2532 = vmatprep.subr.mxu0 0.0
        %2533 = vmatpush1.xpose.msra.mxu0 0.0
        %2534 = vmatprep.subr.mxu0 0.0
        %2535 = vmatpush1.xpose.msra.mxu0 0.0
        %2536 = vmatprep.subr.mxu0 0.0
        %2537 = vmatpush1.xpose.msra.mxu0 0.0
        %2538 = vmatprep.subr.mxu0 0.0
        %2539 = vmatpush1.xpose.msra.mxu0 0.0
        %2540 = vmatprep.subr.mxu0 0.0
        %2541 = vmatpush1.xpose.msra.mxu0 0.0
        %2542 = vmatprep.subr.mxu0 0.0
        %2543 = vmatpush1.xpose.msra.mxu0 0.0
        %2544 = vmatprep.subr.mxu0 0.0
        %2545 = vmatpush1.xpose.msra.mxu0 0.0
        %2546 = vmatprep.subr.mxu0 0.0
        %2547 = vmatpush1.xpose.msra.mxu0 0.0
        %2548 = vmatprep.subr.mxu0 0.0
        %2549 = vmatpush1.xpose.msra.mxu0 0.0
        %2550 = vmatprep.subr.mxu0 0.0
        %2551 = vmatpush1.xpose.msra.mxu0 0.0
        %2552 = vmatprep.subr.mxu0 0.0
        %2553 = vmatpush1.xpose.msra.mxu0 0.0
        %2554 = vmatprep.subr.mxu0 0.0
        %2555 = vmatpush1.xpose.msra.mxu0 0.0
        %2556 = vmatprep.subr.mxu0 0.0
        %2557 = vmatpush1.xpose.msra.mxu0 0.0
        %2558 = vmatprep.subr.mxu0 0.0
        %2559 = vmatpush1.xpose.msra.mxu0 0.0
        %2560 = vmatprep.subr.mxu0 0.0
        %2561 = vmatpush1.xpose.msra.mxu0 0.0
        %2562 = vmatprep.subr.mxu0 0.0
        %2563 = vmatpush1.xpose.msra.mxu0 0.0
        %2564 = vmatprep.subr.mxu0 0.0
        %2565 = vmatpush1.xpose.msra.mxu0 0.0
        %2566 = vmatprep.subr.mxu0 0.0
        %2567 = vmatpush1.xpose.msra.mxu0 0.0
        %2568 = vmatprep.subr.mxu0 0.0
        %2569 = vmatpush1.xpose.msra.mxu0 0.0
        %2570 = vmatprep.mubr.f32.mxu0 0.0
        %2571 = vmatmul.mubr.f32.gmra.mrb[0].mxu0 %v2496
        %v2572 = vpop.f32.mrb[0].mxu0
        %v2573 = vadd.f32 %v2481, %v2572
        %v2574 = vpop.f32.mrb[0].mxu0
        %2575 = vdwg.mxu0
        %v2576 = vadd.f32 %v2399, %v2573
        %v2577 = vsel %vm527, %v2576, 0.0
        %2578 = vadd.xlane.f32.xlu0 %v2577
        %v2579 = vpop.xlane.xlu0 %2578
        %v2580 = vmul.f32 %v2579, %v1395
        %v2581 = vsub.f32 %v2576, %v2580
        %v2582 = vmul.f32 %v2581, %v2581
        %v2583 = vsel %vm527, %v2582, 0.0
        %2584 = vadd.xlane.f32.xlu0 %v2583
        %v2585 = vpop.xlane.xlu0 %2584
        %v2586 = vmul.f32 %v2585, %v1395
        %v2587 = vadd.f32 %v2586, 1e-05
        %v2588 = vrsqrt.pop %v2587
        %v2589 = vmul.f32 %v2581, %v2588
        %v2590 = vlaneseq
        %v2591 = vshrl.u32 %v2590, 7
        %v2592 = vsub.s32 3, %v2591
        %v2593 = vrot.slane %v522, %v2592
        %v2594 = vmul.f32 %v2589, %v2593
        %v2595 = vlaneseq
        %v2596 = vshrl.u32 %v2595, 7
        %v2597 = vsub.s32 4, %v2596
        %v2598 = vrot.slane %v522, %v2597
        %v2599 = vadd.f32 %v2594, %v2598
        %2600 = vst.msk [vmem:[#allocation2] sm:$0xff] %vm527, %v2599
        %2601 = vst.msk [vmem:[%s441] sm:$0xff] %vm527, %v2599
        %2602 = vst.msk [vmem:[%s491] sm:$0xff] %vm605, %v1390
        %2603 = vst.msk [vmem:[%s499] sm:$0xff] %vm605, %v2367
        %p2604 = scmp.eq.s32.totalorder %s32, 1
        // Predicated region
        $region57: #{_paired_transformer_encoder.1} parent=47 // pred_check
          %p2605 = pneg %p2604
        $region58: #{_paired_transformer_encoder.1} parent=47 // pred_check_branch
          %2607 = sbr.rel (%p2605) target = $region60
        $region59: #{_paired_transformer_encoder.1} parent=47 // pred_region
          %v2608 = vsel %vm527, %v2599, 0.0
          %2609 = vadd.xlane.f32.xlu0 %v2608
          %v2610 = vpop.xlane.xlu0 %2609
          %v2611 = vmul.f32 %v2610, %v1395
          %v2612 = vsub.f32 %v2599, %v2611
          %v2613 = vmul.f32 %v2612, %v2612
          %v2614 = vsel %vm527, %v2613, 0.0
          %2615 = vadd.xlane.f32.xlu0 %v2614
          %v2616 = vpop.xlane.xlu0 %2615
          %v2617 = vmul.f32 %v2616, %v1395
          %v2618 = vadd.f32 %v2617, 1e-05
          %v2619 = vrsqrt.pop %v2618
          %v2620 = vmul.f32 %v2612, %v2619
          %v2621 = vlaneseq
          %v2622 = vshrl.u32 %v2621, 7
          %v2623 = vsub.s32 5, %v2622
          %v2624 = vrot.slane %v522, %v2623
          %v2625 = vmul.f32 %v2620, %v2624
          %v2626 = vlaneseq
          %v2627 = vshrl.u32 %v2626, 7
          %v2628 = vsub.s32 6, %v2627
          %v2629 = vrot.slane %v522, %v2628
          %v2630 = vadd.f32 %v2625, %v2629
          %2631 = vst.msk [vmem:[%s441] sm:$0xff] %vm527, %v2630
        $region60: #{_paired_transformer_encoder.1} parent=47 // pred_fallthru
          _
        %s2632 = sand.u32 %s229, 1
        %s2633 = scalar_lea.sflag [#allocation5], %s2632
        %s2634 = sand.u32 %s229, 1
        %s2635 = smul.addr %s2634, 8
        %s2636 = scalar_lea.vmem [#allocation6], %s2635
        %p2637 = scmp.lt.s32.totalorder %s31, 1
        %s2638 = scalar_select %p2637, %s31, 1
        %p2639 = scmp.lt.s32.totalorder %s32, 1
        %s2640 = scalar_select %p2639, %s32, 1
        %s2641 = smul.addr %s2638, 2
        %s2642 = sadd.s32 %s2640, %s2641
        %s2643 = smul.addr %s2642, 8
        %s2644 = scalar_lea.vmem %s8, %s2643
        %p2645 = scmp.lt.s32.totalorder %s31, 1
        %s2646 = scalar_select %p2645, %s31, 1
        %p2647 = scmp.lt.s32.totalorder %s32, 1
        %s2648 = scalar_select %p2647, %s32, 1
        %s2649 = smul.addr %s2646, 2
        %s2650 = sadd.s32 %s2648, %s2649
        %s2651 = smul.addr %s2650, 8
        %s2652 = scalar_lea.vmem %s9, %s2651
        // Predicated region
        $region61: #{_paired_transformer_encoder.1} parent=47 // pred_check
          %p2653 = pneg %p239
        $region62: #{_paired_transformer_encoder.1} parent=47 // pred_check_branch
          %2655 = sbr.rel (%p2653) target = $region64
        $region63: #{_paired_transformer_encoder.1} parent=47 // pred_region
          %s2657 = ssub.s32 128, 128
          %2658 = vsyncadd %s2633, %s2657
          %s2659 = smul.addr %s31, 128
          %s2660 = scalar_lea.hbm %s7, %s2659
          %s2662 = sshll.u32 %s2636, 4
          %s2663 = int_to_ptr.vmem [resolvable:$true] %s2662
          %2665 = dma.vmem_to_hbm [thread:$0]  %s2663, 128, %s2660, %s2633
        $region64: #{_paired_transformer_encoder.1} parent=47 // pred_fallthru
          _
        // Predicated region
        $region65: #{_paired_transformer_encoder.1} parent=47 // pred_check
          %p2666 = pneg %p267
        $region66: #{_paired_transformer_encoder.1} parent=47 // pred_check_branch
          %2668 = sbr.rel (%p2666) target = $region68
        $region67: #{_paired_transformer_encoder.1} parent=47 // pred_region
          _
        $region68: #{_paired_transformer_encoder.1} parent=47 // pred_fallthru
          _
        // Predicated region
        $region69: #{_paired_transformer_encoder.1} parent=47 // pred_check
          %p2669 = pneg %p295
        $region70: #{_paired_transformer_encoder.1} parent=47 // pred_check_branch
          %2671 = sbr.rel (%p2669) target = $region72
        $region71: #{_paired_transformer_encoder.1} parent=47 // pred_region
          _
        $region72: #{_paired_transformer_encoder.1} parent=47 // pred_fallthru
          _
      $region48: #{_paired_transformer_encoder.1} parent=5 // pred_fallthru
        _
      %p2672 = scmp.le.s32.totalorder 2, %s22
      // Predicated region
      $region73: #{_paired_transformer_encoder.1} parent=5 // pred_check
        %p2673 = pneg %p2672
      $region74: #{_paired_transformer_encoder.1} parent=5 // pred_check_branch
        %2675 = sbr.rel (%p2673) target = $region76
      $region75: #{_paired_transformer_encoder.1} parent=5 // pred_region
        %s2676 = ssub.s32 %s22, 2
        // Predicated region
        $region77: #{_paired_transformer_encoder.1} parent=75 // pred_check
          %p2677 = pneg %p245
        $region78: #{_paired_transformer_encoder.1} parent=75 // pred_check_branch
          %2679 = sbr.rel (%p2677) target = $region80
        $region79: #{_paired_transformer_encoder.1} parent=75 // pred_region
          %s2680 = sand.u32 %s230, 1
          %s2681 = scalar_lea.sflag [#allocation5], %s2680
          %s2682 = sand.u32 %s230, 1
          %s2683 = smul.addr %s2682, 8
          %s2684 = scalar_lea.vmem [#allocation6], %s2683
          %2685 = dma.done %s2681, 128
        $region80: #{_paired_transformer_encoder.1} parent=75 // pred_fallthru
          _
        // Predicated region
        $region81: #{_paired_transformer_encoder.1} parent=75 // pred_check
          %p2686 = pneg %p273
        $region82: #{_paired_transformer_encoder.1} parent=75 // pred_check_branch
          %2688 = sbr.rel (%p2686) target = $region84
        $region83: #{_paired_transformer_encoder.1} parent=75 // pred_region
          %p2689 = scmp.lt.s32.totalorder %s33, 1
          %s2690 = scalar_select %p2689, %s33, 1
          %p2691 = scmp.lt.s32.totalorder %s34, 1
          %s2692 = scalar_select %p2691, %s34, 1
          %s2693 = smul.addr %s2690, 2
          %s2694 = sadd.s32 %s2692, %s2693
          %s2695 = smul.addr %s2694, 8
          %s2696 = scalar_lea.vmem %s8, %s2695
        $region84: #{_paired_transformer_encoder.1} parent=75 // pred_fallthru
          _
        // Predicated region
        $region85: #{_paired_transformer_encoder.1} parent=75 // pred_check
          %p2697 = pneg %p301
        $region86: #{_paired_transformer_encoder.1} parent=75 // pred_check_branch
          %2699 = sbr.rel (%p2697) target = $region88
        $region87: #{_paired_transformer_encoder.1} parent=75 // pred_region
          %p2700 = scmp.lt.s32.totalorder %s33, 1
          %s2701 = scalar_select %p2700, %s33, 1
          %p2702 = scmp.lt.s32.totalorder %s34, 1
          %s2703 = scalar_select %p2702, %s34, 1
          %s2704 = smul.addr %s2701, 2
          %s2705 = sadd.s32 %s2703, %s2704
          %s2706 = smul.addr %s2705, 8
          %s2707 = scalar_lea.vmem %s9, %s2706
        $region88: #{_paired_transformer_encoder.1} parent=75 // pred_fallthru
          _
      $region76: #{_paired_transformer_encoder.1} parent=5 // pred_fallthru
        _
    $region6: #{_paired_transformer_encoder.1} parent=1 // loop_footer
      %s26 = sadd.s32 1, %s22
    $region7: #{_paired_transformer_encoder.1} parent=1 // loop_footer_branch
      %21 = sbr.rel target = $region3
    $region8: #{_paired_transformer_encoder.1} parent=1 // loop_exit
      _
    %2708 = vsyncpa [#allocation4], 1
    %s2709 = scalar_lea.sflag [#allocation4], 1
    %2710 = vsyncpa %s2709, 1
    %2711 = vsyncpa [#allocation5], 1
    %s2712 = scalar_lea.sflag [#allocation5], 1
    %2713 = vsyncpa %s2712, 1

</llo_original>
